<compile_context>
chip_gen: v7x
topology: tpu7x:2x2x1
jax: 0.10.0
libtpu: 0.0.40
codegen_flags: <defaults>
</compile_context>

<pallas_src>
import functools

import jax
import jax.numpy as jnp
from jax.experimental import pallas as pl
from jax.experimental.pallas import tpu as pltpu


# ----------------------------------------------------------------------------
# fused forward kernel
# ----------------------------------------------------------------------------
def _cnn_mnist_kernel(x_ref, w1e_ref, w1o_ref, b1_ref,
                      w2e_ref, w2o_ref, b2_ref,
                      w3_ref, b3_ref, w4_ref, b4_ref,
                      o_ref,
                      xpad_ref, pat1_ref, p1pad_ref, pat2_ref, p2_ref,
                      *, B, H, W, CIN, C1, C2):
    f32 = jnp.float32
    Ho, Wo = H // 2, W // 2            # spatial size after pool1
    Hq, Wq = Ho // 2, Wo // 2          # spatial size after pool2
    row1 = (W + 2) * CIN               # lane width of one padded conv1 input row
    row2 = (Wo + 2) * C1               # lane width of one padded conv2 input row

    # ---------------- conv1 (3x3, pad=1) + maxpool2x2 + relu ----------------
    # zero-pad the image inside VMEM (no XLA-side jnp.pad / HBM round trip)
    xpad_ref[...] = jnp.zeros(xpad_ref.shape, f32)
    xpad_ref[:, 1:H + 1, CIN:(W + 1) * CIN] = x_ref[...]

    # Toeplitz patches: row (b, h) = [xpad[b,h,:], xpad[b,h+1,:], xpad[b,h+2,:]]
    for b in range(B):
        for k in range(3):
            pat1_ref[b * H:(b + 1) * H, k * row1:(k + 1) * row1] = \
                xpad_ref[b, k:k + H, :]

    pat1 = pat1_ref[...]                                         # (B*H, 3*row1)
    # even / odd output columns as two matmuls -> W-pool is an elementwise max
    y_even = jnp.dot(pat1, w1e_ref[...], preferred_element_type=f32)
    y_odd = jnp.dot(pat1, w1o_ref[...], preferred_element_type=f32)
    yw = jnp.maximum(y_even, y_odd) + b1_ref[...]                # (B*H, Wo*C1)

    # H-pool (adjacent row pairs) + ReLU, written straight into the zero-padded
    # conv2 input slab: p1pad[b, ho+1, (wo+1)*C1 + c]
    p1pad_ref[...] = jnp.zeros(p1pad_ref.shape, f32)
    for r in range(B * Ho):
        b, ho = divmod(r, Ho)
        row = jnp.maximum(yw[2 * r:2 * r + 1, :], yw[2 * r + 1:2 * r + 2, :])
        p1pad_ref[b, ho + 1:ho + 2, C1:(Wo + 1) * C1] = jnp.maximum(row, 0.0)

    # ---------------- conv2 (3x3, pad=1) + maxpool2x2 + relu ----------------
    for b in range(B):
        for k in range(3):
            pat2_ref[b * Ho:(b + 1) * Ho, k * row2:(k + 1) * row2] = \
                p1pad_ref[b, k:k + Ho, :]

    pat2 = pat2_ref[...]                                         # (B*Ho, 3*row2)
    z_even = jnp.dot(pat2, w2e_ref[...], preferred_element_type=f32)
    z_odd = jnp.dot(pat2, w2o_ref[...], preferred_element_type=f32)
    zw = jnp.maximum(z_even, z_odd) + b2_ref[...]                # (B*Ho, Wq*C2)

    for r in range(B * Hq):
        b, hq = divmod(r, Hq)
        row = jnp.maximum(zw[2 * r:2 * r + 1, :], zw[2 * r + 1:2 * r + 2, :])
        p2_ref[hq, b:b + 1, :] = jnp.maximum(row, 0.0)           # (Hq, B, Wq*C2)

    # ---------------- fc1 (+ReLU) and fc2 ----------------
    # fc1 weight arrives as (Hq, Wq*C2, hidden) with rows permuted so the native
    # (h, w, c) lane layout of p2 matches PyTorch's CHW .view() flatten order;
    # accumulating over the Hq row blocks is the full (B, C2*Hq*Wq) @ fc1_w.T.
    hidden = w3_ref.shape[-1]
    acc = jnp.zeros((B, hidden), f32)
    for hb in range(Hq):
        acc = acc + jnp.dot(p2_ref[hb], w3_ref[hb], preferred_element_type=f32)
    h1 = jnp.maximum(acc + b3_ref[...], 0.0)                     # (B, hidden)

    out = jnp.dot(h1, w4_ref[...], preferred_element_type=f32) + b4_ref[...]
    o_ref[...] = out.astype(o_ref.dtype)


def _const_index_map(ndim):
    return lambda i: (0,) * ndim


def cnn_mnist_forward(prepared, x_nchw):
    """Fused CNN_MNIST forward.  `prepared` comes from prepare_params()."""
    B, CIN, H, W = x_nchw.shape
    assert H == W and H % 4 == 0, "input_size must be a multiple of 4"
    Ho, Wo = H // 2, W // 2
    Hq, Wq = H // 4, W // 4
    C1 = prepared["b1"].shape[1] // Wo
    C2 = prepared["b2"].shape[1] // Wq
    num_class = prepared["b4"].shape[1]

    # NCHW -> (B, H, W*CIN) slab with lane index w*CIN + ci.  For CIN == 1 this
    # is a pure reshape (no transpose op emitted).
    x = x_nchw.astype(jnp.float32)
    if CIN == 1:
        x = x.reshape(B, H, W)
    else:
        x = jnp.transpose(x, (0, 2, 3, 1)).reshape(B, H, W * CIN)

    operands = (x,
                prepared["w1e"], prepared["w1o"], prepared["b1"],
                prepared["w2e"], prepared["w2o"], prepared["b2"],
                prepared["w3"], prepared["b3"],
                prepared["w4"], prepared["b4"])

    kern = functools.partial(_cnn_mnist_kernel,
                             B=B, H=H, W=W, CIN=CIN, C1=C1, C2=C2)

    return pl.pallas_call(
        kern,
        out_shape=jax.ShapeDtypeStruct((B, num_class), jnp.float32),
        grid=(1,),
        in_specs=[pl.BlockSpec(a.shape, _const_index_map(a.ndim))
                  for a in operands],
        out_specs=pl.BlockSpec((B, num_class), lambda i: (0, 0)),
        scratch_shapes=[
            pltpu.VMEM((B, H + 2, (W + 2) * CIN), jnp.float32),     # padded input
            pltpu.VMEM((B * H, 3 * (W + 2) * CIN), jnp.float32),    # conv1 patches
            pltpu.VMEM((B, Ho + 2, (Wo + 2) * C1), jnp.float32),    # padded pool1 out
            pltpu.VMEM((B * Ho, 3 * (Wo + 2) * C1), jnp.float32),   # conv2 patches
            pltpu.VMEM((Hq, B, Wq * C2), jnp.float32),              # pool2 out (h-major)
        ],
        compiler_params=pltpu.CompilerParams(
            dimension_semantics=("arbitrary",),
            vmem_limit_bytes=32 * 1024 * 1024),
    )(*operands)


# ----------------------------------------------------------------------------
# parameter preparation (one-time, outside the kernel)
# ----------------------------------------------------------------------------
def _toeplitz_conv_weight(w_oihw, in_width, parity):
    """3x3 pad=1 conv as a matmul over rows of 3 vertically stacked padded input
    rows.  Returns T of shape (3*(in_width+2)*Cin, (in_width//2)*Cout) producing
    only the output columns of the given parity (even/odd), so the subsequent
    2x2 max-pool along W is an elementwise max of the two matmul results."""
    Cout, Cin, KH, KW = w_oihw.shape
    Wp = in_width + 2
    n_cols = in_width // 2
    T = jnp.zeros((KH * Wp * Cin, n_cols * Cout), jnp.float32)
    for kh in range(KH):
        for kw in range(KW):
            blk = jnp.transpose(w_oihw[:, :, kh, kw])        # (Cin, Cout)
            for wo in range(n_cols):
                j = 2 * wo + parity + kw                     # padded input column
                r0 = (kh * Wp + j) * Cin
                c0 = wo * Cout
                T = T.at[r0:r0 + Cin, c0:c0 + Cout].set(blk)
    return T


def prepare_params(params, input_size):
    """Convert PyTorch-layout params to the fused-kernel layouts (run once)."""
    C1 = params["conv1_b"].shape[0]
    C2 = params["conv2_b"].shape[0]
    Wo = input_size // 2
    Hq = Wq = input_size // 4
    hidden = params["fc1_b"].shape[0]

    # fc1 weight: torch (hidden, C2*Hq*Wq) with CHW flatten order.  Re-order its
    # rows once so the kernel consumes pool2 output directly in (h, w, c) lane
    # layout -> no per-call activation transpose.
    w3 = jnp.transpose(params["fc1_w"])                      # rows in CHW order
    w3 = w3.reshape(C2, Hq, Wq, hidden)
    w3 = jnp.transpose(w3, (1, 2, 0, 3)).reshape(Hq, Wq * C2, hidden)

    return {
        "w1e": _toeplitz_conv_weight(params["conv1_w"], input_size, 0),
        "w1o": _toeplitz_conv_weight(params["conv1_w"], input_size, 1),
        "b1": jnp.tile(params["conv1_b"], Wo).reshape(1, Wo * C1),
        "w2e": _toeplitz_conv_weight(params["conv2_w"], input_size // 2, 0),
        "w2o": _toeplitz_conv_weight(params["conv2_w"], input_size // 2, 1),
        "b2": jnp.tile(params["conv2_b"], Wq).reshape(1, Wq * C2),
        "w3": w3,
        "b3": params["fc1_b"].reshape(1, hidden),
        "w4": jnp.transpose(params["fc2_w"]),
        "b4": params["fc2_b"].reshape(1, -1),
    }


def init_params(key, in_channels=1, num_class=10, input_size=16):
    """PyTorch-layout parameters (conv: OIHW, linear: (out, in))."""
    c1, c2 = 16, 64                          # self.num_channels = [16, 64]
    fc1_in = c2 * (input_size // 4) ** 2
    ks = jax.random.split(key, 8)

    def u(k, shape, fan_in):
        bound = 1.0 / jnp.sqrt(jnp.float32(fan_in))
        return jax.random.uniform(k, shape, jnp.float32, -bound, bound)

    return {
        "conv1_w": u(ks[0], (c1, in_channels, 3, 3), in_channels * 9),
        "conv1_b": u(ks[1], (c1,), in_channels * 9),
        "conv2_w": u(ks[2], (c2, c1, 3, 3), c1 * 9),
        "conv2_b": u(ks[3], (c2,), c1 * 9),
        "fc1_w":   u(ks[4], (1000, fc1_in), fc1_in),
        "fc1_b":   u(ks[5], (1000,), fc1_in),
        "fc2_w":   u(ks[6], (num_class, 1000), 1000),
        "fc2_b":   u(ks[7], (num_class,), 1000),
    }


# ----------------------------------------------------------------------------
# plain-JAX reference (PyTorch semantics) for a correctness cross-check
# ----------------------------------------------------------------------------
def cnn_mnist_reference(params, x_nchw):
    def conv(x, w, b):
        y = jax.lax.conv_general_dilated(
            x.astype(jnp.float32), w, (1, 1), ((1, 1), (1, 1)),
            dimension_numbers=("NCHW", "OIHW", "NCHW"))
        return y + b[None, :, None, None]

    def pool(x):
        return jax.lax.reduce_window(x, -jnp.inf, jax.lax.max,
                                     (1, 1, 2, 2), (1, 1, 2, 2), "VALID")

    y = jnp.maximum(pool(conv(x_nchw, params["conv1_w"], params["conv1_b"])), 0.0)
    y = jnp.maximum(pool(conv(y, params["conv2_w"], params["conv2_b"])), 0.0)
    y = y.reshape(y.shape[0], -1)            # NCHW flatten == torch .view order
    y = jnp.maximum(y @ params["fc1_w"].T + params["fc1_b"], 0.0)
    return y @ params["fc2_w"].T + params["fc2_b"]


if __name__ == "__main__":
    key = jax.random.PRNGKey(0)
    kx, kp = jax.random.split(key)
    B, CIN, S, NUM_CLASS = 2, 1, 16, 10      # small MNIST-like shapes
    x = jax.random.normal(kx, (B, CIN, S, S), jnp.float32)

    params = init_params(kp, in_channels=CIN, num_class=NUM_CLASS, input_size=S)
    prepared = prepare_params(params, input_size=S)

    out = cnn_mnist_forward(prepared, x)
    out = jax.block_until_ready(out)
    assert out.shape == (B, NUM_CLASS), out.shape
    assert bool(jnp.all(jnp.isfinite(out)))

    # cross-check the fused kernel against a plain-JAX reference of the module
    ref = cnn_mnist_reference(params, x)
    err = float(jnp.max(jnp.abs(out - ref)))
    assert err < 2e-2, f"mismatch vs reference: max abs err = {err}"

    print("KERNEL_OK")
</pallas_src>

<mosaic_0001>
module attributes {stable_mosaic.version = 11 : i64} {
  func.func @_cnn_mnist_kernel(%arg0: i32, %arg1: memref<2x16x16xf32, #tpu.memory_space<vmem>>, %arg2: memref<54x128xf32, #tpu.memory_space<vmem>>, %arg3: memref<54x128xf32, #tpu.memory_space<vmem>>, %arg4: memref<1x128xf32, #tpu.memory_space<vmem>>, %arg5: memref<480x256xf32, #tpu.memory_space<vmem>>, %arg6: memref<480x256xf32, #tpu.memory_space<vmem>>, %arg7: memref<1x256xf32, #tpu.memory_space<vmem>>, %arg8: memref<4x256x1000xf32, #tpu.memory_space<vmem>>, %arg9: memref<1x1000xf32, #tpu.memory_space<vmem>>, %arg10: memref<1000x10xf32, #tpu.memory_space<vmem>>, %arg11: memref<1x10xf32, #tpu.memory_space<vmem>>, %arg12: memref<2x10xf32, #tpu.memory_space<vmem>>, %arg13: memref<2x18x18xf32, #tpu.memory_space<vmem>>, %arg14: memref<32x54xf32, #tpu.memory_space<vmem>>, %arg15: memref<2x10x160xf32, #tpu.memory_space<vmem>>, %arg16: memref<16x480xf32, #tpu.memory_space<vmem>>, %arg17: memref<4x2x256xf32, #tpu.memory_space<vmem>>) attributes {dimension_semantics = [#tpu.dimension_semantics<arbitrary>], iteration_bounds = array<i64: 1>, scalar_prefetch = 0 : i64, scratch_operands = 5 : i64, tpu.core_type = #tpu.core_type<tc>, window_params = [{pipeline_mode = #tpu.pipeline_mode<synchronous>, transform_indices = @transform_0, window_bounds = array<i64: 2, 16, 16>}, {pipeline_mode = #tpu.pipeline_mode<synchronous>, transform_indices = @transform_1, window_bounds = array<i64: 54, 128>}, {pipeline_mode = #tpu.pipeline_mode<synchronous>, transform_indices = @transform_2, window_bounds = array<i64: 54, 128>}, {pipeline_mode = #tpu.pipeline_mode<synchronous>, transform_indices = @transform_3, window_bounds = array<i64: 1, 128>}, {pipeline_mode = #tpu.pipeline_mode<synchronous>, transform_indices = @transform_4, window_bounds = array<i64: 480, 256>}, {pipeline_mode = #tpu.pipeline_mode<synchronous>, transform_indices = @transform_5, window_bounds = array<i64: 480, 256>}, {pipeline_mode = #tpu.pipeline_mode<synchronous>, transform_indices = @transform_6, window_bounds = array<i64: 1, 256>}, {pipeline_mode = #tpu.pipeline_mode<synchronous>, transform_indices = @transform_7, window_bounds = array<i64: 4, 256, 1000>}, {pipeline_mode = #tpu.pipeline_mode<synchronous>, transform_indices = @transform_8, window_bounds = array<i64: 1, 1000>}, {pipeline_mode = #tpu.pipeline_mode<synchronous>, transform_indices = @transform_9, window_bounds = array<i64: 1000, 10>}, {pipeline_mode = #tpu.pipeline_mode<synchronous>, transform_indices = @transform_10, window_bounds = array<i64: 1, 10>}, {pipeline_mode = #tpu.pipeline_mode<synchronous>, transform_indices = @transform_11, window_bounds = array<i64: 2, 10>}]} {
    %cst = arith.constant 0.000000e+00 : f32
    %0 = vector.broadcast %cst : f32 to vector<2x18x18xf32>
    %c0 = arith.constant 0 : index
    %c0_0 = arith.constant 0 : index
    %c0_1 = arith.constant 0 : index
    %1 = vector.load %arg13[%c0, %c0_0, %c0_1] : memref<2x18x18xf32, #tpu.memory_space<vmem>>, vector<2x18x18xf32>
    tpu.vector_store %arg13[%c0, %c0_0, %c0_1], %0 {strides = array<i32>} : memref<2x18x18xf32, #tpu.memory_space<vmem>>, vector<2x18x18xf32>,
    %c0_2 = arith.constant 0 : index
    %c0_3 = arith.constant 0 : index
    %c0_4 = arith.constant 0 : index
    %2 = vector.load %arg1[%c0_2, %c0_3, %c0_4] : memref<2x16x16xf32, #tpu.memory_space<vmem>>, vector<2x16x16xf32>
    %c0_5 = arith.constant 0 : index
    %c1 = arith.constant 1 : index
    %c1_6 = arith.constant 1 : index
    %3 = vector.load %arg13[%c0_5, %c1, %c1_6] : memref<2x18x18xf32, #tpu.memory_space<vmem>>, vector<2x16x16xf32>
    tpu.vector_store %arg13[%c0_5, %c1, %c1_6], %2 {strides = array<i32>} : memref<2x18x18xf32, #tpu.memory_space<vmem>>, vector<2x16x16xf32>,
    %c0_7 = arith.constant 0 : index
    %c0_8 = arith.constant 0 : index
    %c0_9 = arith.constant 0 : index
    %4 = vector.load %arg13[%c0_7, %c0_8, %c0_9] : memref<2x18x18xf32, #tpu.memory_space<vmem>>, vector<1x16x18xf32>
    %5 = vector.shape_cast %4 : vector<1x16x18xf32> to vector<16x18xf32>
    %c0_10 = arith.constant 0 : index
    %c0_11 = arith.constant 0 : index
    %6 = vector.load %arg14[%c0_10, %c0_11] : memref<32x54xf32, #tpu.memory_space<vmem>>, vector<16x18xf32>
    tpu.vector_store %arg14[%c0_10, %c0_11], %5 {strides = array<i32>} : memref<32x54xf32, #tpu.memory_space<vmem>>, vector<16x18xf32>,
    %c0_12 = arith.constant 0 : index
    %c1_13 = arith.constant 1 : index
    %c0_14 = arith.constant 0 : index
    %7 = vector.load %arg13[%c0_12, %c1_13, %c0_14] : memref<2x18x18xf32, #tpu.memory_space<vmem>>, vector<1x16x18xf32>
    %8 = vector.shape_cast %7 : vector<1x16x18xf32> to vector<16x18xf32>
    %c0_15 = arith.constant 0 : index
    %c18 = arith.constant 18 : index
    %9 = vector.load %arg14[%c0_15, %c18] : memref<32x54xf32, #tpu.memory_space<vmem>>, vector<16x18xf32>
    tpu.vector_store %arg14[%c0_15, %c18], %8 {strides = array<i32>} : memref<32x54xf32, #tpu.memory_space<vmem>>, vector<16x18xf32>,
    %c0_16 = arith.constant 0 : index
    %c2 = arith.constant 2 : index
    %c0_17 = arith.constant 0 : index
    %10 = vector.load %arg13[%c0_16, %c2, %c0_17] : memref<2x18x18xf32, #tpu.memory_space<vmem>>, vector<1x16x18xf32>
    %11 = vector.shape_cast %10 : vector<1x16x18xf32> to vector<16x18xf32>
    %c0_18 = arith.constant 0 : index
    %c36 = arith.constant 36 : index
    %12 = vector.load %arg14[%c0_18, %c36] : memref<32x54xf32, #tpu.memory_space<vmem>>, vector<16x18xf32>
    tpu.vector_store %arg14[%c0_18, %c36], %11 {strides = array<i32>} : memref<32x54xf32, #tpu.memory_space<vmem>>, vector<16x18xf32>,
    %c1_19 = arith.constant 1 : index
    %c0_20 = arith.constant 0 : index
    %c0_21 = arith.constant 0 : index
    %13 = vector.load %arg13[%c1_19, %c0_20, %c0_21] : memref<2x18x18xf32, #tpu.memory_space<vmem>>, vector<1x16x18xf32>
    %14 = vector.shape_cast %13 : vector<1x16x18xf32> to vector<16x18xf32>
    %c16 = arith.constant 16 : index
    %c0_22 = arith.constant 0 : index
    %15 = vector.load %arg14[%c16, %c0_22] : memref<32x54xf32, #tpu.memory_space<vmem>>, vector<16x18xf32>
    tpu.vector_store %arg14[%c16, %c0_22], %14 {strides = array<i32>} : memref<32x54xf32, #tpu.memory_space<vmem>>, vector<16x18xf32>,
    %c1_23 = arith.constant 1 : index
    %c1_24 = arith.constant 1 : index
    %c0_25 = arith.constant 0 : index
    %16 = vector.load %arg13[%c1_23, %c1_24, %c0_25] : memref<2x18x18xf32, #tpu.memory_space<vmem>>, vector<1x16x18xf32>
    %17 = vector.shape_cast %16 : vector<1x16x18xf32> to vector<16x18xf32>
    %c16_26 = arith.constant 16 : index
    %c18_27 = arith.constant 18 : index
    %18 = vector.load %arg14[%c16_26, %c18_27] : memref<32x54xf32, #tpu.memory_space<vmem>>, vector<16x18xf32>
    tpu.vector_store %arg14[%c16_26, %c18_27], %17 {strides = array<i32>} : memref<32x54xf32, #tpu.memory_space<vmem>>, vector<16x18xf32>,
    %c1_28 = arith.constant 1 : index
    %c2_29 = arith.constant 2 : index
    %c0_30 = arith.constant 0 : index
    %19 = vector.load %arg13[%c1_28, %c2_29, %c0_30] : memref<2x18x18xf32, #tpu.memory_space<vmem>>, vector<1x16x18xf32>
    %20 = vector.shape_cast %19 : vector<1x16x18xf32> to vector<16x18xf32>
    %c16_31 = arith.constant 16 : index
    %c36_32 = arith.constant 36 : index
    %21 = vector.load %arg14[%c16_31, %c36_32] : memref<32x54xf32, #tpu.memory_space<vmem>>, vector<16x18xf32>
    tpu.vector_store %arg14[%c16_31, %c36_32], %20 {strides = array<i32>} : memref<32x54xf32, #tpu.memory_space<vmem>>, vector<16x18xf32>,
    %c0_33 = arith.constant 0 : index
    %c0_34 = arith.constant 0 : index
    %22 = vector.load %arg14[%c0_33, %c0_34] : memref<32x54xf32, #tpu.memory_space<vmem>>, vector<32x54xf32>
    %c0_35 = arith.constant 0 : index
    %c0_36 = arith.constant 0 : index
    %23 = vector.load %arg2[%c0_35, %c0_36] : memref<54x128xf32, #tpu.memory_space<vmem>>, vector<54x128xf32>
    %cst_37 = arith.constant dense<0.000000e+00> : vector<32x128xf32>
    %24 = tpu.matmul %22, %23, %cst_37 {dimension_numbers = #tpu.dot_dimension_numbers<[1], [0], [0], [1], [0, 0, 1, 1], [], []>} : vector<32x54xf32>, vector<54x128xf32>, vector<32x128xf32> -> vector<32x128xf32>
    %c0_38 = arith.constant 0 : index
    %c0_39 = arith.constant 0 : index
    %25 = vector.load %arg3[%c0_38, %c0_39] : memref<54x128xf32, #tpu.memory_space<vmem>>, vector<54x128xf32>
    %cst_40 = arith.constant dense<0.000000e+00> : vector<32x128xf32>
    %26 = tpu.matmul %22, %25, %cst_40 {dimension_numbers = #tpu.dot_dimension_numbers<[1], [0], [0], [1], [0, 0, 1, 1], [], []>} : vector<32x54xf32>, vector<54x128xf32>, vector<32x128xf32> -> vector<32x128xf32>
    %27 = arith.maximumf %24, %26 : vector<32x128xf32>
    %c0_41 = arith.constant 0 : index
    %c0_42 = arith.constant 0 : index
    %28 = vector.load %arg4[%c0_41, %c0_42] : memref<1x128xf32, #tpu.memory_space<vmem>>, vector<1x128xf32>
    %29 = vector.broadcast %28 : vector<1x128xf32> to vector<32x128xf32>
    %30 = arith.addf %27, %29 : vector<32x128xf32>
    %cst_43 = arith.constant 0.000000e+00 : f32
    %31 = vector.broadcast %cst_43 : f32 to vector<2x10x160xf32>
    %c0_44 = arith.constant 0 : index
    %c0_45 = arith.constant 0 : index
    %c0_46 = arith.constant 0 : index
    %32 = vector.load %arg15[%c0_44, %c0_45, %c0_46] : memref<2x10x160xf32, #tpu.memory_space<vmem>>, vector<2x10x160xf32>
    tpu.vector_store %arg15[%c0_44, %c0_45, %c0_46], %31 {strides = array<i32>} : memref<2x10x160xf32, #tpu.memory_space<vmem>>, vector<2x10x160xf32>,
    %33 = vector.extract_strided_slice %30 {offsets = [0, 0], sizes = [1, 128], strides = [1, 1]} : vector<32x128xf32> to vector<1x128xf32>
    %34 = vector.extract_strided_slice %30 {offsets = [1, 0], sizes = [1, 128], strides = [1, 1]} : vector<32x128xf32> to vector<1x128xf32>
    %35 = arith.maximumf %33, %34 : vector<1x128xf32>
    %cst_47 = arith.constant 0.000000e+00 : f32
    %36 = vector.broadcast %cst_47 : f32 to vector<1x128xf32>
    %37 = arith.maximumf %35, %36 : vector<1x128xf32>
    %c0_48 = arith.constant 0 : index
    %c1_49 = arith.constant 1 : index
    %c16_50 = arith.constant 16 : index
    %38 = vector.load %arg15[%c0_48, %c1_49, %c16_50] : memref<2x10x160xf32, #tpu.memory_space<vmem>>, vector<1x1x128xf32>
    %39 = vector.shape_cast %38 : vector<1x1x128xf32> to vector<1x128xf32>
    %40 = vector.shape_cast %37 : vector<1x128xf32> to vector<1x1x128xf32>
    tpu.vector_store %arg15[%c0_48, %c1_49, %c16_50], %40 {strides = array<i32>} : memref<2x10x160xf32, #tpu.memory_space<vmem>>, vector<1x1x128xf32>,
    %41 = vector.extract_strided_slice %30 {offsets = [2, 0], sizes = [1, 128], strides = [1, 1]} : vector<32x128xf32> to vector<1x128xf32>
    %42 = vector.extract_strided_slice %30 {offsets = [3, 0], sizes = [1, 128], strides = [1, 1]} : vector<32x128xf32> to vector<1x128xf32>
    %43 = arith.maximumf %41, %42 : vector<1x128xf32>
    %cst_51 = arith.constant 0.000000e+00 : f32
    %44 = vector.broadcast %cst_51 : f32 to vector<1x128xf32>
    %45 = arith.maximumf %43, %44 : vector<1x128xf32>
    %c0_52 = arith.constant 0 : index
    %c2_53 = arith.constant 2 : index
    %c16_54 = arith.constant 16 : index
    %46 = vector.load %arg15[%c0_52, %c2_53, %c16_54] : memref<2x10x160xf32, #tpu.memory_space<vmem>>, vector<1x1x128xf32>
    %47 = vector.shape_cast %46 : vector<1x1x128xf32> to vector<1x128xf32>
    %48 = vector.shape_cast %45 : vector<1x128xf32> to vector<1x1x128xf32>
    tpu.vector_store %arg15[%c0_52, %c2_53, %c16_54], %48 {strides = array<i32>} : memref<2x10x160xf32, #tpu.memory_space<vmem>>, vector<1x1x128xf32>,
    %49 = vector.extract_strided_slice %30 {offsets = [4, 0], sizes = [1, 128], strides = [1, 1]} : vector<32x128xf32> to vector<1x128xf32>
    %50 = vector.extract_strided_slice %30 {offsets = [5, 0], sizes = [1, 128], strides = [1, 1]} : vector<32x128xf32> to vector<1x128xf32>
    %51 = arith.maximumf %49, %50 : vector<1x128xf32>
    %cst_55 = arith.constant 0.000000e+00 : f32
    %52 = vector.broadcast %cst_55 : f32 to vector<1x128xf32>
    %53 = arith.maximumf %51, %52 : vector<1x128xf32>
    %c0_56 = arith.constant 0 : index
    %c3 = arith.constant 3 : index
    %c16_57 = arith.constant 16 : index
    %54 = vector.load %arg15[%c0_56, %c3, %c16_57] : memref<2x10x160xf32, #tpu.memory_space<vmem>>, vector<1x1x128xf32>
    %55 = vector.shape_cast %54 : vector<1x1x128xf32> to vector<1x128xf32>
    %56 = vector.shape_cast %53 : vector<1x128xf32> to vector<1x1x128xf32>
    tpu.vector_store %arg15[%c0_56, %c3, %c16_57], %56 {strides = array<i32>} : memref<2x10x160xf32, #tpu.memory_space<vmem>>, vector<1x1x128xf32>,
    %57 = vector.extract_strided_slice %30 {offsets = [6, 0], sizes = [1, 128], strides = [1, 1]} : vector<32x128xf32> to vector<1x128xf32>
    %58 = vector.extract_strided_slice %30 {offsets = [7, 0], sizes = [1, 128], strides = [1, 1]} : vector<32x128xf32> to vector<1x128xf32>
    %59 = arith.maximumf %57, %58 : vector<1x128xf32>
    %cst_58 = arith.constant 0.000000e+00 : f32
    %60 = vector.broadcast %cst_58 : f32 to vector<1x128xf32>
    %61 = arith.maximumf %59, %60 : vector<1x128xf32>
    %c0_59 = arith.constant 0 : index
    %c4 = arith.constant 4 : index
    %c16_60 = arith.constant 16 : index
    %62 = vector.load %arg15[%c0_59, %c4, %c16_60] : memref<2x10x160xf32, #tpu.memory_space<vmem>>, vector<1x1x128xf32>
    %63 = vector.shape_cast %62 : vector<1x1x128xf32> to vector<1x128xf32>
    %64 = vector.shape_cast %61 : vector<1x128xf32> to vector<1x1x128xf32>
    tpu.vector_store %arg15[%c0_59, %c4, %c16_60], %64 {strides = array<i32>} : memref<2x10x160xf32, #tpu.memory_space<vmem>>, vector<1x1x128xf32>,
    %65 = vector.extract_strided_slice %30 {offsets = [8, 0], sizes = [1, 128], strides = [1, 1]} : vector<32x128xf32> to vector<1x128xf32>
    %66 = vector.extract_strided_slice %30 {offsets = [9, 0], sizes = [1, 128], strides = [1, 1]} : vector<32x128xf32> to vector<1x128xf32>
    %67 = arith.maximumf %65, %66 : vector<1x128xf32>
    %cst_61 = arith.constant 0.000000e+00 : f32
    %68 = vector.broadcast %cst_61 : f32 to vector<1x128xf32>
    %69 = arith.maximumf %67, %68 : vector<1x128xf32>
    %c0_62 = arith.constant 0 : index
    %c5 = arith.constant 5 : index
    %c16_63 = arith.constant 16 : index
    %70 = vector.load %arg15[%c0_62, %c5, %c16_63] : memref<2x10x160xf32, #tpu.memory_space<vmem>>, vector<1x1x128xf32>
    %71 = vector.shape_cast %70 : vector<1x1x128xf32> to vector<1x128xf32>
    %72 = vector.shape_cast %69 : vector<1x128xf32> to vector<1x1x128xf32>
    tpu.vector_store %arg15[%c0_62, %c5, %c16_63], %72 {strides = array<i32>} : memref<2x10x160xf32, #tpu.memory_space<vmem>>, vector<1x1x128xf32>,
    %73 = vector.extract_strided_slice %30 {offsets = [10, 0], sizes = [1, 128], strides = [1, 1]} : vector<32x128xf32> to vector<1x128xf32>
    %74 = vector.extract_strided_slice %30 {offsets = [11, 0], sizes = [1, 128], strides = [1, 1]} : vector<32x128xf32> to vector<1x128xf32>
    %75 = arith.maximumf %73, %74 : vector<1x128xf32>
    %cst_64 = arith.constant 0.000000e+00 : f32
    %76 = vector.broadcast %cst_64 : f32 to vector<1x128xf32>
    %77 = arith.maximumf %75, %76 : vector<1x128xf32>
    %c0_65 = arith.constant 0 : index
    %c6 = arith.constant 6 : index
    %c16_66 = arith.constant 16 : index
    %78 = vector.load %arg15[%c0_65, %c6, %c16_66] : memref<2x10x160xf32, #tpu.memory_space<vmem>>, vector<1x1x128xf32>
    %79 = vector.shape_cast %78 : vector<1x1x128xf32> to vector<1x128xf32>
    %80 = vector.shape_cast %77 : vector<1x128xf32> to vector<1x1x128xf32>
    tpu.vector_store %arg15[%c0_65, %c6, %c16_66], %80 {strides = array<i32>} : memref<2x10x160xf32, #tpu.memory_space<vmem>>, vector<1x1x128xf32>,
    %81 = vector.extract_strided_slice %30 {offsets = [12, 0], sizes = [1, 128], strides = [1, 1]} : vector<32x128xf32> to vector<1x128xf32>
    %82 = vector.extract_strided_slice %30 {offsets = [13, 0], sizes = [1, 128], strides = [1, 1]} : vector<32x128xf32> to vector<1x128xf32>
    %83 = arith.maximumf %81, %82 : vector<1x128xf32>
    %cst_67 = arith.constant 0.000000e+00 : f32
    %84 = vector.broadcast %cst_67 : f32 to vector<1x128xf32>
    %85 = arith.maximumf %83, %84 : vector<1x128xf32>
    %c0_68 = arith.constant 0 : index
    %c7 = arith.constant 7 : index
    %c16_69 = arith.constant 16 : index
    %86 = vector.load %arg15[%c0_68, %c7, %c16_69] : memref<2x10x160xf32, #tpu.memory_space<vmem>>, vector<1x1x128xf32>
    %87 = vector.shape_cast %86 : vector<1x1x128xf32> to vector<1x128xf32>
    %88 = vector.shape_cast %85 : vector<1x128xf32> to vector<1x1x128xf32>
    tpu.vector_store %arg15[%c0_68, %c7, %c16_69], %88 {strides = array<i32>} : memref<2x10x160xf32, #tpu.memory_space<vmem>>, vector<1x1x128xf32>,
    %89 = vector.extract_strided_slice %30 {offsets = [14, 0], sizes = [1, 128], strides = [1, 1]} : vector<32x128xf32> to vector<1x128xf32>
    %90 = vector.extract_strided_slice %30 {offsets = [15, 0], sizes = [1, 128], strides = [1, 1]} : vector<32x128xf32> to vector<1x128xf32>
    %91 = arith.maximumf %89, %90 : vector<1x128xf32>
    %cst_70 = arith.constant 0.000000e+00 : f32
    %92 = vector.broadcast %cst_70 : f32 to vector<1x128xf32>
    %93 = arith.maximumf %91, %92 : vector<1x128xf32>
    %c0_71 = arith.constant 0 : index
    %c8 = arith.constant 8 : index
    %c16_72 = arith.constant 16 : index
    %94 = vector.load %arg15[%c0_71, %c8, %c16_72] : memref<2x10x160xf32, #tpu.memory_space<vmem>>, vector<1x1x128xf32>
    %95 = vector.shape_cast %94 : vector<1x1x128xf32> to vector<1x128xf32>
    %96 = vector.shape_cast %93 : vector<1x128xf32> to vector<1x1x128xf32>
    tpu.vector_store %arg15[%c0_71, %c8, %c16_72], %96 {strides = array<i32>} : memref<2x10x160xf32, #tpu.memory_space<vmem>>, vector<1x1x128xf32>,
    %97 = vector.extract_strided_slice %30 {offsets = [16, 0], sizes = [1, 128], strides = [1, 1]} : vector<32x128xf32> to vector<1x128xf32>
    %98 = vector.extract_strided_slice %30 {offsets = [17, 0], sizes = [1, 128], strides = [1, 1]} : vector<32x128xf32> to vector<1x128xf32>
    %99 = arith.maximumf %97, %98 : vector<1x128xf32>
    %cst_73 = arith.constant 0.000000e+00 : f32
    %100 = vector.broadcast %cst_73 : f32 to vector<1x128xf32>
    %101 = arith.maximumf %99, %100 : vector<1x128xf32>
    %c1_74 = arith.constant 1 : index
    %c1_75 = arith.constant 1 : index
    %c16_76 = arith.constant 16 : index
    %102 = vector.load %arg15[%c1_74, %c1_75, %c16_76] : memref<2x10x160xf32, #tpu.memory_space<vmem>>, vector<1x1x128xf32>
    %103 = vector.shape_cast %102 : vector<1x1x128xf32> to vector<1x128xf32>
    %104 = vector.shape_cast %101 : vector<1x128xf32> to vector<1x1x128xf32>
    tpu.vector_store %arg15[%c1_74, %c1_75, %c16_76], %104 {strides = array<i32>} : memref<2x10x160xf32, #tpu.memory_space<vmem>>, vector<1x1x128xf32>,
    %105 = vector.extract_strided_slice %30 {offsets = [18, 0], sizes = [1, 128], strides = [1, 1]} : vector<32x128xf32> to vector<1x128xf32>
    %106 = vector.extract_strided_slice %30 {offsets = [19, 0], sizes = [1, 128], strides = [1, 1]} : vector<32x128xf32> to vector<1x128xf32>
    %107 = arith.maximumf %105, %106 : vector<1x128xf32>
    %cst_77 = arith.constant 0.000000e+00 : f32
    %108 = vector.broadcast %cst_77 : f32 to vector<1x128xf32>
    %109 = arith.maximumf %107, %108 : vector<1x128xf32>
    %c1_78 = arith.constant 1 : index
    %c2_79 = arith.constant 2 : index
    %c16_80 = arith.constant 16 : index
    %110 = vector.load %arg15[%c1_78, %c2_79, %c16_80] : memref<2x10x160xf32, #tpu.memory_space<vmem>>, vector<1x1x128xf32>
    %111 = vector.shape_cast %110 : vector<1x1x128xf32> to vector<1x128xf32>
    %112 = vector.shape_cast %109 : vector<1x128xf32> to vector<1x1x128xf32>
    tpu.vector_store %arg15[%c1_78, %c2_79, %c16_80], %112 {strides = array<i32>} : memref<2x10x160xf32, #tpu.memory_space<vmem>>, vector<1x1x128xf32>,
    %113 = vector.extract_strided_slice %30 {offsets = [20, 0], sizes = [1, 128], strides = [1, 1]} : vector<32x128xf32> to vector<1x128xf32>
    %114 = vector.extract_strided_slice %30 {offsets = [21, 0], sizes = [1, 128], strides = [1, 1]} : vector<32x128xf32> to vector<1x128xf32>
    %115 = arith.maximumf %113, %114 : vector<1x128xf32>
    %cst_81 = arith.constant 0.000000e+00 : f32
    %116 = vector.broadcast %cst_81 : f32 to vector<1x128xf32>
    %117 = arith.maximumf %115, %116 : vector<1x128xf32>
    %c1_82 = arith.constant 1 : index
    %c3_83 = arith.constant 3 : index
    %c16_84 = arith.constant 16 : index
    %118 = vector.load %arg15[%c1_82, %c3_83, %c16_84] : memref<2x10x160xf32, #tpu.memory_space<vmem>>, vector<1x1x128xf32>
    %119 = vector.shape_cast %118 : vector<1x1x128xf32> to vector<1x128xf32>
    %120 = vector.shape_cast %117 : vector<1x128xf32> to vector<1x1x128xf32>
    tpu.vector_store %arg15[%c1_82, %c3_83, %c16_84], %120 {strides = array<i32>} : memref<2x10x160xf32, #tpu.memory_space<vmem>>, vector<1x1x128xf32>,
    %121 = vector.extract_strided_slice %30 {offsets = [22, 0], sizes = [1, 128], strides = [1, 1]} : vector<32x128xf32> to vector<1x128xf32>
    %122 = vector.extract_strided_slice %30 {offsets = [23, 0], sizes = [1, 128], strides = [1, 1]} : vector<32x128xf32> to vector<1x128xf32>
    %123 = arith.maximumf %121, %122 : vector<1x128xf32>
    %cst_85 = arith.constant 0.000000e+00 : f32
    %124 = vector.broadcast %cst_85 : f32 to vector<1x128xf32>
    %125 = arith.maximumf %123, %124 : vector<1x128xf32>
    %c1_86 = arith.constant 1 : index
    %c4_87 = arith.constant 4 : index
    %c16_88 = arith.constant 16 : index
    %126 = vector.load %arg15[%c1_86, %c4_87, %c16_88] : memref<2x10x160xf32, #tpu.memory_space<vmem>>, vector<1x1x128xf32>
    %127 = vector.shape_cast %126 : vector<1x1x128xf32> to vector<1x128xf32>
    %128 = vector.shape_cast %125 : vector<1x128xf32> to vector<1x1x128xf32>
    tpu.vector_store %arg15[%c1_86, %c4_87, %c16_88], %128 {strides = array<i32>} : memref<2x10x160xf32, #tpu.memory_space<vmem>>, vector<1x1x128xf32>,
    %129 = vector.extract_strided_slice %30 {offsets = [24, 0], sizes = [1, 128], strides = [1, 1]} : vector<32x128xf32> to vector<1x128xf32>
    %130 = vector.extract_strided_slice %30 {offsets = [25, 0], sizes = [1, 128], strides = [1, 1]} : vector<32x128xf32> to vector<1x128xf32>
    %131 = arith.maximumf %129, %130 : vector<1x128xf32>
    %cst_89 = arith.constant 0.000000e+00 : f32
    %132 = vector.broadcast %cst_89 : f32 to vector<1x128xf32>
    %133 = arith.maximumf %131, %132 : vector<1x128xf32>
    %c1_90 = arith.constant 1 : index
    %c5_91 = arith.constant 5 : index
    %c16_92 = arith.constant 16 : index
    %134 = vector.load %arg15[%c1_90, %c5_91, %c16_92] : memref<2x10x160xf32, #tpu.memory_space<vmem>>, vector<1x1x128xf32>
    %135 = vector.shape_cast %134 : vector<1x1x128xf32> to vector<1x128xf32>
    %136 = vector.shape_cast %133 : vector<1x128xf32> to vector<1x1x128xf32>
    tpu.vector_store %arg15[%c1_90, %c5_91, %c16_92], %136 {strides = array<i32>} : memref<2x10x160xf32, #tpu.memory_space<vmem>>, vector<1x1x128xf32>,
    %137 = vector.extract_strided_slice %30 {offsets = [26, 0], sizes = [1, 128], strides = [1, 1]} : vector<32x128xf32> to vector<1x128xf32>
    %138 = vector.extract_strided_slice %30 {offsets = [27, 0], sizes = [1, 128], strides = [1, 1]} : vector<32x128xf32> to vector<1x128xf32>
    %139 = arith.maximumf %137, %138 : vector<1x128xf32>
    %cst_93 = arith.constant 0.000000e+00 : f32
    %140 = vector.broadcast %cst_93 : f32 to vector<1x128xf32>
    %141 = arith.maximumf %139, %140 : vector<1x128xf32>
    %c1_94 = arith.constant 1 : index
    %c6_95 = arith.constant 6 : index
    %c16_96 = arith.constant 16 : index
    %142 = vector.load %arg15[%c1_94, %c6_95, %c16_96] : memref<2x10x160xf32, #tpu.memory_space<vmem>>, vector<1x1x128xf32>
    %143 = vector.shape_cast %142 : vector<1x1x128xf32> to vector<1x128xf32>
    %144 = vector.shape_cast %141 : vector<1x128xf32> to vector<1x1x128xf32>
    tpu.vector_store %arg15[%c1_94, %c6_95, %c16_96], %144 {strides = array<i32>} : memref<2x10x160xf32, #tpu.memory_space<vmem>>, vector<1x1x128xf32>,
    %145 = vector.extract_strided_slice %30 {offsets = [28, 0], sizes = [1, 128], strides = [1, 1]} : vector<32x128xf32> to vector<1x128xf32>
    %146 = vector.extract_strided_slice %30 {offsets = [29, 0], sizes = [1, 128], strides = [1, 1]} : vector<32x128xf32> to vector<1x128xf32>
    %147 = arith.maximumf %145, %146 : vector<1x128xf32>
    %cst_97 = arith.constant 0.000000e+00 : f32
    %148 = vector.broadcast %cst_97 : f32 to vector<1x128xf32>
    %149 = arith.maximumf %147, %148 : vector<1x128xf32>
    %c1_98 = arith.constant 1 : index
    %c7_99 = arith.constant 7 : index
    %c16_100 = arith.constant 16 : index
    %150 = vector.load %arg15[%c1_98, %c7_99, %c16_100] : memref<2x10x160xf32, #tpu.memory_space<vmem>>, vector<1x1x128xf32>
    %151 = vector.shape_cast %150 : vector<1x1x128xf32> to vector<1x128xf32>
    %152 = vector.shape_cast %149 : vector<1x128xf32> to vector<1x1x128xf32>
    tpu.vector_store %arg15[%c1_98, %c7_99, %c16_100], %152 {strides = array<i32>} : memref<2x10x160xf32, #tpu.memory_space<vmem>>, vector<1x1x128xf32>,
    %153 = vector.extract_strided_slice %30 {offsets = [30, 0], sizes = [1, 128], strides = [1, 1]} : vector<32x128xf32> to vector<1x128xf32>
    %154 = vector.extract_strided_slice %30 {offsets = [31, 0], sizes = [1, 128], strides = [1, 1]} : vector<32x128xf32> to vector<1x128xf32>
    %155 = arith.maximumf %153, %154 : vector<1x128xf32>
    %cst_101 = arith.constant 0.000000e+00 : f32
    %156 = vector.broadcast %cst_101 : f32 to vector<1x128xf32>
    %157 = arith.maximumf %155, %156 : vector<1x128xf32>
    %c1_102 = arith.constant 1 : index
    %c8_103 = arith.constant 8 : index
    %c16_104 = arith.constant 16 : index
    %158 = vector.load %arg15[%c1_102, %c8_103, %c16_104] : memref<2x10x160xf32, #tpu.memory_space<vmem>>, vector<1x1x128xf32>
    %159 = vector.shape_cast %158 : vector<1x1x128xf32> to vector<1x128xf32>
    %160 = vector.shape_cast %157 : vector<1x128xf32> to vector<1x1x128xf32>
    tpu.vector_store %arg15[%c1_102, %c8_103, %c16_104], %160 {strides = array<i32>} : memref<2x10x160xf32, #tpu.memory_space<vmem>>, vector<1x1x128xf32>,
    %c0_105 = arith.constant 0 : index
    %c0_106 = arith.constant 0 : index
    %c0_107 = arith.constant 0 : index
    %161 = vector.load %arg15[%c0_105, %c0_106, %c0_107] : memref<2x10x160xf32, #tpu.memory_space<vmem>>, vector<1x8x160xf32>
    %162 = vector.shape_cast %161 : vector<1x8x160xf32> to vector<8x160xf32>
    %c0_108 = arith.constant 0 : index
    %c0_109 = arith.constant 0 : index
    %163 = vector.load %arg16[%c0_108, %c0_109] : memref<16x480xf32, #tpu.memory_space<vmem>>, vector<8x160xf32>
    tpu.vector_store %arg16[%c0_108, %c0_109], %162 {strides = array<i32>} : memref<16x480xf32, #tpu.memory_space<vmem>>, vector<8x160xf32>,
    %c0_110 = arith.constant 0 : index
    %c1_111 = arith.constant 1 : index
    %c0_112 = arith.constant 0 : index
    %164 = vector.load %arg15[%c0_110, %c1_111, %c0_112] : memref<2x10x160xf32, #tpu.memory_space<vmem>>, vector<1x8x160xf32>
    %165 = vector.shape_cast %164 : vector<1x8x160xf32> to vector<8x160xf32>
    %c0_113 = arith.constant 0 : index
    %c160 = arith.constant 160 : index
    %166 = vector.load %arg16[%c0_113, %c160] : memref<16x480xf32, #tpu.memory_space<vmem>>, vector<8x160xf32>
    tpu.vector_store %arg16[%c0_113, %c160], %165 {strides = array<i32>} : memref<16x480xf32, #tpu.memory_space<vmem>>, vector<8x160xf32>,
    %c0_114 = arith.constant 0 : index
    %c2_115 = arith.constant 2 : index
    %c0_116 = arith.constant 0 : index
    %167 = vector.load %arg15[%c0_114, %c2_115, %c0_116] : memref<2x10x160xf32, #tpu.memory_space<vmem>>, vector<1x8x160xf32>
    %168 = vector.shape_cast %167 : vector<1x8x160xf32> to vector<8x160xf32>
    %c0_117 = arith.constant 0 : index
    %c320 = arith.constant 320 : index
    %169 = vector.load %arg16[%c0_117, %c320] : memref<16x480xf32, #tpu.memory_space<vmem>>, vector<8x160xf32>
    tpu.vector_store %arg16[%c0_117, %c320], %168 {strides = array<i32>} : memref<16x480xf32, #tpu.memory_space<vmem>>, vector<8x160xf32>,
    %c1_118 = arith.constant 1 : index
    %c0_119 = arith.constant 0 : index
    %c0_120 = arith.constant 0 : index
    %170 = vector.load %arg15[%c1_118, %c0_119, %c0_120] : memref<2x10x160xf32, #tpu.memory_space<vmem>>, vector<1x8x160xf32>
    %171 = vector.shape_cast %170 : vector<1x8x160xf32> to vector<8x160xf32>
    %c8_121 = arith.constant 8 : index
    %c0_122 = arith.constant 0 : index
    %172 = vector.load %arg16[%c8_121, %c0_122] : memref<16x480xf32, #tpu.memory_space<vmem>>, vector<8x160xf32>
    tpu.vector_store %arg16[%c8_121, %c0_122], %171 {strides = array<i32>} : memref<16x480xf32, #tpu.memory_space<vmem>>, vector<8x160xf32>,
    %c1_123 = arith.constant 1 : index
    %c1_124 = arith.constant 1 : index
    %c0_125 = arith.constant 0 : index
    %173 = vector.load %arg15[%c1_123, %c1_124, %c0_125] : memref<2x10x160xf32, #tpu.memory_space<vmem>>, vector<1x8x160xf32>
    %174 = vector.shape_cast %173 : vector<1x8x160xf32> to vector<8x160xf32>
    %c8_126 = arith.constant 8 : index
    %c160_127 = arith.constant 160 : index
    %175 = vector.load %arg16[%c8_126, %c160_127] : memref<16x480xf32, #tpu.memory_space<vmem>>, vector<8x160xf32>
    tpu.vector_store %arg16[%c8_126, %c160_127], %174 {strides = array<i32>} : memref<16x480xf32, #tpu.memory_space<vmem>>, vector<8x160xf32>,
    %c1_128 = arith.constant 1 : index
    %c2_129 = arith.constant 2 : index
    %c0_130 = arith.constant 0 : index
    %176 = vector.load %arg15[%c1_128, %c2_129, %c0_130] : memref<2x10x160xf32, #tpu.memory_space<vmem>>, vector<1x8x160xf32>
    %177 = vector.shape_cast %176 : vector<1x8x160xf32> to vector<8x160xf32>
    %c8_131 = arith.constant 8 : index
    %c320_132 = arith.constant 320 : index
    %178 = vector.load %arg16[%c8_131, %c320_132] : memref<16x480xf32, #tpu.memory_space<vmem>>, vector<8x160xf32>
    tpu.vector_store %arg16[%c8_131, %c320_132], %177 {strides = array<i32>} : memref<16x480xf32, #tpu.memory_space<vmem>>, vector<8x160xf32>,
    %c0_133 = arith.constant 0 : index
    %c0_134 = arith.constant 0 : index
    %179 = vector.load %arg16[%c0_133, %c0_134] : memref<16x480xf32, #tpu.memory_space<vmem>>, vector<16x480xf32>
    %c0_135 = arith.constant 0 : index
    %c0_136 = arith.constant 0 : index
    %180 = vector.load %arg5[%c0_135, %c0_136] : memref<480x256xf32, #tpu.memory_space<vmem>>, vector<480x256xf32>
    %cst_137 = arith.constant dense<0.000000e+00> : vector<16x256xf32>
    %181 = tpu.matmul %179, %180, %cst_137 {dimension_numbers = #tpu.dot_dimension_numbers<[1], [0], [0], [1], [0, 0, 1, 1], [], []>} : vector<16x480xf32>, vector<480x256xf32>, vector<16x256xf32> -> vector<16x256xf32>
    %c0_138 = arith.constant 0 : index
    %c0_139 = arith.constant 0 : index
    %182 = vector.load %arg6[%c0_138, %c0_139] : memref<480x256xf32, #tpu.memory_space<vmem>>, vector<480x256xf32>
    %cst_140 = arith.constant dense<0.000000e+00> : vector<16x256xf32>
    %183 = tpu.matmul %179, %182, %cst_140 {dimension_numbers = #tpu.dot_dimension_numbers<[1], [0], [0], [1], [0, 0, 1, 1], [], []>} : vector<16x480xf32>, vector<480x256xf32>, vector<16x256xf32> -> vector<16x256xf32>
    %184 = arith.maximumf %181, %183 : vector<16x256xf32>
    %c0_141 = arith.constant 0 : index
    %c0_142 = arith.constant 0 : index
    %185 = vector.load %arg7[%c0_141, %c0_142] : memref<1x256xf32, #tpu.memory_space<vmem>>, vector<1x256xf32>
    %186 = vector.broadcast %185 : vector<1x256xf32> to vector<16x256xf32>
    %187 = arith.addf %184, %186 : vector<16x256xf32>
    %188 = vector.extract_strided_slice %187 {offsets = [0, 0], sizes = [1, 256], strides = [1, 1]} : vector<16x256xf32> to vector<1x256xf32>
    %189 = vector.extract_strided_slice %187 {offsets = [1, 0], sizes = [1, 256], strides = [1, 1]} : vector<16x256xf32> to vector<1x256xf32>
    %190 = arith.maximumf %188, %189 : vector<1x256xf32>
    %cst_143 = arith.constant 0.000000e+00 : f32
    %191 = vector.broadcast %cst_143 : f32 to vector<1x256xf32>
    %192 = arith.maximumf %190, %191 : vector<1x256xf32>
    %c0_144 = arith.constant 0 : index
    %c0_145 = arith.constant 0 : index
    %c0_146 = arith.constant 0 : index
    %193 = vector.load %arg17[%c0_144, %c0_145, %c0_146] : memref<4x2x256xf32, #tpu.memory_space<vmem>>, vector<1x1x256xf32>
    %194 = vector.shape_cast %193 : vector<1x1x256xf32> to vector<1x256xf32>
    %195 = vector.shape_cast %192 : vector<1x256xf32> to vector<1x1x256xf32>
    tpu.vector_store %arg17[%c0_144, %c0_145, %c0_146], %195 {strides = array<i32>} : memref<4x2x256xf32, #tpu.memory_space<vmem>>, vector<1x1x256xf32>,
    %196 = vector.extract_strided_slice %187 {offsets = [2, 0], sizes = [1, 256], strides = [1, 1]} : vector<16x256xf32> to vector<1x256xf32>
    %197 = vector.extract_strided_slice %187 {offsets = [3, 0], sizes = [1, 256], strides = [1, 1]} : vector<16x256xf32> to vector<1x256xf32>
    %198 = arith.maximumf %196, %197 : vector<1x256xf32>
    %cst_147 = arith.constant 0.000000e+00 : f32
    %199 = vector.broadcast %cst_147 : f32 to vector<1x256xf32>
    %200 = arith.maximumf %198, %199 : vector<1x256xf32>
    %c1_148 = arith.constant 1 : index
    %c0_149 = arith.constant 0 : index
    %c0_150 = arith.constant 0 : index
    %201 = vector.load %arg17[%c1_148, %c0_149, %c0_150] : memref<4x2x256xf32, #tpu.memory_space<vmem>>, vector<1x1x256xf32>
    %202 = vector.shape_cast %201 : vector<1x1x256xf32> to vector<1x256xf32>
    %203 = vector.shape_cast %200 : vector<1x256xf32> to vector<1x1x256xf32>
    tpu.vector_store %arg17[%c1_148, %c0_149, %c0_150], %203 {strides = array<i32>} : memref<4x2x256xf32, #tpu.memory_space<vmem>>, vector<1x1x256xf32>,
    %204 = vector.extract_strided_slice %187 {offsets = [4, 0], sizes = [1, 256], strides = [1, 1]} : vector<16x256xf32> to vector<1x256xf32>
    %205 = vector.extract_strided_slice %187 {offsets = [5, 0], sizes = [1, 256], strides = [1, 1]} : vector<16x256xf32> to vector<1x256xf32>
    %206 = arith.maximumf %204, %205 : vector<1x256xf32>
    %cst_151 = arith.constant 0.000000e+00 : f32
    %207 = vector.broadcast %cst_151 : f32 to vector<1x256xf32>
    %208 = arith.maximumf %206, %207 : vector<1x256xf32>
    %c2_152 = arith.constant 2 : index
    %c0_153 = arith.constant 0 : index
    %c0_154 = arith.constant 0 : index
    %209 = vector.load %arg17[%c2_152, %c0_153, %c0_154] : memref<4x2x256xf32, #tpu.memory_space<vmem>>, vector<1x1x256xf32>
    %210 = vector.shape_cast %209 : vector<1x1x256xf32> to vector<1x256xf32>
    %211 = vector.shape_cast %208 : vector<1x256xf32> to vector<1x1x256xf32>
    tpu.vector_store %arg17[%c2_152, %c0_153, %c0_154], %211 {strides = array<i32>} : memref<4x2x256xf32, #tpu.memory_space<vmem>>, vector<1x1x256xf32>,
    %212 = vector.extract_strided_slice %187 {offsets = [6, 0], sizes = [1, 256], strides = [1, 1]} : vector<16x256xf32> to vector<1x256xf32>
    %213 = vector.extract_strided_slice %187 {offsets = [7, 0], sizes = [1, 256], strides = [1, 1]} : vector<16x256xf32> to vector<1x256xf32>
    %214 = arith.maximumf %212, %213 : vector<1x256xf32>
    %cst_155 = arith.constant 0.000000e+00 : f32
    %215 = vector.broadcast %cst_155 : f32 to vector<1x256xf32>
    %216 = arith.maximumf %214, %215 : vector<1x256xf32>
    %c3_156 = arith.constant 3 : index
    %c0_157 = arith.constant 0 : index
    %c0_158 = arith.constant 0 : index
    %217 = vector.load %arg17[%c3_156, %c0_157, %c0_158] : memref<4x2x256xf32, #tpu.memory_space<vmem>>, vector<1x1x256xf32>
    %218 = vector.shape_cast %217 : vector<1x1x256xf32> to vector<1x256xf32>
    %219 = vector.shape_cast %216 : vector<1x256xf32> to vector<1x1x256xf32>
    tpu.vector_store %arg17[%c3_156, %c0_157, %c0_158], %219 {strides = array<i32>} : memref<4x2x256xf32, #tpu.memory_space<vmem>>, vector<1x1x256xf32>,
    %220 = vector.extract_strided_slice %187 {offsets = [8, 0], sizes = [1, 256], strides = [1, 1]} : vector<16x256xf32> to vector<1x256xf32>
    %221 = vector.extract_strided_slice %187 {offsets = [9, 0], sizes = [1, 256], strides = [1, 1]} : vector<16x256xf32> to vector<1x256xf32>
    %222 = arith.maximumf %220, %221 : vector<1x256xf32>
    %cst_159 = arith.constant 0.000000e+00 : f32
    %223 = vector.broadcast %cst_159 : f32 to vector<1x256xf32>
    %224 = arith.maximumf %222, %223 : vector<1x256xf32>
    %c0_160 = arith.constant 0 : index
    %c1_161 = arith.constant 1 : index
    %c0_162 = arith.constant 0 : index
    %225 = vector.load %arg17[%c0_160, %c1_161, %c0_162] : memref<4x2x256xf32, #tpu.memory_space<vmem>>, vector<1x1x256xf32>
    %226 = vector.shape_cast %225 : vector<1x1x256xf32> to vector<1x256xf32>
    %227 = vector.shape_cast %224 : vector<1x256xf32> to vector<1x1x256xf32>
    tpu.vector_store %arg17[%c0_160, %c1_161, %c0_162], %227 {strides = array<i32>} : memref<4x2x256xf32, #tpu.memory_space<vmem>>, vector<1x1x256xf32>,
    %228 = vector.extract_strided_slice %187 {offsets = [10, 0], sizes = [1, 256], strides = [1, 1]} : vector<16x256xf32> to vector<1x256xf32>
    %229 = vector.extract_strided_slice %187 {offsets = [11, 0], sizes = [1, 256], strides = [1, 1]} : vector<16x256xf32> to vector<1x256xf32>
    %230 = arith.maximumf %228, %229 : vector<1x256xf32>
    %cst_163 = arith.constant 0.000000e+00 : f32
    %231 = vector.broadcast %cst_163 : f32 to vector<1x256xf32>
    %232 = arith.maximumf %230, %231 : vector<1x256xf32>
    %c1_164 = arith.constant 1 : index
    %c1_165 = arith.constant 1 : index
    %c0_166 = arith.constant 0 : index
    %233 = vector.load %arg17[%c1_164, %c1_165, %c0_166] : memref<4x2x256xf32, #tpu.memory_space<vmem>>, vector<1x1x256xf32>
    %234 = vector.shape_cast %233 : vector<1x1x256xf32> to vector<1x256xf32>
    %235 = vector.shape_cast %232 : vector<1x256xf32> to vector<1x1x256xf32>
    tpu.vector_store %arg17[%c1_164, %c1_165, %c0_166], %235 {strides = array<i32>} : memref<4x2x256xf32, #tpu.memory_space<vmem>>, vector<1x1x256xf32>,
    %236 = vector.extract_strided_slice %187 {offsets = [12, 0], sizes = [1, 256], strides = [1, 1]} : vector<16x256xf32> to vector<1x256xf32>
    %237 = vector.extract_strided_slice %187 {offsets = [13, 0], sizes = [1, 256], strides = [1, 1]} : vector<16x256xf32> to vector<1x256xf32>
    %238 = arith.maximumf %236, %237 : vector<1x256xf32>
    %cst_167 = arith.constant 0.000000e+00 : f32
    %239 = vector.broadcast %cst_167 : f32 to vector<1x256xf32>
    %240 = arith.maximumf %238, %239 : vector<1x256xf32>
    %c2_168 = arith.constant 2 : index
    %c1_169 = arith.constant 1 : index
    %c0_170 = arith.constant 0 : index
    %241 = vector.load %arg17[%c2_168, %c1_169, %c0_170] : memref<4x2x256xf32, #tpu.memory_space<vmem>>, vector<1x1x256xf32>
    %242 = vector.shape_cast %241 : vector<1x1x256xf32> to vector<1x256xf32>
    %243 = vector.shape_cast %240 : vector<1x256xf32> to vector<1x1x256xf32>
    tpu.vector_store %arg17[%c2_168, %c1_169, %c0_170], %243 {strides = array<i32>} : memref<4x2x256xf32, #tpu.memory_space<vmem>>, vector<1x1x256xf32>,
    %244 = vector.extract_strided_slice %187 {offsets = [14, 0], sizes = [1, 256], strides = [1, 1]} : vector<16x256xf32> to vector<1x256xf32>
    %245 = vector.extract_strided_slice %187 {offsets = [15, 0], sizes = [1, 256], strides = [1, 1]} : vector<16x256xf32> to vector<1x256xf32>
    %246 = arith.maximumf %244, %245 : vector<1x256xf32>
    %cst_171 = arith.constant 0.000000e+00 : f32
    %247 = vector.broadcast %cst_171 : f32 to vector<1x256xf32>
    %248 = arith.maximumf %246, %247 : vector<1x256xf32>
    %c3_172 = arith.constant 3 : index
    %c1_173 = arith.constant 1 : index
    %c0_174 = arith.constant 0 : index
    %249 = vector.load %arg17[%c3_172, %c1_173, %c0_174] : memref<4x2x256xf32, #tpu.memory_space<vmem>>, vector<1x1x256xf32>
    %250 = vector.shape_cast %249 : vector<1x1x256xf32> to vector<1x256xf32>
    %251 = vector.shape_cast %248 : vector<1x256xf32> to vector<1x1x256xf32>
    tpu.vector_store %arg17[%c3_172, %c1_173, %c0_174], %251 {strides = array<i32>} : memref<4x2x256xf32, #tpu.memory_space<vmem>>, vector<1x1x256xf32>,
    %cst_175 = arith.constant 0.000000e+00 : f32
    %252 = vector.broadcast %cst_175 : f32 to vector<2x1000xf32>
    %c0_176 = arith.constant 0 : index
    %c0_177 = arith.constant 0 : index
    %c0_178 = arith.constant 0 : index
    %253 = vector.load %arg17[%c0_176, %c0_177, %c0_178] : memref<4x2x256xf32, #tpu.memory_space<vmem>>, vector<1x2x256xf32>
    %254 = vector.shape_cast %253 : vector<1x2x256xf32> to vector<2x256xf32>
    %c0_179 = arith.constant 0 : index
    %c0_180 = arith.constant 0 : index
    %c0_181 = arith.constant 0 : index
    %255 = vector.load %arg8[%c0_179, %c0_180, %c0_181] : memref<4x256x1000xf32, #tpu.memory_space<vmem>>, vector<1x256x1000xf32>
    %256 = vector.shape_cast %255 : vector<1x256x1000xf32> to vector<256x1000xf32>
    %cst_182 = arith.constant dense<0.000000e+00> : vector<2x1000xf32>
    %257 = tpu.matmul %254, %256, %cst_182 {dimension_numbers = #tpu.dot_dimension_numbers<[1], [0], [0], [1], [0, 0, 1, 1], [], []>} : vector<2x256xf32>, vector<256x1000xf32>, vector<2x1000xf32> -> vector<2x1000xf32>
    %258 = arith.addf %252, %257 : vector<2x1000xf32>
    %c1_183 = arith.constant 1 : index
    %c0_184 = arith.constant 0 : index
    %c0_185 = arith.constant 0 : index
    %259 = vector.load %arg17[%c1_183, %c0_184, %c0_185] : memref<4x2x256xf32, #tpu.memory_space<vmem>>, vector<1x2x256xf32>
    %260 = vector.shape_cast %259 : vector<1x2x256xf32> to vector<2x256xf32>
    %c1_186 = arith.constant 1 : index
    %c0_187 = arith.constant 0 : index
    %c0_188 = arith.constant 0 : index
    %261 = vector.load %arg8[%c1_186, %c0_187, %c0_188] : memref<4x256x1000xf32, #tpu.memory_space<vmem>>, vector<1x256x1000xf32>
    %262 = vector.shape_cast %261 : vector<1x256x1000xf32> to vector<256x1000xf32>
    %cst_189 = arith.constant dense<0.000000e+00> : vector<2x1000xf32>
    %263 = tpu.matmul %260, %262, %cst_189 {dimension_numbers = #tpu.dot_dimension_numbers<[1], [0], [0], [1], [0, 0, 1, 1], [], []>} : vector<2x256xf32>, vector<256x1000xf32>, vector<2x1000xf32> -> vector<2x1000xf32>
    %264 = arith.addf %258, %263 : vector<2x1000xf32>
    %c2_190 = arith.constant 2 : index
    %c0_191 = arith.constant 0 : index
    %c0_192 = arith.constant 0 : index
    %265 = vector.load %arg17[%c2_190, %c0_191, %c0_192] : memref<4x2x256xf32, #tpu.memory_space<vmem>>, vector<1x2x256xf32>
    %266 = vector.shape_cast %265 : vector<1x2x256xf32> to vector<2x256xf32>
    %c2_193 = arith.constant 2 : index
    %c0_194 = arith.constant 0 : index
    %c0_195 = arith.constant 0 : index
    %267 = vector.load %arg8[%c2_193, %c0_194, %c0_195] : memref<4x256x1000xf32, #tpu.memory_space<vmem>>, vector<1x256x1000xf32>
    %268 = vector.shape_cast %267 : vector<1x256x1000xf32> to vector<256x1000xf32>
    %cst_196 = arith.constant dense<0.000000e+00> : vector<2x1000xf32>
    %269 = tpu.matmul %266, %268, %cst_196 {dimension_numbers = #tpu.dot_dimension_numbers<[1], [0], [0], [1], [0, 0, 1, 1], [], []>} : vector<2x256xf32>, vector<256x1000xf32>, vector<2x1000xf32> -> vector<2x1000xf32>
    %270 = arith.addf %264, %269 : vector<2x1000xf32>
    %c3_197 = arith.constant 3 : index
    %c0_198 = arith.constant 0 : index
    %c0_199 = arith.constant 0 : index
    %271 = vector.load %arg17[%c3_197, %c0_198, %c0_199] : memref<4x2x256xf32, #tpu.memory_space<vmem>>, vector<1x2x256xf32>
    %272 = vector.shape_cast %271 : vector<1x2x256xf32> to vector<2x256xf32>
    %c3_200 = arith.constant 3 : index
    %c0_201 = arith.constant 0 : index
    %c0_202 = arith.constant 0 : index
    %273 = vector.load %arg8[%c3_200, %c0_201, %c0_202] : memref<4x256x1000xf32, #tpu.memory_space<vmem>>, vector<1x256x1000xf32>
    %274 = vector.shape_cast %273 : vector<1x256x1000xf32> to vector<256x1000xf32>
    %cst_203 = arith.constant dense<0.000000e+00> : vector<2x1000xf32>
    %275 = tpu.matmul %272, %274, %cst_203 {dimension_numbers = #tpu.dot_dimension_numbers<[1], [0], [0], [1], [0, 0, 1, 1], [], []>} : vector<2x256xf32>, vector<256x1000xf32>, vector<2x1000xf32> -> vector<2x1000xf32>
    %276 = arith.addf %270, %275 : vector<2x1000xf32>
    %c0_204 = arith.constant 0 : index
    %c0_205 = arith.constant 0 : index
    %277 = vector.load %arg9[%c0_204, %c0_205] : memref<1x1000xf32, #tpu.memory_space<vmem>>, vector<1x1000xf32>
    %278 = vector.broadcast %277 : vector<1x1000xf32> to vector<2x1000xf32>
    %279 = arith.addf %276, %278 : vector<2x1000xf32>
    %cst_206 = arith.constant 0.000000e+00 : f32
    %280 = vector.broadcast %cst_206 : f32 to vector<2x1000xf32>
    %281 = arith.maximumf %279, %280 : vector<2x1000xf32>
    %c0_207 = arith.constant 0 : index
    %c0_208 = arith.constant 0 : index
    %282 = vector.load %arg10[%c0_207, %c0_208] : memref<1000x10xf32, #tpu.memory_space<vmem>>, vector<1000x10xf32>
    %cst_209 = arith.constant dense<0.000000e+00> : vector<2x10xf32>
    %283 = tpu.matmul %281, %282, %cst_209 {dimension_numbers = #tpu.dot_dimension_numbers<[1], [0], [0], [1], [0, 0, 1, 1], [], []>} : vector<2x1000xf32>, vector<1000x10xf32>, vector<2x10xf32> -> vector<2x10xf32>
    %c0_210 = arith.constant 0 : index
    %c0_211 = arith.constant 0 : index
    %284 = vector.load %arg11[%c0_210, %c0_211] : memref<1x10xf32, #tpu.memory_space<vmem>>, vector<1x10xf32>
    %285 = vector.broadcast %284 : vector<1x10xf32> to vector<2x10xf32>
    %286 = arith.addf %283, %285 : vector<2x10xf32>
    %c0_212 = arith.constant 0 : index
    %c0_213 = arith.constant 0 : index
    %287 = vector.load %arg12[%c0_212, %c0_213] : memref<2x10xf32, #tpu.memory_space<vmem>>, vector<2x10xf32>
    tpu.vector_store %arg12[%c0_212, %c0_213], %286 {strides = array<i32>} : memref<2x10xf32, #tpu.memory_space<vmem>>, vector<2x10xf32>,
    return
  }
  func.func @transform_0(%arg0: i32) -> (i32, i32, i32) {
    %c0_i32 = arith.constant 0 : i32
    %c0_i32_0 = arith.constant 0 : i32
    %c0_i32_1 = arith.constant 0 : i32
    %c0_i32_2 = arith.constant 0 : i32
    return %c0_i32, %c0_i32_0, %c0_i32_1 : i32, i32, i32
  }
  func.func @transform_1(%arg0: i32) -> (i32, i32) {
    %c0_i32 = arith.constant 0 : i32
    %c0_i32_0 = arith.constant 0 : i32
    %c0_i32_1 = arith.constant 0 : i32
    return %c0_i32, %c0_i32_0 : i32, i32
  }
  func.func @transform_2(%arg0: i32) -> (i32, i32) {
    %c0_i32 = arith.constant 0 : i32
    %c0_i32_0 = arith.constant 0 : i32
    %c0_i32_1 = arith.constant 0 : i32
    return %c0_i32, %c0_i32_0 : i32, i32
  }
  func.func @transform_3(%arg0: i32) -> (i32, i32) {
    %c0_i32 = arith.constant 0 : i32
    %c0_i32_0 = arith.constant 0 : i32
    %c0_i32_1 = arith.constant 0 : i32
    return %c0_i32, %c0_i32_0 : i32, i32
  }
  func.func @transform_4(%arg0: i32) -> (i32, i32) {
    %c0_i32 = arith.constant 0 : i32
    %c0_i32_0 = arith.constant 0 : i32
    %c0_i32_1 = arith.constant 0 : i32
    return %c0_i32, %c0_i32_0 : i32, i32
  }
  func.func @transform_5(%arg0: i32) -> (i32, i32) {
    %c0_i32 = arith.constant 0 : i32
    %c0_i32_0 = arith.constant 0 : i32
    %c0_i32_1 = arith.constant 0 : i32
    return %c0_i32, %c0_i32_0 : i32, i32
  }
  func.func @transform_6(%arg0: i32) -> (i32, i32) {
    %c0_i32 = arith.constant 0 : i32
    %c0_i32_0 = arith.constant 0 : i32
    %c0_i32_1 = arith.constant 0 : i32
    return %c0_i32, %c0_i32_0 : i32, i32
  }
  func.func @transform_7(%arg0: i32) -> (i32, i32, i32) {
    %c0_i32 = arith.constant 0 : i32
    %c0_i32_0 = arith.constant 0 : i32
    %c0_i32_1 = arith.constant 0 : i32
    %c0_i32_2 = arith.constant 0 : i32
    return %c0_i32, %c0_i32_0, %c0_i32_1 : i32, i32, i32
  }
  func.func @transform_8(%arg0: i32) -> (i32, i32) {
    %c0_i32 = arith.constant 0 : i32
    %c0_i32_0 = arith.constant 0 : i32
    %c0_i32_1 = arith.constant 0 : i32
    return %c0_i32, %c0_i32_0 : i32, i32
  }
  func.func @transform_9(%arg0: i32) -> (i32, i32) {
    %c0_i32 = arith.constant 0 : i32
    %c0_i32_0 = arith.constant 0 : i32
    %c0_i32_1 = arith.constant 0 : i32
    return %c0_i32, %c0_i32_0 : i32, i32
  }
  func.func @transform_10(%arg0: i32) -> (i32, i32) {
    %c0_i32 = arith.constant 0 : i32
    %c0_i32_0 = arith.constant 0 : i32
    %c0_i32_1 = arith.constant 0 : i32
    return %c0_i32, %c0_i32_0 : i32, i32
  }
  func.func @transform_11(%arg0: i32) -> (i32, i32) {
    %c0_i32 = arith.constant 0 : i32
    %c0_i32_0 = arith.constant 0 : i32
    %c0_i32_1 = arith.constant 0 : i32
    return %c0_i32, %c0_i32_0 : i32, i32
  }
}

</mosaic_0001>

<llo_original>
// kernel: tpu_custom_call.1
$region0: #{tpu_custom_call.1}
  #allocation0 [shape = 'u32[]', space=smem, size = 0x4, offset = 0x4, fixed_abs, tag = 'smem constant byte address 0x4 - core index']
  #allocation1 [shape = 'u32[144,128]{1,0:T(1,128)}', space=vmem, size = 0x12000, scoped, tag = 'internal scratch']
  #allocation2 [shape = 'f32[2,18,18]{2,1,0:T(8,128)}', space=vmem, size = 0x6000, scoped, tag = 'scratch operand']
  #allocation3 [shape = 'f32[32,54]{1,0:T(8,128)}', space=vmem, size = 0x4000, scoped, tag = 'scratch operand']
  #allocation4 [shape = 'f32[2,10,160]{2,1,0:T(8,128)}', space=vmem, size = 0x8000, scoped, tag = 'scratch operand']
  #allocation5 [shape = 'f32[16,480]{1,0:T(8,128)}', space=vmem, size = 0x8000, scoped, tag = 'scratch operand']
  #allocation6 [shape = 'f32[4,2,256]{2,1,0:T(2,128)}', space=vmem, size = 0x2000, scoped, tag = 'scratch operand']
  %s0 = inlined_call_operand.vmem [shape: f32[2,16,16], index: 0, kind: input, shape index: {}]
  %s1 = inlined_call_operand.vmem [shape: f32[54,128], index: 1, kind: input, shape index: {}]
  %s2 = inlined_call_operand.vmem [shape: f32[54,128], index: 2, kind: input, shape index: {}]
  %s3 = inlined_call_operand.vmem [shape: f32[1,128], index: 3, kind: input, shape index: {}]
  %s4 = inlined_call_operand.vmem [shape: f32[480,256], index: 4, kind: input, shape index: {}]
  %s5 = inlined_call_operand.vmem [shape: f32[480,256], index: 5, kind: input, shape index: {}]
  %s6 = inlined_call_operand.vmem [shape: f32[1,256], index: 6, kind: input, shape index: {}]
  %s7 = inlined_call_operand.vmem [shape: f32[4,256,1000], index: 7, kind: input, shape index: {}]
  %s8 = inlined_call_operand.vmem [shape: f32[1,1000], index: 8, kind: input, shape index: {}]
  %s9 = inlined_call_operand.vmem [shape: f32[1000,10], index: 9, kind: input, shape index: {}]
  %s10 = inlined_call_operand.vmem [shape: f32[1,10], index: 10, kind: input, shape index: {}]
  %s11 = inlined_call_operand.hbm [shape: f32[2,10], index: 11, kind: output, shape index: {}]
  %s12 = sld [smem:[#allocation0]]
  $region54: #{tpu_custom_call.1} parent=0
    _
  %s14 = ssub.s32 1, %s12
  %s15 = scalar_select 0, %s14, %s12
  $region1: #{tpu_custom_call.1} parent=0
    #allocation7 [shape = 'u8[1024]{0}', space=vmem, size = 0x400, scoped, tag = 'output window, operand 0, single buffered']
    #allocation8 [shape = 's32[1]{0}', space=sflag, size = 0x4, scoped, tag = 'scoped memory for tpu_custom_call.1']
    %16 = vsyncpa [#allocation8], 0
    // Predicated region
    $region2: #{tpu_custom_call.1} parent=1 // pred_check
      _
    $region3: #{tpu_custom_call.1} parent=1 // pred_check_branch
      %18 = sbr.rel (0) target = $region5
    $region4: #{tpu_custom_call.1} parent=1 // pred_region
      _
    $region5: #{tpu_custom_call.1} parent=1 // pred_fallthru
      _
    // Predicated region
    $region6: #{tpu_custom_call.1} parent=1 // pred_check
      _
    $region7: #{tpu_custom_call.1} parent=1 // pred_check_branch
      %20 = sbr.rel (0) target = $region9
    $region8: #{tpu_custom_call.1} parent=1 // pred_region
      _
    $region9: #{tpu_custom_call.1} parent=1 // pred_fallthru
      _
    // Predicated region
    $region10: #{tpu_custom_call.1} parent=1 // pred_check
      _
    $region11: #{tpu_custom_call.1} parent=1 // pred_check_branch
      %22 = sbr.rel (0) target = $region13
    $region12: #{tpu_custom_call.1} parent=1 // pred_region
      _
    $region13: #{tpu_custom_call.1} parent=1 // pred_fallthru
      _
    // Predicated region
    $region14: #{tpu_custom_call.1} parent=1 // pred_check
      _
    $region15: #{tpu_custom_call.1} parent=1 // pred_check_branch
      %24 = sbr.rel (0) target = $region17
    $region16: #{tpu_custom_call.1} parent=1 // pred_region
      _
    $region17: #{tpu_custom_call.1} parent=1 // pred_fallthru
      _
    // Predicated region
    $region18: #{tpu_custom_call.1} parent=1 // pred_check
      _
    $region19: #{tpu_custom_call.1} parent=1 // pred_check_branch
      %26 = sbr.rel (0) target = $region21
    $region20: #{tpu_custom_call.1} parent=1 // pred_region
      _
    $region21: #{tpu_custom_call.1} parent=1 // pred_fallthru
      _
    // Predicated region
    $region22: #{tpu_custom_call.1} parent=1 // pred_check
      _
    $region23: #{tpu_custom_call.1} parent=1 // pred_check_branch
      %28 = sbr.rel (0) target = $region25
    $region24: #{tpu_custom_call.1} parent=1 // pred_region
      _
    $region25: #{tpu_custom_call.1} parent=1 // pred_fallthru
      _
    // Predicated region
    $region26: #{tpu_custom_call.1} parent=1 // pred_check
      _
    $region27: #{tpu_custom_call.1} parent=1 // pred_check_branch
      %30 = sbr.rel (0) target = $region29
    $region28: #{tpu_custom_call.1} parent=1 // pred_region
      _
    $region29: #{tpu_custom_call.1} parent=1 // pred_fallthru
      _
    // Predicated region
    $region30: #{tpu_custom_call.1} parent=1 // pred_check
      _
    $region31: #{tpu_custom_call.1} parent=1 // pred_check_branch
      %32 = sbr.rel (0) target = $region33
    $region32: #{tpu_custom_call.1} parent=1 // pred_region
      _
    $region33: #{tpu_custom_call.1} parent=1 // pred_fallthru
      _
    // Predicated region
    $region34: #{tpu_custom_call.1} parent=1 // pred_check
      _
    $region35: #{tpu_custom_call.1} parent=1 // pred_check_branch
      %34 = sbr.rel (0) target = $region37
    $region36: #{tpu_custom_call.1} parent=1 // pred_region
      _
    $region37: #{tpu_custom_call.1} parent=1 // pred_fallthru
      _
    // Predicated region
    $region38: #{tpu_custom_call.1} parent=1 // pred_check
      _
    $region39: #{tpu_custom_call.1} parent=1 // pred_check_branch
      %36 = sbr.rel (0) target = $region41
    $region40: #{tpu_custom_call.1} parent=1 // pred_region
      _
    $region41: #{tpu_custom_call.1} parent=1 // pred_fallthru
      _
    // Predicated region
    $region42: #{tpu_custom_call.1} parent=1 // pred_check
      _
    $region43: #{tpu_custom_call.1} parent=1 // pred_check_branch
      %38 = sbr.rel (0) target = $region45
    $region44: #{tpu_custom_call.1} parent=1 // pred_region
      _
    $region45: #{tpu_custom_call.1} parent=1 // pred_fallthru
      _
    %vm39 = vcmask 146432
    %40 = vst.msk [vmem:[#allocation2] sm:$0xff] %vm39, 0.0
    %41 = vst.msk [vmem:[#allocation2 + $0x8] sm:$0xff] %vm39, 0.0
    %vm42 = vcmask 140288
    %43 = vst.msk [vmem:[#allocation2 + $0x10] sm:$0x3] %vm42, 0.0
    %44 = vst.msk [vmem:[#allocation2 + $0x18] sm:$0xff] %vm39, 0.0
    %45 = vst.msk [vmem:[#allocation2 + $0x20] sm:$0xff] %vm39, 0.0
    %46 = vst.msk [vmem:[#allocation2 + $0x28] sm:$0x3] %vm42, 0.0
    %v47 = vld [vmem:[%s0] sm:$0xff]
    %v48 = vld [vmem:[%s0 + $0x8] sm:$0xff]
    %v49 = vld [vmem:[%s0 + $0x10] sm:$0xff]
    %v50 = vld [vmem:[%s0 + $0x18] sm:$0xff]
    %55 = vrot.lane.b32.xlu0 %v47, 1
    %v56 = vpop.permute.xlu0 %55
    %57 = vrot.lane.b32.xlu0 %v48, 1
    %v58 = vpop.permute.xlu0 %57
    %59 = vrot.lane.b32.xlu0 %v49, 1
    %v60 = vpop.permute.xlu0 %59
    %61 = vrot.lane.b32.xlu0 %v50, 1
    %v62 = vpop.permute.xlu0 %61
    %vm67 = vcmask 138248
    %68 = vst.msk [vmem:[#allocation2 + $0x1] sm:$0xff] %vm67, %v56
    %69 = vst.msk [vmem:[#allocation2 + $0x9] sm:$0xff] %vm67, %v58
    %70 = vst.msk [vmem:[#allocation2 + $0x19] sm:$0xff] %vm67, %v60
    %71 = vst.msk [vmem:[#allocation2 + $0x21] sm:$0xff] %vm67, %v62
    %v72 = vld [vmem:[#allocation2] sm:$0xff]
    %v73 = vld [vmem:[#allocation2 + $0x8] sm:$0xff]
    %74 = vst.msk [vmem:[#allocation3] sm:$0xff] %vm39, %v72
    %75 = vst.msk [vmem:[#allocation3 + $0x8] sm:$0xff] %vm39, %v73
    %v76 = vld [vmem:[#allocation2 + $0x1] sm:$0xff]
    %v77 = vld [vmem:[#allocation2 + $0x9] sm:$0xff]
    %80 = vrot.lane.b32.xlu0 %v76, 18
    %v81 = vpop.permute.xlu0 %80
    %82 = vrot.lane.b32.xlu0 %v77, 18
    %v83 = vpop.permute.xlu0 %82
    %vm86 = vcmask 294032
    %87 = vst.msk [vmem:[#allocation3] sm:$0xff] %vm86, %v81
    %88 = vst.msk [vmem:[#allocation3 + $0x8] sm:$0xff] %vm86, %v83
    %v89 = vld [vmem:[#allocation2 + $0x2] sm:$0xff]
    %v90 = vld [vmem:[#allocation2 + $0xa] sm:$0xff]
    %93 = vrot.lane.b32.xlu0 %v89, 36
    %v94 = vpop.permute.xlu0 %93
    %95 = vrot.lane.b32.xlu0 %v90, 36
    %v96 = vpop.permute.xlu0 %95
    %vm99 = vcmask 441632
    %100 = vst.msk [vmem:[#allocation3] sm:$0xff] %vm99, %v94
    %101 = vst.msk [vmem:[#allocation3 + $0x8] sm:$0xff] %vm99, %v96
    %s102 = scalar_lea.vmem [#allocation2], 24
    %v103 = vld [vmem:[%s102] sm:$0xff]
    %v104 = vld [vmem:[%s102 + $0x8] sm:$0xff]
    %105 = vst.msk [vmem:[#allocation3 + $0x10] sm:$0xff] %vm39, %v103
    %106 = vst.msk [vmem:[#allocation3 + $0x18] sm:$0xff] %vm39, %v104
    %v107 = vld [vmem:[%s102 + $0x1] sm:$0xff]
    %v108 = vld [vmem:[%s102 + $0x9] sm:$0xff]
    %111 = vrot.lane.b32.xlu0 %v107, 18
    %v112 = vpop.permute.xlu0 %111
    %113 = vrot.lane.b32.xlu0 %v108, 18
    %v114 = vpop.permute.xlu0 %113
    %117 = vst.msk [vmem:[#allocation3 + $0x10] sm:$0xff] %vm86, %v112
    %118 = vst.msk [vmem:[#allocation3 + $0x18] sm:$0xff] %vm86, %v114
    %v119 = vld [vmem:[%s102 + $0x2] sm:$0xff]
    %v120 = vld [vmem:[%s102 + $0xa] sm:$0xff]
    %123 = vrot.lane.b32.xlu0 %v119, 36
    %v124 = vpop.permute.xlu0 %123
    %125 = vrot.lane.b32.xlu0 %v120, 36
    %v126 = vpop.permute.xlu0 %125
    %129 = vst.msk [vmem:[#allocation3 + $0x10] sm:$0xff] %vm99, %v124
    %130 = vst.msk [vmem:[#allocation3 + $0x18] sm:$0xff] %vm99, %v126
    %v131 = vld [vmem:[#allocation3] sm:$0xff]
    %v132 = vld [vmem:[#allocation3 + $0x8] sm:$0xff]
    %v133 = vld [vmem:[#allocation3 + $0x10] sm:$0xff]
    %v134 = vld [vmem:[#allocation3 + $0x18] sm:$0xff]
    %v135 = vld [vmem:[%s1] sm:$0xff]
    %v136 = vld [vmem:[%s1 + $0x8] sm:$0xff]
    %v137 = vld [vmem:[%s1 + $0x10] sm:$0xff]
    %v138 = vld [vmem:[%s1 + $0x18] sm:$0xff]
    %v139 = vld [vmem:[%s1 + $0x20] sm:$0xff]
    %v140 = vld [vmem:[%s1 + $0x28] sm:$0xff]
    %v141 = vld [vmem:[%s1 + $0x30] sm:$0x3f]
    %vm142 = vcmask 441344
    %v144 = vsel %vm142, %v131, 0
    %v147 = vsel %vm142, %v132, 0
    %v150 = vsel %vm142, %v133, 0
    %v153 = vsel %vm142, %v134, 0
    %vm155 = vcmask 1045504
    %v157 = vsel %vm155, %v141, 0
    %159 = vmatprep.subr.mxu0 0.0
    %160 = vmatpush1.msra.mxu0 %v135
    %161 = vmatprep.subr.mxu0 0.0
    %162 = vmatpush1.msra.mxu0 %v136
    %163 = vmatprep.subr.mxu0 0.0
    %164 = vmatpush1.msra.mxu0 %v137
    %165 = vmatprep.subr.mxu0 0.0
    %166 = vmatpush1.msra.mxu0 %v138
    %167 = vmatprep.subr.mxu0 0.0
    %168 = vmatpush1.msra.mxu0 %v139
    %169 = vmatprep.subr.mxu0 0.0
    %170 = vmatpush1.msra.mxu0 %v140
    %171 = vmatprep.subr.mxu0 0.0
    %172 = vmatpush1.msra.mxu0 %v157
    %173 = vmatprep.subr.mxu0 0.0
    %174 = vmatpush1.msra.mxu0 0.0
    %175 = vmatprep.subr.mxu0 0.0
    %176 = vmatpush1.msra.mxu0 0.0
    %177 = vmatprep.subr.mxu0 0.0
    %178 = vmatpush1.msra.mxu0 0.0
    %179 = vmatprep.subr.mxu0 0.0
    %180 = vmatpush1.msra.mxu0 0.0
    %181 = vmatprep.subr.mxu0 0.0
    %182 = vmatpush1.msra.mxu0 0.0
    %183 = vmatprep.subr.mxu0 0.0
    %184 = vmatpush1.msra.mxu0 0.0
    %185 = vmatprep.subr.mxu0 0.0
    %186 = vmatpush1.msra.mxu0 0.0
    %187 = vmatprep.subr.mxu0 0.0
    %188 = vmatpush1.msra.mxu0 0.0
    %189 = vmatprep.subr.mxu0 0.0
    %190 = vmatpush1.msra.mxu0 0.0
    %191 = vmatprep.subr.mxu0 0.0
    %192 = vmatpush1.msra.mxu0 0.0
    %193 = vmatprep.subr.mxu0 0.0
    %194 = vmatpush1.msra.mxu0 0.0
    %195 = vmatprep.subr.mxu0 0.0
    %196 = vmatpush1.msra.mxu0 0.0
    %197 = vmatprep.subr.mxu0 0.0
    %198 = vmatpush1.msra.mxu0 0.0
    %199 = vmatprep.subr.mxu0 0.0
    %200 = vmatpush1.msra.mxu0 0.0
    %201 = vmatprep.subr.mxu0 0.0
    %202 = vmatpush1.msra.mxu0 0.0
    %203 = vmatprep.subr.mxu0 0.0
    %204 = vmatpush1.msra.mxu0 0.0
    %205 = vmatprep.subr.mxu0 0.0
    %206 = vmatpush1.msra.mxu0 0.0
    %207 = vmatprep.subr.mxu0 0.0
    %208 = vmatpush1.msra.mxu0 0.0
    %209 = vmatprep.subr.mxu0 0.0
    %210 = vmatpush1.msra.mxu0 0.0
    %211 = vmatprep.subr.mxu0 0.0
    %212 = vmatpush1.msra.mxu0 0.0
    %213 = vmatprep.subr.mxu0 0.0
    %214 = vmatpush1.msra.mxu0 0.0
    %215 = vmatprep.subr.mxu0 0.0
    %216 = vmatpush1.msra.mxu0 0.0
    %217 = vmatprep.subr.mxu0 0.0
    %218 = vmatpush1.msra.mxu0 0.0
    %219 = vmatprep.subr.mxu0 0.0
    %220 = vmatpush1.msra.mxu0 0.0
    %221 = vmatprep.subr.mxu0 0.0
    %222 = vmatpush1.msra.mxu0 0.0
    %223 = vmatprep.mubr.f32.mxu0 0.0
    %224 = vmatmul.mubr.f32.gmra.mrb[0].mxu0 %v144
    %v225 = vpop.f32.mrb[0].mxu0
    %v226 = vadd.f32 0.0, %v225
    %v227 = vpop.f32.mrb[0].mxu0
    %228 = vmatprep.mubr.f32.mxu0 0.0
    %229 = vmatmul.mubr.f32.gmra.mrb[0].mxu0 %v147
    %v230 = vpop.f32.mrb[0].mxu0
    %v231 = vadd.f32 0.0, %v230
    %v232 = vpop.f32.mrb[0].mxu0
    %233 = vmatprep.mubr.f32.mxu0 0.0
    %234 = vmatmul.mubr.f32.gmra.mrb[0].mxu0 %v150
    %v235 = vpop.f32.mrb[0].mxu0
    %v236 = vadd.f32 0.0, %v235
    %v237 = vpop.f32.mrb[0].mxu0
    %238 = vmatprep.mubr.f32.mxu0 0.0
    %239 = vmatmul.mubr.f32.gmra.mrb[0].mxu0 %v153
    %v240 = vpop.f32.mrb[0].mxu0
    %v241 = vadd.f32 0.0, %v240
    %v242 = vpop.f32.mrb[0].mxu0
    %243 = vdwg.mxu0
    %v244 = vld [vmem:[%s2] sm:$0xff]
    %v245 = vld [vmem:[%s2 + $0x8] sm:$0xff]
    %v246 = vld [vmem:[%s2 + $0x10] sm:$0xff]
    %v247 = vld [vmem:[%s2 + $0x18] sm:$0xff]
    %v248 = vld [vmem:[%s2 + $0x20] sm:$0xff]
    %v249 = vld [vmem:[%s2 + $0x28] sm:$0xff]
    %v250 = vld [vmem:[%s2 + $0x30] sm:$0x3f]
    %v252 = vsel %vm155, %v250, 0
    %254 = vmatprep.subr.mxu0 0.0
    %255 = vmatpush1.msra.mxu0 %v244
    %256 = vmatprep.subr.mxu0 0.0
    %257 = vmatpush1.msra.mxu0 %v245
    %258 = vmatprep.subr.mxu0 0.0
    %259 = vmatpush1.msra.mxu0 %v246
    %260 = vmatprep.subr.mxu0 0.0
    %261 = vmatpush1.msra.mxu0 %v247
    %262 = vmatprep.subr.mxu0 0.0
    %263 = vmatpush1.msra.mxu0 %v248
    %264 = vmatprep.subr.mxu0 0.0
    %265 = vmatpush1.msra.mxu0 %v249
    %266 = vmatprep.subr.mxu0 0.0
    %267 = vmatpush1.msra.mxu0 %v252
    %268 = vmatprep.subr.mxu0 0.0
    %269 = vmatpush1.msra.mxu0 0.0
    %270 = vmatprep.subr.mxu0 0.0
    %271 = vmatpush1.msra.mxu0 0.0
    %272 = vmatprep.subr.mxu0 0.0
    %273 = vmatpush1.msra.mxu0 0.0
    %274 = vmatprep.subr.mxu0 0.0
    %275 = vmatpush1.msra.mxu0 0.0
    %276 = vmatprep.subr.mxu0 0.0
    %277 = vmatpush1.msra.mxu0 0.0
    %278 = vmatprep.subr.mxu0 0.0
    %279 = vmatpush1.msra.mxu0 0.0
    %280 = vmatprep.subr.mxu0 0.0
    %281 = vmatpush1.msra.mxu0 0.0
    %282 = vmatprep.subr.mxu0 0.0
    %283 = vmatpush1.msra.mxu0 0.0
    %284 = vmatprep.subr.mxu0 0.0
    %285 = vmatpush1.msra.mxu0 0.0
    %286 = vmatprep.subr.mxu0 0.0
    %287 = vmatpush1.msra.mxu0 0.0
    %288 = vmatprep.subr.mxu0 0.0
    %289 = vmatpush1.msra.mxu0 0.0
    %290 = vmatprep.subr.mxu0 0.0
    %291 = vmatpush1.msra.mxu0 0.0
    %292 = vmatprep.subr.mxu0 0.0
    %293 = vmatpush1.msra.mxu0 0.0
    %294 = vmatprep.subr.mxu0 0.0
    %295 = vmatpush1.msra.mxu0 0.0
    %296 = vmatprep.subr.mxu0 0.0
    %297 = vmatpush1.msra.mxu0 0.0
    %298 = vmatprep.subr.mxu0 0.0
    %299 = vmatpush1.msra.mxu0 0.0
    %300 = vmatprep.subr.mxu0 0.0
    %301 = vmatpush1.msra.mxu0 0.0
    %302 = vmatprep.subr.mxu0 0.0
    %303 = vmatpush1.msra.mxu0 0.0
    %304 = vmatprep.subr.mxu0 0.0
    %305 = vmatpush1.msra.mxu0 0.0
    %306 = vmatprep.subr.mxu0 0.0
    %307 = vmatpush1.msra.mxu0 0.0
    %308 = vmatprep.subr.mxu0 0.0
    %309 = vmatpush1.msra.mxu0 0.0
    %310 = vmatprep.subr.mxu0 0.0
    %311 = vmatpush1.msra.mxu0 0.0
    %312 = vmatprep.subr.mxu0 0.0
    %313 = vmatpush1.msra.mxu0 0.0
    %314 = vmatprep.subr.mxu0 0.0
    %315 = vmatpush1.msra.mxu0 0.0
    %316 = vmatprep.subr.mxu0 0.0
    %317 = vmatpush1.msra.mxu0 0.0
    %318 = vmatprep.mubr.f32.mxu0 0.0
    %319 = vmatmul.mubr.f32.gmra.mrb[0].mxu0 %v144
    %v320 = vpop.f32.mrb[0].mxu0
    %v321 = vadd.f32 0.0, %v320
    %v322 = vpop.f32.mrb[0].mxu0
    %323 = vmatprep.mubr.f32.mxu0 0.0
    %324 = vmatmul.mubr.f32.gmra.mrb[0].mxu0 %v147
    %v325 = vpop.f32.mrb[0].mxu0
    %v326 = vadd.f32 0.0, %v325
    %v327 = vpop.f32.mrb[0].mxu0
    %328 = vmatprep.mubr.f32.mxu0 0.0
    %329 = vmatmul.mubr.f32.gmra.mrb[0].mxu0 %v150
    %v330 = vpop.f32.mrb[0].mxu0
    %v331 = vadd.f32 0.0, %v330
    %v332 = vpop.f32.mrb[0].mxu0
    %333 = vmatprep.mubr.f32.mxu0 0.0
    %334 = vmatmul.mubr.f32.gmra.mrb[0].mxu0 %v153
    %v335 = vpop.f32.mrb[0].mxu0
    %v336 = vadd.f32 0.0, %v335
    %v337 = vpop.f32.mrb[0].mxu0
    %338 = vdwg.mxu0
    %v339 = vmax.f32 %v226, %v321
    %v340 = vmax.f32 %v231, %v326
    %v341 = vmax.f32 %v236, %v331
    %v342 = vmax.f32 %v241, %v336
    %v343 = vld [vmem:[%s3] sm:$0x1]
    %v345 = vlaneseq
    %v346 = vshrl.u32 %v345, 7
    %v347 = vsub.s32 0, %v346
    %v348 = vrot.slane %v343, %v347
    %v350 = vadd.f32 %v339, %v348
    %v351 = vadd.f32 %v340, %v348
    %v352 = vadd.f32 %v341, %v348
    %v353 = vadd.f32 %v342, %v348
    %354 = vst [vmem:[#allocation4] sm:$0xff] 0.0
    %vm355 = vcmask 261120
    %356 = vst.msk [vmem:[#allocation4 + $0x8] sm:$0xff] %vm355, 0.0
    %357 = vst [vmem:[#allocation4 + $0x10] sm:$0x3] 0.0
    %vm358 = vcmask 254976
    %359 = vst.msk [vmem:[#allocation4 + $0x18] sm:$0x3] %vm358, 0.0
    %360 = vst [vmem:[#allocation4 + $0x20] sm:$0xff] 0.0
    %361 = vst.msk [vmem:[#allocation4 + $0x28] sm:$0xff] %vm355, 0.0
    %362 = vst [vmem:[#allocation4 + $0x30] sm:$0x3] 0.0
    %363 = vst.msk [vmem:[#allocation4 + $0x38] sm:$0x3] %vm358, 0.0
    %v365 = vrot.slane %v350, 1
    %v367 = vmax.f32 %v350, %v365
    %v368 = vmax.f32 %v367, 0.0
    %370 = vrot.lane.b32.xlu0 %v368, 16
    %v371 = vpop.permute.xlu0 %370
    %vm373 = vcmask 1040512
    %374 = vst.msk [vmem:[#allocation4 + $0x1] sm:$0x1] %vm373, %v371
    %vm375 = vcmask 122880
    %376 = vst.msk [vmem:[#allocation4 + $0x9] sm:$0x1] %vm375, %v371
    %v377 = vrot.slane %v368, 2
    %378 = vrot.lane.b32.xlu0 %v377, 16
    %v379 = vpop.permute.xlu0 %378
    %381 = vst.msk [vmem:[#allocation4 + $0x2] sm:$0x1] %vm373, %v379
    %382 = vst.msk [vmem:[#allocation4 + $0xa] sm:$0x1] %vm375, %v379
    %v383 = vrot.slane %v368, 4
    %384 = vrot.lane.b32.xlu0 %v383, 16
    %v385 = vpop.permute.xlu0 %384
    %387 = vst.msk [vmem:[#allocation4 + $0x3] sm:$0x1] %vm373, %v385
    %388 = vst.msk [vmem:[#allocation4 + $0xb] sm:$0x1] %vm375, %v385
    %v389 = vrot.slane %v368, 6
    %390 = vrot.lane.b32.xlu0 %v389, 16
    %v391 = vpop.permute.xlu0 %390
    %393 = vst.msk [vmem:[#allocation4 + $0x4] sm:$0x1] %vm373, %v391
    %394 = vst.msk [vmem:[#allocation4 + $0xc] sm:$0x1] %vm375, %v391
    %v396 = vrot.slane %v351, 1
    %v398 = vmax.f32 %v351, %v396
    %v399 = vmax.f32 %v398, 0.0
    %401 = vrot.lane.b32.xlu0 %v399, 16
    %v402 = vpop.permute.xlu0 %401
    %404 = vst.msk [vmem:[#allocation4 + $0x5] sm:$0x1] %vm373, %v402
    %405 = vst.msk [vmem:[#allocation4 + $0xd] sm:$0x1] %vm375, %v402
    %v406 = vrot.slane %v399, 2
    %407 = vrot.lane.b32.xlu0 %v406, 16
    %v408 = vpop.permute.xlu0 %407
    %410 = vst.msk [vmem:[#allocation4 + $0x6] sm:$0x1] %vm373, %v408
    %411 = vst.msk [vmem:[#allocation4 + $0xe] sm:$0x1] %vm375, %v408
    %v412 = vrot.slane %v399, 4
    %413 = vrot.lane.b32.xlu0 %v412, 16
    %v414 = vpop.permute.xlu0 %413
    %416 = vst.msk [vmem:[#allocation4 + $0x7] sm:$0x1] %vm373, %v414
    %417 = vst.msk [vmem:[#allocation4 + $0xf] sm:$0x1] %vm375, %v414
    %v418 = vrot.slane %v399, 6
    %419 = vrot.lane.b32.xlu0 %v418, 16
    %v420 = vpop.permute.xlu0 %419
    %422 = vst.msk [vmem:[#allocation4 + $0x10] sm:$0x1] %vm373, %v420
    %423 = vst.msk [vmem:[#allocation4 + $0x18] sm:$0x1] %vm375, %v420
    %v425 = vrot.slane %v352, 1
    %v427 = vmax.f32 %v352, %v425
    %v428 = vmax.f32 %v427, 0.0
    %430 = vrot.lane.b32.xlu0 %v428, 16
    %v431 = vpop.permute.xlu0 %430
    %s433 = scalar_lea.vmem [#allocation4], 32
    %434 = vst.msk [vmem:[%s433 + $0x1] sm:$0x1] %vm373, %v431
    %435 = vst.msk [vmem:[%s433 + $0x9] sm:$0x1] %vm375, %v431
    %v436 = vrot.slane %v428, 2
    %437 = vrot.lane.b32.xlu0 %v436, 16
    %v438 = vpop.permute.xlu0 %437
    %440 = vst.msk [vmem:[%s433 + $0x2] sm:$0x1] %vm373, %v438
    %441 = vst.msk [vmem:[%s433 + $0xa] sm:$0x1] %vm375, %v438
    %v442 = vrot.slane %v428, 4
    %443 = vrot.lane.b32.xlu0 %v442, 16
    %v444 = vpop.permute.xlu0 %443
    %446 = vst.msk [vmem:[%s433 + $0x3] sm:$0x1] %vm373, %v444
    %447 = vst.msk [vmem:[%s433 + $0xb] sm:$0x1] %vm375, %v444
    %v448 = vrot.slane %v428, 6
    %449 = vrot.lane.b32.xlu0 %v448, 16
    %v450 = vpop.permute.xlu0 %449
    %452 = vst.msk [vmem:[%s433 + $0x4] sm:$0x1] %vm373, %v450
    %453 = vst.msk [vmem:[%s433 + $0xc] sm:$0x1] %vm375, %v450
    %v455 = vrot.slane %v353, 1
    %v457 = vmax.f32 %v353, %v455
    %v458 = vmax.f32 %v457, 0.0
    %460 = vrot.lane.b32.xlu0 %v458, 16
    %v461 = vpop.permute.xlu0 %460
    %463 = vst.msk [vmem:[%s433 + $0x5] sm:$0x1] %vm373, %v461
    %464 = vst.msk [vmem:[%s433 + $0xd] sm:$0x1] %vm375, %v461
    %v465 = vrot.slane %v458, 2
    %466 = vrot.lane.b32.xlu0 %v465, 16
    %v467 = vpop.permute.xlu0 %466
    %469 = vst.msk [vmem:[%s433 + $0x6] sm:$0x1] %vm373, %v467
    %470 = vst.msk [vmem:[%s433 + $0xe] sm:$0x1] %vm375, %v467
    %v471 = vrot.slane %v458, 4
    %472 = vrot.lane.b32.xlu0 %v471, 16
    %v473 = vpop.permute.xlu0 %472
    %475 = vst.msk [vmem:[%s433 + $0x7] sm:$0x1] %vm373, %v473
    %476 = vst.msk [vmem:[%s433 + $0xf] sm:$0x1] %vm375, %v473
    %v477 = vrot.slane %v458, 6
    %478 = vrot.lane.b32.xlu0 %v477, 16
    %v479 = vpop.permute.xlu0 %478
    %481 = vst.msk [vmem:[%s433 + $0x10] sm:$0x1] %vm373, %v479
    %482 = vst.msk [vmem:[%s433 + $0x18] sm:$0x1] %vm375, %v479
    %v483 = vld [vmem:[#allocation4] sm:$0xff]
    %v484 = vld [vmem:[#allocation4 + $0x8] sm:$0xff]
    %485 = vst [vmem:[#allocation5] sm:$0xff] %v483
    %486 = vst.msk [vmem:[#allocation5 + $0x8] sm:$0xff] %vm355, %v484
    %v487 = vld [vmem:[#allocation4] sm:$0xfe]
    %v488 = vld [vmem:[#allocation4 + $0x8] sm:$0xfe]
    %v489 = vld [vmem:[#allocation4 + $0x10] sm:$0x1]
    %v490 = vld [vmem:[#allocation4 + $0x18] sm:$0x1]
    %vm495 = vcmask 1046528
    %v496 = vrot.slane %v487, 1
    %v497 = vrot.slane %v489, 1
    %v498 = vsel %vm495, %v496, %v497
    %v499 = vrot.slane %v488, 1
    %v500 = vrot.slane %v490, 1
    %v501 = vsel %vm495, %v499, %v500
    %502 = vrot.lane.b32.xlu0 %v498, 32
    %v503 = vpop.permute.xlu0 %502
    %504 = vrot.lane.b32.xlu0 %v501, 32
    %v505 = vpop.permute.xlu0 %504
    %v506 = vsel %vm355, %v503, %v505
    %vm509 = vcmask 1047808
    %510 = vst.msk [vmem:[#allocation5 + $0x8] sm:$0xff] %vm509, %v503
    %vm511 = vcmask 523264
    %512 = vst.msk [vmem:[#allocation5 + $0x10] sm:$0xff] %vm511, %v506
    %v513 = vld [vmem:[#allocation4] sm:$0xfc]
    %v514 = vld [vmem:[#allocation4 + $0x8] sm:$0xfc]
    %v515 = vld [vmem:[#allocation4 + $0x10] sm:$0x3]
    %v516 = vld [vmem:[#allocation4 + $0x18] sm:$0x3]
    %v521 = vrot.slane %v513, 2
    %v522 = vrot.slane %v515, 2
    %v523 = vsel %vm155, %v521, %v522
    %v524 = vrot.slane %v514, 2
    %v525 = vrot.slane %v516, 2
    %v526 = vsel %vm155, %v524, %v525
    %527 = vrot.lane.b32.xlu0 %v523, 64
    %v528 = vpop.permute.xlu0 %527
    %529 = vrot.lane.b32.xlu0 %v526, 64
    %v530 = vpop.permute.xlu0 %529
    %v531 = vsel %vm511, %v528, %v530
    %vm534 = vcmask 1048064
    %535 = vst.msk [vmem:[#allocation5 + $0x10] sm:$0xff] %vm534, %v528
    %vm536 = vcmask 785408
    %537 = vst.msk [vmem:[#allocation5 + $0x18] sm:$0xff] %vm536, %v531
    %v538 = vld [vmem:[%s433] sm:$0xff]
    %v539 = vld [vmem:[%s433 + $0x8] sm:$0xff]
    %540 = vst [vmem:[#allocation5 + $0x20] sm:$0xff] %v538
    %541 = vst.msk [vmem:[#allocation5 + $0x28] sm:$0xff] %vm355, %v539
    %v542 = vld [vmem:[%s433] sm:$0xfe]
    %v543 = vld [vmem:[%s433 + $0x8] sm:$0xfe]
    %v544 = vld [vmem:[%s433 + $0x10] sm:$0x1]
    %v545 = vld [vmem:[%s433 + $0x18] sm:$0x1]
    %v550 = vrot.slane %v542, 1
    %v551 = vrot.slane %v544, 1
    %v552 = vsel %vm495, %v550, %v551
    %v553 = vrot.slane %v543, 1
    %v554 = vrot.slane %v545, 1
    %v555 = vsel %vm495, %v553, %v554
    %556 = vrot.lane.b32.xlu0 %v552, 32
    %v557 = vpop.permute.xlu0 %556
    %558 = vrot.lane.b32.xlu0 %v555, 32
    %v559 = vpop.permute.xlu0 %558
    %v560 = vsel %vm355, %v557, %v559
    %563 = vst.msk [vmem:[#allocation5 + $0x28] sm:$0xff] %vm509, %v557
    %564 = vst.msk [vmem:[#allocation5 + $0x30] sm:$0xff] %vm511, %v560
    %v565 = vld [vmem:[%s433] sm:$0xfc]
    %v566 = vld [vmem:[%s433 + $0x8] sm:$0xfc]
    %v567 = vld [vmem:[%s433 + $0x10] sm:$0x3]
    %v568 = vld [vmem:[%s433 + $0x18] sm:$0x3]
    %v573 = vrot.slane %v565, 2
    %v574 = vrot.slane %v567, 2
    %v575 = vsel %vm155, %v573, %v574
    %v576 = vrot.slane %v566, 2
    %v577 = vrot.slane %v568, 2
    %v578 = vsel %vm155, %v576, %v577
    %579 = vrot.lane.b32.xlu0 %v575, 64
    %v580 = vpop.permute.xlu0 %579
    %581 = vrot.lane.b32.xlu0 %v578, 64
    %v582 = vpop.permute.xlu0 %581
    %v583 = vsel %vm511, %v580, %v582
    %586 = vst.msk [vmem:[#allocation5 + $0x30] sm:$0xff] %vm534, %v580
    %587 = vst.msk [vmem:[#allocation5 + $0x38] sm:$0xff] %vm536, %v583
    %v588 = vld [vmem:[#allocation5] sm:$0xff]
    %v589 = vld [vmem:[#allocation5 + $0x8] sm:$0xff]
    %v590 = vld [vmem:[#allocation5 + $0x10] sm:$0xff]
    %v591 = vld [vmem:[#allocation5 + $0x18] sm:$0xff]
    %v592 = vld [vmem:[#allocation5 + $0x20] sm:$0xff]
    %v593 = vld [vmem:[#allocation5 + $0x28] sm:$0xff]
    %v594 = vld [vmem:[#allocation5 + $0x30] sm:$0xff]
    %v595 = vld [vmem:[#allocation5 + $0x38] sm:$0xff]
    %v596 = vld [vmem:[%s4] sm:$0xff]
    %v597 = vld [vmem:[%s4 + $0x8] sm:$0xff]
    %v598 = vld [vmem:[%s4 + $0x10] sm:$0xff]
    %v599 = vld [vmem:[%s4 + $0x18] sm:$0xff]
    %v600 = vld [vmem:[%s4 + $0x20] sm:$0xff]
    %v601 = vld [vmem:[%s4 + $0x28] sm:$0xff]
    %v602 = vld [vmem:[%s4 + $0x30] sm:$0xff]
    %v603 = vld [vmem:[%s4 + $0x38] sm:$0xff]
    %v604 = vld [vmem:[%s4 + $0x40] sm:$0xff]
    %v605 = vld [vmem:[%s4 + $0x48] sm:$0xff]
    %v606 = vld [vmem:[%s4 + $0x50] sm:$0xff]
    %v607 = vld [vmem:[%s4 + $0x58] sm:$0xff]
    %v608 = vld [vmem:[%s4 + $0x60] sm:$0xff]
    %v609 = vld [vmem:[%s4 + $0x68] sm:$0xff]
    %v610 = vld [vmem:[%s4 + $0x70] sm:$0xff]
    %v611 = vld [vmem:[%s4 + $0x78] sm:$0xff]
    %v612 = vld [vmem:[%s4 + $0x80] sm:$0xff]
    %v613 = vld [vmem:[%s4 + $0x88] sm:$0xff]
    %v614 = vld [vmem:[%s4 + $0x90] sm:$0xff]
    %v615 = vld [vmem:[%s4 + $0x98] sm:$0xff]
    %v616 = vld [vmem:[%s4 + $0xa0] sm:$0xff]
    %v617 = vld [vmem:[%s4 + $0xa8] sm:$0xff]
    %v618 = vld [vmem:[%s4 + $0xb0] sm:$0xff]
    %v619 = vld [vmem:[%s4 + $0xb8] sm:$0xff]
    %v620 = vld [vmem:[%s4 + $0xc0] sm:$0xff]
    %v621 = vld [vmem:[%s4 + $0xc8] sm:$0xff]
    %v622 = vld [vmem:[%s4 + $0xd0] sm:$0xff]
    %v623 = vld [vmem:[%s4 + $0xd8] sm:$0xff]
    %v624 = vld [vmem:[%s4 + $0xe0] sm:$0xff]
    %v625 = vld [vmem:[%s4 + $0xe8] sm:$0xff]
    %v626 = vld [vmem:[%s4 + $0xf0] sm:$0xff]
    %v627 = vld [vmem:[%s4 + $0xf8] sm:$0xff]
    %v628 = vld [vmem:[%s4 + $0x100] sm:$0xff]
    %v629 = vld [vmem:[%s4 + $0x108] sm:$0xff]
    %v630 = vld [vmem:[%s4 + $0x110] sm:$0xff]
    %v631 = vld [vmem:[%s4 + $0x118] sm:$0xff]
    %v632 = vld [vmem:[%s4 + $0x120] sm:$0xff]
    %v633 = vld [vmem:[%s4 + $0x128] sm:$0xff]
    %v634 = vld [vmem:[%s4 + $0x130] sm:$0xff]
    %v635 = vld [vmem:[%s4 + $0x138] sm:$0xff]
    %v636 = vld [vmem:[%s4 + $0x140] sm:$0xff]
    %v637 = vld [vmem:[%s4 + $0x148] sm:$0xff]
    %v638 = vld [vmem:[%s4 + $0x150] sm:$0xff]
    %v639 = vld [vmem:[%s4 + $0x158] sm:$0xff]
    %v640 = vld [vmem:[%s4 + $0x160] sm:$0xff]
    %v641 = vld [vmem:[%s4 + $0x168] sm:$0xff]
    %v642 = vld [vmem:[%s4 + $0x170] sm:$0xff]
    %v643 = vld [vmem:[%s4 + $0x178] sm:$0xff]
    %v644 = vld [vmem:[%s4 + $0x180] sm:$0xff]
    %v645 = vld [vmem:[%s4 + $0x188] sm:$0xff]
    %v646 = vld [vmem:[%s4 + $0x190] sm:$0xff]
    %v647 = vld [vmem:[%s4 + $0x198] sm:$0xff]
    %v648 = vld [vmem:[%s4 + $0x1a0] sm:$0xff]
    %v649 = vld [vmem:[%s4 + $0x1a8] sm:$0xff]
    %v650 = vld [vmem:[%s4 + $0x1b0] sm:$0xff]
    %v651 = vld [vmem:[%s4 + $0x1b8] sm:$0xff]
    %v652 = vld [vmem:[%s4 + $0x1c0] sm:$0xff]
    %v653 = vld [vmem:[%s4 + $0x1c8] sm:$0xff]
    %v654 = vld [vmem:[%s4 + $0x1d0] sm:$0xff]
    %v655 = vld [vmem:[%s4 + $0x1d8] sm:$0xff]
    %v656 = vld [vmem:[%s4 + $0x1e0] sm:$0xff]
    %v657 = vld [vmem:[%s4 + $0x1e8] sm:$0xff]
    %v658 = vld [vmem:[%s4 + $0x1f0] sm:$0xff]
    %v659 = vld [vmem:[%s4 + $0x1f8] sm:$0xff]
    %v660 = vld [vmem:[%s4 + $0x200] sm:$0xff]
    %v661 = vld [vmem:[%s4 + $0x208] sm:$0xff]
    %v662 = vld [vmem:[%s4 + $0x210] sm:$0xff]
    %v663 = vld [vmem:[%s4 + $0x218] sm:$0xff]
    %v664 = vld [vmem:[%s4 + $0x220] sm:$0xff]
    %v665 = vld [vmem:[%s4 + $0x228] sm:$0xff]
    %v666 = vld [vmem:[%s4 + $0x230] sm:$0xff]
    %v667 = vld [vmem:[%s4 + $0x238] sm:$0xff]
    %v668 = vld [vmem:[%s4 + $0x240] sm:$0xff]
    %v669 = vld [vmem:[%s4 + $0x248] sm:$0xff]
    %v670 = vld [vmem:[%s4 + $0x250] sm:$0xff]
    %v671 = vld [vmem:[%s4 + $0x258] sm:$0xff]
    %v672 = vld [vmem:[%s4 + $0x260] sm:$0xff]
    %v673 = vld [vmem:[%s4 + $0x268] sm:$0xff]
    %v674 = vld [vmem:[%s4 + $0x270] sm:$0xff]
    %v675 = vld [vmem:[%s4 + $0x278] sm:$0xff]
    %v676 = vld [vmem:[%s4 + $0x280] sm:$0xff]
    %v677 = vld [vmem:[%s4 + $0x288] sm:$0xff]
    %v678 = vld [vmem:[%s4 + $0x290] sm:$0xff]
    %v679 = vld [vmem:[%s4 + $0x298] sm:$0xff]
    %v680 = vld [vmem:[%s4 + $0x2a0] sm:$0xff]
    %v681 = vld [vmem:[%s4 + $0x2a8] sm:$0xff]
    %v682 = vld [vmem:[%s4 + $0x2b0] sm:$0xff]
    %v683 = vld [vmem:[%s4 + $0x2b8] sm:$0xff]
    %v684 = vld [vmem:[%s4 + $0x2c0] sm:$0xff]
    %v685 = vld [vmem:[%s4 + $0x2c8] sm:$0xff]
    %v686 = vld [vmem:[%s4 + $0x2d0] sm:$0xff]
    %v687 = vld [vmem:[%s4 + $0x2d8] sm:$0xff]
    %v688 = vld [vmem:[%s4 + $0x2e0] sm:$0xff]
    %v689 = vld [vmem:[%s4 + $0x2e8] sm:$0xff]
    %v690 = vld [vmem:[%s4 + $0x2f0] sm:$0xff]
    %v691 = vld [vmem:[%s4 + $0x2f8] sm:$0xff]
    %v692 = vld [vmem:[%s4 + $0x300] sm:$0xff]
    %v693 = vld [vmem:[%s4 + $0x308] sm:$0xff]
    %v694 = vld [vmem:[%s4 + $0x310] sm:$0xff]
    %v695 = vld [vmem:[%s4 + $0x318] sm:$0xff]
    %v696 = vld [vmem:[%s4 + $0x320] sm:$0xff]
    %v697 = vld [vmem:[%s4 + $0x328] sm:$0xff]
    %v698 = vld [vmem:[%s4 + $0x330] sm:$0xff]
    %v699 = vld [vmem:[%s4 + $0x338] sm:$0xff]
    %v700 = vld [vmem:[%s4 + $0x340] sm:$0xff]
    %v701 = vld [vmem:[%s4 + $0x348] sm:$0xff]
    %v702 = vld [vmem:[%s4 + $0x350] sm:$0xff]
    %v703 = vld [vmem:[%s4 + $0x358] sm:$0xff]
    %v704 = vld [vmem:[%s4 + $0x360] sm:$0xff]
    %v705 = vld [vmem:[%s4 + $0x368] sm:$0xff]
    %v706 = vld [vmem:[%s4 + $0x370] sm:$0xff]
    %v707 = vld [vmem:[%s4 + $0x378] sm:$0xff]
    %v708 = vld [vmem:[%s4 + $0x380] sm:$0xff]
    %v709 = vld [vmem:[%s4 + $0x388] sm:$0xff]
    %v710 = vld [vmem:[%s4 + $0x390] sm:$0xff]
    %v711 = vld [vmem:[%s4 + $0x398] sm:$0xff]
    %v712 = vld [vmem:[%s4 + $0x3a0] sm:$0xff]
    %v713 = vld [vmem:[%s4 + $0x3a8] sm:$0xff]
    %v714 = vld [vmem:[%s4 + $0x3b0] sm:$0xff]
    %v715 = vld [vmem:[%s4 + $0x3b8] sm:$0xff]
    %v717 = vsel %vm536, %v591, 0
    %v720 = vsel %vm536, %v595, 0
    %722 = vmatprep.subr.mxu0 %v597
    %723 = vmatpush1.msra.mxu0 %v596
    %724 = vmatprep.subr.mxu0 %v599
    %725 = vmatpush1.msra.mxu0 %v598
    %726 = vmatprep.subr.mxu0 %v601
    %727 = vmatpush1.msra.mxu0 %v600
    %728 = vmatprep.subr.mxu0 %v603
    %729 = vmatpush1.msra.mxu0 %v602
    %730 = vmatprep.subr.mxu0 %v605
    %731 = vmatpush1.msra.mxu0 %v604
    %732 = vmatprep.subr.mxu0 %v607
    %733 = vmatpush1.msra.mxu0 %v606
    %734 = vmatprep.subr.mxu0 %v609
    %735 = vmatpush1.msra.mxu0 %v608
    %736 = vmatprep.subr.mxu0 %v611
    %737 = vmatpush1.msra.mxu0 %v610
    %738 = vmatprep.subr.mxu0 %v613
    %739 = vmatpush1.msra.mxu0 %v612
    %740 = vmatprep.subr.mxu0 %v615
    %741 = vmatpush1.msra.mxu0 %v614
    %742 = vmatprep.subr.mxu0 %v617
    %743 = vmatpush1.msra.mxu0 %v616
    %744 = vmatprep.subr.mxu0 %v619
    %745 = vmatpush1.msra.mxu0 %v618
    %746 = vmatprep.subr.mxu0 %v621
    %747 = vmatpush1.msra.mxu0 %v620
    %748 = vmatprep.subr.mxu0 %v623
    %749 = vmatpush1.msra.mxu0 %v622
    %750 = vmatprep.subr.mxu0 %v625
    %751 = vmatpush1.msra.mxu0 %v624
    %752 = vmatprep.subr.mxu0 %v627
    %753 = vmatpush1.msra.mxu0 %v626
    %754 = vmatprep.subr.mxu0 %v629
    %755 = vmatpush1.msra.mxu0 %v628
    %756 = vmatprep.subr.mxu0 %v631
    %757 = vmatpush1.msra.mxu0 %v630
    %758 = vmatprep.subr.mxu0 %v633
    %759 = vmatpush1.msra.mxu0 %v632
    %760 = vmatprep.subr.mxu0 %v635
    %761 = vmatpush1.msra.mxu0 %v634
    %762 = vmatprep.subr.mxu0 %v637
    %763 = vmatpush1.msra.mxu0 %v636
    %764 = vmatprep.subr.mxu0 %v639
    %765 = vmatpush1.msra.mxu0 %v638
    %766 = vmatprep.subr.mxu0 %v641
    %767 = vmatpush1.msra.mxu0 %v640
    %768 = vmatprep.subr.mxu0 %v643
    %769 = vmatpush1.msra.mxu0 %v642
    %770 = vmatprep.subr.mxu0 %v645
    %771 = vmatpush1.msra.mxu0 %v644
    %772 = vmatprep.subr.mxu0 %v647
    %773 = vmatpush1.msra.mxu0 %v646
    %774 = vmatprep.subr.mxu0 %v649
    %775 = vmatpush1.msra.mxu0 %v648
    %776 = vmatprep.subr.mxu0 %v651
    %777 = vmatpush1.msra.mxu0 %v650
    %778 = vmatprep.subr.mxu0 %v653
    %779 = vmatpush1.msra.mxu0 %v652
    %780 = vmatprep.subr.mxu0 %v655
    %781 = vmatpush1.msra.mxu0 %v654
    %782 = vmatprep.subr.mxu0 %v657
    %783 = vmatpush1.msra.mxu0 %v656
    %784 = vmatprep.subr.mxu0 %v659
    %785 = vmatpush1.msra.mxu0 %v658
    %786 = vmatprep.mubr.f32.mxu0 %v589
    %787 = vmatmul.mubr.f32.gmra.mrb[0].mxu0 %v588
    %v788 = vpop.f32.mrb[0].mxu0
    %v789 = vadd.f32 0.0, %v788
    %v790 = vpop.f32.mrb[0].mxu0
    %v791 = vadd.f32 0.0, %v790
    %792 = vmatprep.mubr.f32.mxu0 %v593
    %793 = vmatmul.mubr.f32.gmra.mrb[0].mxu0 %v592
    %v794 = vpop.f32.mrb[0].mxu0
    %v795 = vadd.f32 0.0, %v794
    %v796 = vpop.f32.mrb[0].mxu0
    %v797 = vadd.f32 0.0, %v796
    %798 = vdwg.mxu0
    %799 = vmatprep.subr.mxu0 %v661
    %800 = vmatpush1.msra.mxu0 %v660
    %801 = vmatprep.subr.mxu0 %v663
    %802 = vmatpush1.msra.mxu0 %v662
    %803 = vmatprep.subr.mxu0 %v665
    %804 = vmatpush1.msra.mxu0 %v664
    %805 = vmatprep.subr.mxu0 %v667
    %806 = vmatpush1.msra.mxu0 %v666
    %807 = vmatprep.subr.mxu0 %v669
    %808 = vmatpush1.msra.mxu0 %v668
    %809 = vmatprep.subr.mxu0 %v671
    %810 = vmatpush1.msra.mxu0 %v670
    %811 = vmatprep.subr.mxu0 %v673
    %812 = vmatpush1.msra.mxu0 %v672
    %813 = vmatprep.subr.mxu0 %v675
    %814 = vmatpush1.msra.mxu0 %v674
    %815 = vmatprep.subr.mxu0 %v677
    %816 = vmatpush1.msra.mxu0 %v676
    %817 = vmatprep.subr.mxu0 %v679
    %818 = vmatpush1.msra.mxu0 %v678
    %819 = vmatprep.subr.mxu0 %v681
    %820 = vmatpush1.msra.mxu0 %v680
    %821 = vmatprep.subr.mxu0 %v683
    %822 = vmatpush1.msra.mxu0 %v682
    %823 = vmatprep.subr.mxu0 %v685
    %824 = vmatpush1.msra.mxu0 %v684
    %825 = vmatprep.subr.mxu0 %v687
    %826 = vmatpush1.msra.mxu0 %v686
    %827 = vmatprep.subr.mxu0 %v689
    %828 = vmatpush1.msra.mxu0 %v688
    %829 = vmatprep.subr.mxu0 %v691
    %830 = vmatpush1.msra.mxu0 %v690
    %831 = vmatprep.subr.mxu0 %v693
    %832 = vmatpush1.msra.mxu0 %v692
    %833 = vmatprep.subr.mxu0 %v695
    %834 = vmatpush1.msra.mxu0 %v694
    %835 = vmatprep.subr.mxu0 %v697
    %836 = vmatpush1.msra.mxu0 %v696
    %837 = vmatprep.subr.mxu0 %v699
    %838 = vmatpush1.msra.mxu0 %v698
    %839 = vmatprep.subr.mxu0 %v701
    %840 = vmatpush1.msra.mxu0 %v700
    %841 = vmatprep.subr.mxu0 %v703
    %842 = vmatpush1.msra.mxu0 %v702
    %843 = vmatprep.subr.mxu0 %v705
    %844 = vmatpush1.msra.mxu0 %v704
    %845 = vmatprep.subr.mxu0 %v707
    %846 = vmatpush1.msra.mxu0 %v706
    %847 = vmatprep.subr.mxu0 %v709
    %848 = vmatpush1.msra.mxu0 %v708
    %849 = vmatprep.subr.mxu0 %v711
    %850 = vmatpush1.msra.mxu0 %v710
    %851 = vmatprep.subr.mxu0 %v713
    %852 = vmatpush1.msra.mxu0 %v712
    %853 = vmatprep.subr.mxu0 %v715
    %854 = vmatpush1.msra.mxu0 %v714
    %855 = vmatprep.subr.mxu0 0.0
    %856 = vmatpush1.msra.mxu0 0.0
    %857 = vmatprep.subr.mxu0 0.0
    %858 = vmatpush1.msra.mxu0 0.0
    %859 = vmatprep.subr.mxu0 0.0
    %860 = vmatpush1.msra.mxu0 0.0
    %861 = vmatprep.subr.mxu0 0.0
    %862 = vmatpush1.msra.mxu0 0.0
    %863 = vmatprep.mubr.f32.mxu0 %v717
    %864 = vmatmul.mubr.f32.gmra.mrb[0].mxu0 %v590
    %v865 = vpop.f32.mrb[0].mxu0
    %v866 = vadd.f32 %v789, %v865
    %v867 = vpop.f32.mrb[0].mxu0
    %v868 = vadd.f32 %v791, %v867
    %869 = vmatprep.mubr.f32.mxu0 %v720
    %870 = vmatmul.mubr.f32.gmra.mrb[0].mxu0 %v594
    %v871 = vpop.f32.mrb[0].mxu0
    %v872 = vadd.f32 %v795, %v871
    %v873 = vpop.f32.mrb[0].mxu0
    %v874 = vadd.f32 %v797, %v873
    %875 = vdwg.mxu0
    %v876 = vld [vmem:[%s5] sm:$0xff]
    %v877 = vld [vmem:[%s5 + $0x8] sm:$0xff]
    %v878 = vld [vmem:[%s5 + $0x10] sm:$0xff]
    %v879 = vld [vmem:[%s5 + $0x18] sm:$0xff]
    %v880 = vld [vmem:[%s5 + $0x20] sm:$0xff]
    %v881 = vld [vmem:[%s5 + $0x28] sm:$0xff]
    %v882 = vld [vmem:[%s5 + $0x30] sm:$0xff]
    %v883 = vld [vmem:[%s5 + $0x38] sm:$0xff]
    %v884 = vld [vmem:[%s5 + $0x40] sm:$0xff]
    %v885 = vld [vmem:[%s5 + $0x48] sm:$0xff]
    %v886 = vld [vmem:[%s5 + $0x50] sm:$0xff]
    %v887 = vld [vmem:[%s5 + $0x58] sm:$0xff]
    %v888 = vld [vmem:[%s5 + $0x60] sm:$0xff]
    %v889 = vld [vmem:[%s5 + $0x68] sm:$0xff]
    %v890 = vld [vmem:[%s5 + $0x70] sm:$0xff]
    %v891 = vld [vmem:[%s5 + $0x78] sm:$0xff]
    %v892 = vld [vmem:[%s5 + $0x80] sm:$0xff]
    %v893 = vld [vmem:[%s5 + $0x88] sm:$0xff]
    %v894 = vld [vmem:[%s5 + $0x90] sm:$0xff]
    %v895 = vld [vmem:[%s5 + $0x98] sm:$0xff]
    %v896 = vld [vmem:[%s5 + $0xa0] sm:$0xff]
    %v897 = vld [vmem:[%s5 + $0xa8] sm:$0xff]
    %v898 = vld [vmem:[%s5 + $0xb0] sm:$0xff]
    %v899 = vld [vmem:[%s5 + $0xb8] sm:$0xff]
    %v900 = vld [vmem:[%s5 + $0xc0] sm:$0xff]
    %v901 = vld [vmem:[%s5 + $0xc8] sm:$0xff]
    %v902 = vld [vmem:[%s5 + $0xd0] sm:$0xff]
    %v903 = vld [vmem:[%s5 + $0xd8] sm:$0xff]
    %v904 = vld [vmem:[%s5 + $0xe0] sm:$0xff]
    %v905 = vld [vmem:[%s5 + $0xe8] sm:$0xff]
    %v906 = vld [vmem:[%s5 + $0xf0] sm:$0xff]
    %v907 = vld [vmem:[%s5 + $0xf8] sm:$0xff]
    %v908 = vld [vmem:[%s5 + $0x100] sm:$0xff]
    %v909 = vld [vmem:[%s5 + $0x108] sm:$0xff]
    %v910 = vld [vmem:[%s5 + $0x110] sm:$0xff]
    %v911 = vld [vmem:[%s5 + $0x118] sm:$0xff]
    %v912 = vld [vmem:[%s5 + $0x120] sm:$0xff]
    %v913 = vld [vmem:[%s5 + $0x128] sm:$0xff]
    %v914 = vld [vmem:[%s5 + $0x130] sm:$0xff]
    %v915 = vld [vmem:[%s5 + $0x138] sm:$0xff]
    %v916 = vld [vmem:[%s5 + $0x140] sm:$0xff]
    %v917 = vld [vmem:[%s5 + $0x148] sm:$0xff]
    %v918 = vld [vmem:[%s5 + $0x150] sm:$0xff]
    %v919 = vld [vmem:[%s5 + $0x158] sm:$0xff]
    %v920 = vld [vmem:[%s5 + $0x160] sm:$0xff]
    %v921 = vld [vmem:[%s5 + $0x168] sm:$0xff]
    %v922 = vld [vmem:[%s5 + $0x170] sm:$0xff]
    %v923 = vld [vmem:[%s5 + $0x178] sm:$0xff]
    %v924 = vld [vmem:[%s5 + $0x180] sm:$0xff]
    %v925 = vld [vmem:[%s5 + $0x188] sm:$0xff]
    %v926 = vld [vmem:[%s5 + $0x190] sm:$0xff]
    %v927 = vld [vmem:[%s5 + $0x198] sm:$0xff]
    %v928 = vld [vmem:[%s5 + $0x1a0] sm:$0xff]
    %v929 = vld [vmem:[%s5 + $0x1a8] sm:$0xff]
    %v930 = vld [vmem:[%s5 + $0x1b0] sm:$0xff]
    %v931 = vld [vmem:[%s5 + $0x1b8] sm:$0xff]
    %v932 = vld [vmem:[%s5 + $0x1c0] sm:$0xff]
    %v933 = vld [vmem:[%s5 + $0x1c8] sm:$0xff]
    %v934 = vld [vmem:[%s5 + $0x1d0] sm:$0xff]
    %v935 = vld [vmem:[%s5 + $0x1d8] sm:$0xff]
    %v936 = vld [vmem:[%s5 + $0x1e0] sm:$0xff]
    %v937 = vld [vmem:[%s5 + $0x1e8] sm:$0xff]
    %v938 = vld [vmem:[%s5 + $0x1f0] sm:$0xff]
    %v939 = vld [vmem:[%s5 + $0x1f8] sm:$0xff]
    %v940 = vld [vmem:[%s5 + $0x200] sm:$0xff]
    %v941 = vld [vmem:[%s5 + $0x208] sm:$0xff]
    %v942 = vld [vmem:[%s5 + $0x210] sm:$0xff]
    %v943 = vld [vmem:[%s5 + $0x218] sm:$0xff]
    %v944 = vld [vmem:[%s5 + $0x220] sm:$0xff]
    %v945 = vld [vmem:[%s5 + $0x228] sm:$0xff]
    %v946 = vld [vmem:[%s5 + $0x230] sm:$0xff]
    %v947 = vld [vmem:[%s5 + $0x238] sm:$0xff]
    %v948 = vld [vmem:[%s5 + $0x240] sm:$0xff]
    %v949 = vld [vmem:[%s5 + $0x248] sm:$0xff]
    %v950 = vld [vmem:[%s5 + $0x250] sm:$0xff]
    %v951 = vld [vmem:[%s5 + $0x258] sm:$0xff]
    %v952 = vld [vmem:[%s5 + $0x260] sm:$0xff]
    %v953 = vld [vmem:[%s5 + $0x268] sm:$0xff]
    %v954 = vld [vmem:[%s5 + $0x270] sm:$0xff]
    %v955 = vld [vmem:[%s5 + $0x278] sm:$0xff]
    %v956 = vld [vmem:[%s5 + $0x280] sm:$0xff]
    %v957 = vld [vmem:[%s5 + $0x288] sm:$0xff]
    %v958 = vld [vmem:[%s5 + $0x290] sm:$0xff]
    %v959 = vld [vmem:[%s5 + $0x298] sm:$0xff]
    %v960 = vld [vmem:[%s5 + $0x2a0] sm:$0xff]
    %v961 = vld [vmem:[%s5 + $0x2a8] sm:$0xff]
    %v962 = vld [vmem:[%s5 + $0x2b0] sm:$0xff]
    %v963 = vld [vmem:[%s5 + $0x2b8] sm:$0xff]
    %v964 = vld [vmem:[%s5 + $0x2c0] sm:$0xff]
    %v965 = vld [vmem:[%s5 + $0x2c8] sm:$0xff]
    %v966 = vld [vmem:[%s5 + $0x2d0] sm:$0xff]
    %v967 = vld [vmem:[%s5 + $0x2d8] sm:$0xff]
    %v968 = vld [vmem:[%s5 + $0x2e0] sm:$0xff]
    %v969 = vld [vmem:[%s5 + $0x2e8] sm:$0xff]
    %v970 = vld [vmem:[%s5 + $0x2f0] sm:$0xff]
    %v971 = vld [vmem:[%s5 + $0x2f8] sm:$0xff]
    %v972 = vld [vmem:[%s5 + $0x300] sm:$0xff]
    %v973 = vld [vmem:[%s5 + $0x308] sm:$0xff]
    %v974 = vld [vmem:[%s5 + $0x310] sm:$0xff]
    %v975 = vld [vmem:[%s5 + $0x318] sm:$0xff]
    %v976 = vld [vmem:[%s5 + $0x320] sm:$0xff]
    %v977 = vld [vmem:[%s5 + $0x328] sm:$0xff]
    %v978 = vld [vmem:[%s5 + $0x330] sm:$0xff]
    %v979 = vld [vmem:[%s5 + $0x338] sm:$0xff]
    %v980 = vld [vmem:[%s5 + $0x340] sm:$0xff]
    %v981 = vld [vmem:[%s5 + $0x348] sm:$0xff]
    %v982 = vld [vmem:[%s5 + $0x350] sm:$0xff]
    %v983 = vld [vmem:[%s5 + $0x358] sm:$0xff]
    %v984 = vld [vmem:[%s5 + $0x360] sm:$0xff]
    %v985 = vld [vmem:[%s5 + $0x368] sm:$0xff]
    %v986 = vld [vmem:[%s5 + $0x370] sm:$0xff]
    %v987 = vld [vmem:[%s5 + $0x378] sm:$0xff]
    %v988 = vld [vmem:[%s5 + $0x380] sm:$0xff]
    %v989 = vld [vmem:[%s5 + $0x388] sm:$0xff]
    %v990 = vld [vmem:[%s5 + $0x390] sm:$0xff]
    %v991 = vld [vmem:[%s5 + $0x398] sm:$0xff]
    %v992 = vld [vmem:[%s5 + $0x3a0] sm:$0xff]
    %v993 = vld [vmem:[%s5 + $0x3a8] sm:$0xff]
    %v994 = vld [vmem:[%s5 + $0x3b0] sm:$0xff]
    %v995 = vld [vmem:[%s5 + $0x3b8] sm:$0xff]
    %996 = vmatprep.subr.mxu0 %v877
    %997 = vmatpush1.msra.mxu0 %v876
    %998 = vmatprep.subr.mxu0 %v879
    %999 = vmatpush1.msra.mxu0 %v878
    %1000 = vmatprep.subr.mxu0 %v881
    %1001 = vmatpush1.msra.mxu0 %v880
    %1002 = vmatprep.subr.mxu0 %v883
    %1003 = vmatpush1.msra.mxu0 %v882
    %1004 = vmatprep.subr.mxu0 %v885
    %1005 = vmatpush1.msra.mxu0 %v884
    %1006 = vmatprep.subr.mxu0 %v887
    %1007 = vmatpush1.msra.mxu0 %v886
    %1008 = vmatprep.subr.mxu0 %v889
    %1009 = vmatpush1.msra.mxu0 %v888
    %1010 = vmatprep.subr.mxu0 %v891
    %1011 = vmatpush1.msra.mxu0 %v890
    %1012 = vmatprep.subr.mxu0 %v893
    %1013 = vmatpush1.msra.mxu0 %v892
    %1014 = vmatprep.subr.mxu0 %v895
    %1015 = vmatpush1.msra.mxu0 %v894
    %1016 = vmatprep.subr.mxu0 %v897
    %1017 = vmatpush1.msra.mxu0 %v896
    %1018 = vmatprep.subr.mxu0 %v899
    %1019 = vmatpush1.msra.mxu0 %v898
    %1020 = vmatprep.subr.mxu0 %v901
    %1021 = vmatpush1.msra.mxu0 %v900
    %1022 = vmatprep.subr.mxu0 %v903
    %1023 = vmatpush1.msra.mxu0 %v902
    %1024 = vmatprep.subr.mxu0 %v905
    %1025 = vmatpush1.msra.mxu0 %v904
    %1026 = vmatprep.subr.mxu0 %v907
    %1027 = vmatpush1.msra.mxu0 %v906
    %1028 = vmatprep.subr.mxu0 %v909
    %1029 = vmatpush1.msra.mxu0 %v908
    %1030 = vmatprep.subr.mxu0 %v911
    %1031 = vmatpush1.msra.mxu0 %v910
    %1032 = vmatprep.subr.mxu0 %v913
    %1033 = vmatpush1.msra.mxu0 %v912
    %1034 = vmatprep.subr.mxu0 %v915
    %1035 = vmatpush1.msra.mxu0 %v914
    %1036 = vmatprep.subr.mxu0 %v917
    %1037 = vmatpush1.msra.mxu0 %v916
    %1038 = vmatprep.subr.mxu0 %v919
    %1039 = vmatpush1.msra.mxu0 %v918
    %1040 = vmatprep.subr.mxu0 %v921
    %1041 = vmatpush1.msra.mxu0 %v920
    %1042 = vmatprep.subr.mxu0 %v923
    %1043 = vmatpush1.msra.mxu0 %v922
    %1044 = vmatprep.subr.mxu0 %v925
    %1045 = vmatpush1.msra.mxu0 %v924
    %1046 = vmatprep.subr.mxu0 %v927
    %1047 = vmatpush1.msra.mxu0 %v926
    %1048 = vmatprep.subr.mxu0 %v929
    %1049 = vmatpush1.msra.mxu0 %v928
    %1050 = vmatprep.subr.mxu0 %v931
    %1051 = vmatpush1.msra.mxu0 %v930
    %1052 = vmatprep.subr.mxu0 %v933
    %1053 = vmatpush1.msra.mxu0 %v932
    %1054 = vmatprep.subr.mxu0 %v935
    %1055 = vmatpush1.msra.mxu0 %v934
    %1056 = vmatprep.subr.mxu0 %v937
    %1057 = vmatpush1.msra.mxu0 %v936
    %1058 = vmatprep.subr.mxu0 %v939
    %1059 = vmatpush1.msra.mxu0 %v938
    %1060 = vmatprep.mubr.f32.mxu0 %v589
    %1061 = vmatmul.mubr.f32.gmra.mrb[0].mxu0 %v588
    %v1062 = vpop.f32.mrb[0].mxu0
    %v1063 = vadd.f32 0.0, %v1062
    %v1064 = vpop.f32.mrb[0].mxu0
    %v1065 = vadd.f32 0.0, %v1064
    %1066 = vmatprep.mubr.f32.mxu0 %v593
    %1067 = vmatmul.mubr.f32.gmra.mrb[0].mxu0 %v592
    %v1068 = vpop.f32.mrb[0].mxu0
    %v1069 = vadd.f32 0.0, %v1068
    %v1070 = vpop.f32.mrb[0].mxu0
    %v1071 = vadd.f32 0.0, %v1070
    %1072 = vdwg.mxu0
    %1073 = vmatprep.subr.mxu0 %v941
    %1074 = vmatpush1.msra.mxu0 %v940
    %1075 = vmatprep.subr.mxu0 %v943
    %1076 = vmatpush1.msra.mxu0 %v942
    %1077 = vmatprep.subr.mxu0 %v945
    %1078 = vmatpush1.msra.mxu0 %v944
    %1079 = vmatprep.subr.mxu0 %v947
    %1080 = vmatpush1.msra.mxu0 %v946
    %1081 = vmatprep.subr.mxu0 %v949
    %1082 = vmatpush1.msra.mxu0 %v948
    %1083 = vmatprep.subr.mxu0 %v951
    %1084 = vmatpush1.msra.mxu0 %v950
    %1085 = vmatprep.subr.mxu0 %v953
    %1086 = vmatpush1.msra.mxu0 %v952
    %1087 = vmatprep.subr.mxu0 %v955
    %1088 = vmatpush1.msra.mxu0 %v954
    %1089 = vmatprep.subr.mxu0 %v957
    %1090 = vmatpush1.msra.mxu0 %v956
    %1091 = vmatprep.subr.mxu0 %v959
    %1092 = vmatpush1.msra.mxu0 %v958
    %1093 = vmatprep.subr.mxu0 %v961
    %1094 = vmatpush1.msra.mxu0 %v960
    %1095 = vmatprep.subr.mxu0 %v963
    %1096 = vmatpush1.msra.mxu0 %v962
    %1097 = vmatprep.subr.mxu0 %v965
    %1098 = vmatpush1.msra.mxu0 %v964
    %1099 = vmatprep.subr.mxu0 %v967
    %1100 = vmatpush1.msra.mxu0 %v966
    %1101 = vmatprep.subr.mxu0 %v969
    %1102 = vmatpush1.msra.mxu0 %v968
    %1103 = vmatprep.subr.mxu0 %v971
    %1104 = vmatpush1.msra.mxu0 %v970
    %1105 = vmatprep.subr.mxu0 %v973
    %1106 = vmatpush1.msra.mxu0 %v972
    %1107 = vmatprep.subr.mxu0 %v975
    %1108 = vmatpush1.msra.mxu0 %v974
    %1109 = vmatprep.subr.mxu0 %v977
    %1110 = vmatpush1.msra.mxu0 %v976
    %1111 = vmatprep.subr.mxu0 %v979
    %1112 = vmatpush1.msra.mxu0 %v978
    %1113 = vmatprep.subr.mxu0 %v981
    %1114 = vmatpush1.msra.mxu0 %v980
    %1115 = vmatprep.subr.mxu0 %v983
    %1116 = vmatpush1.msra.mxu0 %v982
    %1117 = vmatprep.subr.mxu0 %v985
    %1118 = vmatpush1.msra.mxu0 %v984
    %1119 = vmatprep.subr.mxu0 %v987
    %1120 = vmatpush1.msra.mxu0 %v986
    %1121 = vmatprep.subr.mxu0 %v989
    %1122 = vmatpush1.msra.mxu0 %v988
    %1123 = vmatprep.subr.mxu0 %v991
    %1124 = vmatpush1.msra.mxu0 %v990
    %1125 = vmatprep.subr.mxu0 %v993
    %1126 = vmatpush1.msra.mxu0 %v992
    %1127 = vmatprep.subr.mxu0 %v995
    %1128 = vmatpush1.msra.mxu0 %v994
    %1129 = vmatprep.subr.mxu0 0.0
    %1130 = vmatpush1.msra.mxu0 0.0
    %1131 = vmatprep.subr.mxu0 0.0
    %1132 = vmatpush1.msra.mxu0 0.0
    %1133 = vmatprep.subr.mxu0 0.0
    %1134 = vmatpush1.msra.mxu0 0.0
    %1135 = vmatprep.subr.mxu0 0.0
    %1136 = vmatpush1.msra.mxu0 0.0
    %1137 = vmatprep.mubr.f32.mxu0 %v717
    %1138 = vmatmul.mubr.f32.gmra.mrb[0].mxu0 %v590
    %v1139 = vpop.f32.mrb[0].mxu0
    %v1140 = vadd.f32 %v1063, %v1139
    %v1141 = vpop.f32.mrb[0].mxu0
    %v1142 = vadd.f32 %v1065, %v1141
    %1143 = vmatprep.mubr.f32.mxu0 %v720
    %1144 = vmatmul.mubr.f32.gmra.mrb[0].mxu0 %v594
    %v1145 = vpop.f32.mrb[0].mxu0
    %v1146 = vadd.f32 %v1069, %v1145
    %v1147 = vpop.f32.mrb[0].mxu0
    %v1148 = vadd.f32 %v1071, %v1147
    %1149 = vdwg.mxu0
    %v1150 = vmax.f32 %v866, %v1140
    %v1151 = vmax.f32 %v868, %v1142
    %v1152 = vmax.f32 %v872, %v1146
    %v1153 = vmax.f32 %v874, %v1148
    %v1154 = vld [vmem:[%s6] sm:$0x3]
    %v1156 = vlaneseq
    %v1157 = vshrl.u32 %v1156, 7
    %v1158 = vsub.s32 0, %v1157
    %v1159 = vrot.slane %v1154, %v1158
    %v1160 = vlaneseq
    %v1161 = vshrl.u32 %v1160, 7
    %v1162 = vsub.s32 1, %v1161
    %v1163 = vrot.slane %v1154, %v1162
    %v1166 = vadd.f32 %v1150, %v1159
    %v1167 = vadd.f32 %v1151, %v1163
    %v1168 = vadd.f32 %v1152, %v1159
    %v1169 = vadd.f32 %v1153, %v1163
    %v1172 = vrot.slane %v1166, 1
    %v1173 = vrot.slane %v1167, 1
    %v1176 = vmax.f32 %v1166, %v1172
    %v1177 = vmax.f32 %v1167, %v1173
    %v1178 = vmax.f32 %v1176, 0.0
    %v1179 = vmax.f32 %v1177, 0.0
    %v1182 = vcombine.low %v1178, %v1179
    %v1184 = vunpack.c.l.s4 1966171168
    %v1185 = vunpack.c.0.s8 %v1184
    %v1186 = vlaneseq
    %v1187 = vshrl.u32 %v1186, 7
    %v1188 = vsub.s32 %v1185, %v1187
    %v1189 = vrot.slane %v1182, %v1188
    %v1191 = vunpack.c.l.s4 1966171168
    %v1192 = vunpack.c.0.s8 %v1191
    %v1193 = vlaneseq
    %v1194 = vshrl.u32 %v1193, 7
    %v1195 = vsub.s32 %v1192, %v1194
    %v1196 = vrot.slane %v1189, %v1195
    %v1198 = vlaneseq
    %vm1199 = vcmp.ge.s32.totalorder %v1198, 0
    %vm1200 = vcmp.lt.s32.totalorder %v1198, 256
    %vm1201 = vmand %vm1199, %vm1200
    %1202 = vst.msk [vmem:[#allocation6] ss:$2 sm:$0x3] %vm1201, %v1196
    %v1203 = vcombine.high %v1196, %v1196
    %s1205 = scalar_lea.vmem [#allocation6], 4
    %1206 = vst.msk [vmem:[%s1205] ss:$2 sm:$0x3] %vm1201, %v1203
    %v1207 = vcombine.high %v1178, %v1179
    %v1209 = vunpack.c.l.s4 1966171168
    %v1210 = vunpack.c.0.s8 %v1209
    %v1211 = vlaneseq
    %v1212 = vshrl.u32 %v1211, 7
    %v1213 = vsub.s32 %v1210, %v1212
    %v1214 = vrot.slane %v1207, %v1213
    %v1216 = vunpack.c.l.s4 1966171168
    %v1217 = vunpack.c.0.s8 %v1216
    %v1218 = vlaneseq
    %v1219 = vshrl.u32 %v1218, 7
    %v1220 = vsub.s32 %v1217, %v1219
    %v1221 = vrot.slane %v1214, %v1220
    %s1223 = scalar_lea.vmem [#allocation6], 8
    %1224 = vst.msk [vmem:[%s1223] ss:$2 sm:$0x3] %vm1201, %v1221
    %v1225 = vcombine.high %v1221, %v1221
    %s1227 = scalar_lea.vmem [#allocation6], 12
    %1228 = vst.msk [vmem:[%s1227] ss:$2 sm:$0x3] %vm1201, %v1225
    %v1231 = vrot.slane %v1168, 1
    %v1232 = vrot.slane %v1169, 1
    %v1235 = vmax.f32 %v1168, %v1231
    %v1236 = vmax.f32 %v1169, %v1232
    %v1237 = vmax.f32 %v1235, 0.0
    %v1238 = vmax.f32 %v1236, 0.0
    %v1241 = vcombine.low %v1237, %v1238
    %v1243 = vunpack.c.l.s4 1966171168
    %v1244 = vunpack.c.0.s8 %v1243
    %v1245 = vlaneseq
    %v1246 = vshrl.u32 %v1245, 7
    %v1247 = vsub.s32 %v1244, %v1246
    %v1248 = vrot.slane %v1241, %v1247
    %v1250 = vunpack.c.l.s4 1966171168
    %v1251 = vunpack.c.0.s8 %v1250
    %v1252 = vlaneseq
    %v1253 = vshrl.u32 %v1252, 7
    %v1254 = vsub.s32 %v1251, %v1253
    %v1255 = vrot.slane %v1248, %v1254
    %s1257 = scalar_lea.vmem [#allocation6], 1
    %1258 = vst.msk [vmem:[%s1257] ss:$2 sm:$0x3] %vm1201, %v1255
    %v1259 = vcombine.high %v1255, %v1255
    %s1261 = scalar_lea.vmem %s1205, 1 [#allocation6]
    %1262 = vst.msk [vmem:[%s1261] ss:$2 sm:$0x3] %vm1201, %v1259
    %v1263 = vcombine.high %v1237, %v1238
    %v1265 = vunpack.c.l.s4 1966171168
    %v1266 = vunpack.c.0.s8 %v1265
    %v1267 = vlaneseq
    %v1268 = vshrl.u32 %v1267, 7
    %v1269 = vsub.s32 %v1266, %v1268
    %v1270 = vrot.slane %v1263, %v1269
    %v1272 = vunpack.c.l.s4 1966171168
    %v1273 = vunpack.c.0.s8 %v1272
    %v1274 = vlaneseq
    %v1275 = vshrl.u32 %v1274, 7
    %v1276 = vsub.s32 %v1273, %v1275
    %v1277 = vrot.slane %v1270, %v1276
    %s1279 = scalar_lea.vmem %s1223, 1 [#allocation6]
    %1280 = vst.msk [vmem:[%s1279] ss:$2 sm:$0x3] %vm1201, %v1277
    %v1281 = vcombine.high %v1277, %v1277
    %s1283 = scalar_lea.vmem %s1227, 1 [#allocation6]
    %1284 = vst.msk [vmem:[%s1283] ss:$2 sm:$0x3] %vm1201, %v1281
    %v1285 = vld [vmem:[#allocation6] sm:$0xf]
    %v1286 = vld [vmem:[%s7] sm:$0xff]
    %v1287 = vld [vmem:[%s7 + $0x8] sm:$0xff]
    %v1288 = vld [vmem:[%s7 + $0x10] sm:$0xff]
    %v1289 = vld [vmem:[%s7 + $0x18] sm:$0xff]
    %v1290 = vld [vmem:[%s7 + $0x20] sm:$0xff]
    %v1291 = vld [vmem:[%s7 + $0x28] sm:$0xff]
    %v1292 = vld [vmem:[%s7 + $0x30] sm:$0xff]
    %v1293 = vld [vmem:[%s7 + $0x38] sm:$0xff]
    %v1294 = vld [vmem:[%s7 + $0x40] sm:$0xff]
    %v1295 = vld [vmem:[%s7 + $0x48] sm:$0xff]
    %v1296 = vld [vmem:[%s7 + $0x50] sm:$0xff]
    %v1297 = vld [vmem:[%s7 + $0x58] sm:$0xff]
    %v1298 = vld [vmem:[%s7 + $0x60] sm:$0xff]
    %v1299 = vld [vmem:[%s7 + $0x68] sm:$0xff]
    %v1300 = vld [vmem:[%s7 + $0x70] sm:$0xff]
    %v1301 = vld [vmem:[%s7 + $0x78] sm:$0xff]
    %v1302 = vld [vmem:[%s7 + $0x80] sm:$0xff]
    %v1303 = vld [vmem:[%s7 + $0x88] sm:$0xff]
    %v1304 = vld [vmem:[%s7 + $0x90] sm:$0xff]
    %v1305 = vld [vmem:[%s7 + $0x98] sm:$0xff]
    %v1306 = vld [vmem:[%s7 + $0xa0] sm:$0xff]
    %v1307 = vld [vmem:[%s7 + $0xa8] sm:$0xff]
    %v1308 = vld [vmem:[%s7 + $0xb0] sm:$0xff]
    %v1309 = vld [vmem:[%s7 + $0xb8] sm:$0xff]
    %v1310 = vld [vmem:[%s7 + $0xc0] sm:$0xff]
    %v1311 = vld [vmem:[%s7 + $0xc8] sm:$0xff]
    %v1312 = vld [vmem:[%s7 + $0xd0] sm:$0xff]
    %v1313 = vld [vmem:[%s7 + $0xd8] sm:$0xff]
    %v1314 = vld [vmem:[%s7 + $0xe0] sm:$0xff]
    %v1315 = vld [vmem:[%s7 + $0xe8] sm:$0xff]
    %v1316 = vld [vmem:[%s7 + $0xf0] sm:$0xff]
    %v1317 = vld [vmem:[%s7 + $0xf8] sm:$0xff]
    %v1318 = vld [vmem:[%s7 + $0x100] sm:$0xff]
    %v1319 = vld [vmem:[%s7 + $0x108] sm:$0xff]
    %v1320 = vld [vmem:[%s7 + $0x110] sm:$0xff]
    %v1321 = vld [vmem:[%s7 + $0x118] sm:$0xff]
    %v1322 = vld [vmem:[%s7 + $0x120] sm:$0xff]
    %v1323 = vld [vmem:[%s7 + $0x128] sm:$0xff]
    %v1324 = vld [vmem:[%s7 + $0x130] sm:$0xff]
    %v1325 = vld [vmem:[%s7 + $0x138] sm:$0xff]
    %v1326 = vld [vmem:[%s7 + $0x140] sm:$0xff]
    %v1327 = vld [vmem:[%s7 + $0x148] sm:$0xff]
    %v1328 = vld [vmem:[%s7 + $0x150] sm:$0xff]
    %v1329 = vld [vmem:[%s7 + $0x158] sm:$0xff]
    %v1330 = vld [vmem:[%s7 + $0x160] sm:$0xff]
    %v1331 = vld [vmem:[%s7 + $0x168] sm:$0xff]
    %v1332 = vld [vmem:[%s7 + $0x170] sm:$0xff]
    %v1333 = vld [vmem:[%s7 + $0x178] sm:$0xff]
    %v1334 = vld [vmem:[%s7 + $0x180] sm:$0xff]
    %v1335 = vld [vmem:[%s7 + $0x188] sm:$0xff]
    %v1336 = vld [vmem:[%s7 + $0x190] sm:$0xff]
    %v1337 = vld [vmem:[%s7 + $0x198] sm:$0xff]
    %v1338 = vld [vmem:[%s7 + $0x1a0] sm:$0xff]
    %v1339 = vld [vmem:[%s7 + $0x1a8] sm:$0xff]
    %v1340 = vld [vmem:[%s7 + $0x1b0] sm:$0xff]
    %v1341 = vld [vmem:[%s7 + $0x1b8] sm:$0xff]
    %v1342 = vld [vmem:[%s7 + $0x1c0] sm:$0xff]
    %v1343 = vld [vmem:[%s7 + $0x1c8] sm:$0xff]
    %v1344 = vld [vmem:[%s7 + $0x1d0] sm:$0xff]
    %v1345 = vld [vmem:[%s7 + $0x1d8] sm:$0xff]
    %v1346 = vld [vmem:[%s7 + $0x1e0] sm:$0xff]
    %v1347 = vld [vmem:[%s7 + $0x1e8] sm:$0xff]
    %v1348 = vld [vmem:[%s7 + $0x1f0] sm:$0xff]
    %v1349 = vld [vmem:[%s7 + $0x1f8] sm:$0xff]
    %v1350 = vld [vmem:[%s7 + $0x200] sm:$0xff]
    %v1351 = vld [vmem:[%s7 + $0x208] sm:$0xff]
    %v1352 = vld [vmem:[%s7 + $0x210] sm:$0xff]
    %v1353 = vld [vmem:[%s7 + $0x218] sm:$0xff]
    %v1354 = vld [vmem:[%s7 + $0x220] sm:$0xff]
    %v1355 = vld [vmem:[%s7 + $0x228] sm:$0xff]
    %v1356 = vld [vmem:[%s7 + $0x230] sm:$0xff]
    %v1357 = vld [vmem:[%s7 + $0x238] sm:$0xff]
    %v1358 = vld [vmem:[%s7 + $0x240] sm:$0xff]
    %v1359 = vld [vmem:[%s7 + $0x248] sm:$0xff]
    %v1360 = vld [vmem:[%s7 + $0x250] sm:$0xff]
    %v1361 = vld [vmem:[%s7 + $0x258] sm:$0xff]
    %v1362 = vld [vmem:[%s7 + $0x260] sm:$0xff]
    %v1363 = vld [vmem:[%s7 + $0x268] sm:$0xff]
    %v1364 = vld [vmem:[%s7 + $0x270] sm:$0xff]
    %v1365 = vld [vmem:[%s7 + $0x278] sm:$0xff]
    %v1366 = vld [vmem:[%s7 + $0x280] sm:$0xff]
    %v1367 = vld [vmem:[%s7 + $0x288] sm:$0xff]
    %v1368 = vld [vmem:[%s7 + $0x290] sm:$0xff]
    %v1369 = vld [vmem:[%s7 + $0x298] sm:$0xff]
    %v1370 = vld [vmem:[%s7 + $0x2a0] sm:$0xff]
    %v1371 = vld [vmem:[%s7 + $0x2a8] sm:$0xff]
    %v1372 = vld [vmem:[%s7 + $0x2b0] sm:$0xff]
    %v1373 = vld [vmem:[%s7 + $0x2b8] sm:$0xff]
    %v1374 = vld [vmem:[%s7 + $0x2c0] sm:$0xff]
    %v1375 = vld [vmem:[%s7 + $0x2c8] sm:$0xff]
    %v1376 = vld [vmem:[%s7 + $0x2d0] sm:$0xff]
    %v1377 = vld [vmem:[%s7 + $0x2d8] sm:$0xff]
    %v1378 = vld [vmem:[%s7 + $0x2e0] sm:$0xff]
    %v1379 = vld [vmem:[%s7 + $0x2e8] sm:$0xff]
    %v1380 = vld [vmem:[%s7 + $0x2f0] sm:$0xff]
    %v1381 = vld [vmem:[%s7 + $0x2f8] sm:$0xff]
    %v1382 = vld [vmem:[%s7 + $0x300] sm:$0xff]
    %v1383 = vld [vmem:[%s7 + $0x308] sm:$0xff]
    %v1384 = vld [vmem:[%s7 + $0x310] sm:$0xff]
    %v1385 = vld [vmem:[%s7 + $0x318] sm:$0xff]
    %v1386 = vld [vmem:[%s7 + $0x320] sm:$0xff]
    %v1387 = vld [vmem:[%s7 + $0x328] sm:$0xff]
    %v1388 = vld [vmem:[%s7 + $0x330] sm:$0xff]
    %v1389 = vld [vmem:[%s7 + $0x338] sm:$0xff]
    %v1390 = vld [vmem:[%s7 + $0x340] sm:$0xff]
    %v1391 = vld [vmem:[%s7 + $0x348] sm:$0xff]
    %v1392 = vld [vmem:[%s7 + $0x350] sm:$0xff]
    %v1393 = vld [vmem:[%s7 + $0x358] sm:$0xff]
    %v1394 = vld [vmem:[%s7 + $0x360] sm:$0xff]
    %v1395 = vld [vmem:[%s7 + $0x368] sm:$0xff]
    %v1396 = vld [vmem:[%s7 + $0x370] sm:$0xff]
    %v1397 = vld [vmem:[%s7 + $0x378] sm:$0xff]
    %v1398 = vld [vmem:[%s7 + $0x380] sm:$0xff]
    %v1399 = vld [vmem:[%s7 + $0x388] sm:$0xff]
    %v1400 = vld [vmem:[%s7 + $0x390] sm:$0xff]
    %v1401 = vld [vmem:[%s7 + $0x398] sm:$0xff]
    %v1402 = vld [vmem:[%s7 + $0x3a0] sm:$0xff]
    %v1403 = vld [vmem:[%s7 + $0x3a8] sm:$0xff]
    %v1404 = vld [vmem:[%s7 + $0x3b0] sm:$0xff]
    %v1405 = vld [vmem:[%s7 + $0x3b8] sm:$0xff]
    %v1406 = vld [vmem:[%s7 + $0x3c0] sm:$0xff]
    %v1407 = vld [vmem:[%s7 + $0x3c8] sm:$0xff]
    %v1408 = vld [vmem:[%s7 + $0x3d0] sm:$0xff]
    %v1409 = vld [vmem:[%s7 + $0x3d8] sm:$0xff]
    %v1410 = vld [vmem:[%s7 + $0x3e0] sm:$0xff]
    %v1411 = vld [vmem:[%s7 + $0x3e8] sm:$0xff]
    %v1412 = vld [vmem:[%s7 + $0x3f0] sm:$0xff]
    %v1413 = vld [vmem:[%s7 + $0x3f8] sm:$0xff]
    %v1414 = vld [vmem:[%s7 + $0x400] sm:$0xff]
    %v1415 = vld [vmem:[%s7 + $0x408] sm:$0xff]
    %v1416 = vld [vmem:[%s7 + $0x410] sm:$0xff]
    %v1417 = vld [vmem:[%s7 + $0x418] sm:$0xff]
    %v1418 = vld [vmem:[%s7 + $0x420] sm:$0xff]
    %v1419 = vld [vmem:[%s7 + $0x428] sm:$0xff]
    %v1420 = vld [vmem:[%s7 + $0x430] sm:$0xff]
    %v1421 = vld [vmem:[%s7 + $0x438] sm:$0xff]
    %v1422 = vld [vmem:[%s7 + $0x440] sm:$0xff]
    %v1423 = vld [vmem:[%s7 + $0x448] sm:$0xff]
    %v1424 = vld [vmem:[%s7 + $0x450] sm:$0xff]
    %v1425 = vld [vmem:[%s7 + $0x458] sm:$0xff]
    %v1426 = vld [vmem:[%s7 + $0x460] sm:$0xff]
    %v1427 = vld [vmem:[%s7 + $0x468] sm:$0xff]
    %v1428 = vld [vmem:[%s7 + $0x470] sm:$0xff]
    %v1429 = vld [vmem:[%s7 + $0x478] sm:$0xff]
    %v1430 = vld [vmem:[%s7 + $0x480] sm:$0xff]
    %v1431 = vld [vmem:[%s7 + $0x488] sm:$0xff]
    %v1432 = vld [vmem:[%s7 + $0x490] sm:$0xff]
    %v1433 = vld [vmem:[%s7 + $0x498] sm:$0xff]
    %v1434 = vld [vmem:[%s7 + $0x4a0] sm:$0xff]
    %v1435 = vld [vmem:[%s7 + $0x4a8] sm:$0xff]
    %v1436 = vld [vmem:[%s7 + $0x4b0] sm:$0xff]
    %v1437 = vld [vmem:[%s7 + $0x4b8] sm:$0xff]
    %v1438 = vld [vmem:[%s7 + $0x4c0] sm:$0xff]
    %v1439 = vld [vmem:[%s7 + $0x4c8] sm:$0xff]
    %v1440 = vld [vmem:[%s7 + $0x4d0] sm:$0xff]
    %v1441 = vld [vmem:[%s7 + $0x4d8] sm:$0xff]
    %v1442 = vld [vmem:[%s7 + $0x4e0] sm:$0xff]
    %v1443 = vld [vmem:[%s7 + $0x4e8] sm:$0xff]
    %v1444 = vld [vmem:[%s7 + $0x4f0] sm:$0xff]
    %v1445 = vld [vmem:[%s7 + $0x4f8] sm:$0xff]
    %v1446 = vld [vmem:[%s7 + $0x500] sm:$0xff]
    %v1447 = vld [vmem:[%s7 + $0x508] sm:$0xff]
    %v1448 = vld [vmem:[%s7 + $0x510] sm:$0xff]
    %v1449 = vld [vmem:[%s7 + $0x518] sm:$0xff]
    %v1450 = vld [vmem:[%s7 + $0x520] sm:$0xff]
    %v1451 = vld [vmem:[%s7 + $0x528] sm:$0xff]
    %v1452 = vld [vmem:[%s7 + $0x530] sm:$0xff]
    %v1453 = vld [vmem:[%s7 + $0x538] sm:$0xff]
    %v1454 = vld [vmem:[%s7 + $0x540] sm:$0xff]
    %v1455 = vld [vmem:[%s7 + $0x548] sm:$0xff]
    %v1456 = vld [vmem:[%s7 + $0x550] sm:$0xff]
    %v1457 = vld [vmem:[%s7 + $0x558] sm:$0xff]
    %v1458 = vld [vmem:[%s7 + $0x560] sm:$0xff]
    %v1459 = vld [vmem:[%s7 + $0x568] sm:$0xff]
    %v1460 = vld [vmem:[%s7 + $0x570] sm:$0xff]
    %v1461 = vld [vmem:[%s7 + $0x578] sm:$0xff]
    %v1462 = vld [vmem:[%s7 + $0x580] sm:$0xff]
    %v1463 = vld [vmem:[%s7 + $0x588] sm:$0xff]
    %v1464 = vld [vmem:[%s7 + $0x590] sm:$0xff]
    %v1465 = vld [vmem:[%s7 + $0x598] sm:$0xff]
    %v1466 = vld [vmem:[%s7 + $0x5a0] sm:$0xff]
    %v1467 = vld [vmem:[%s7 + $0x5a8] sm:$0xff]
    %v1468 = vld [vmem:[%s7 + $0x5b0] sm:$0xff]
    %v1469 = vld [vmem:[%s7 + $0x5b8] sm:$0xff]
    %v1470 = vld [vmem:[%s7 + $0x5c0] sm:$0xff]
    %v1471 = vld [vmem:[%s7 + $0x5c8] sm:$0xff]
    %v1472 = vld [vmem:[%s7 + $0x5d0] sm:$0xff]
    %v1473 = vld [vmem:[%s7 + $0x5d8] sm:$0xff]
    %v1474 = vld [vmem:[%s7 + $0x5e0] sm:$0xff]
    %v1475 = vld [vmem:[%s7 + $0x5e8] sm:$0xff]
    %v1476 = vld [vmem:[%s7 + $0x5f0] sm:$0xff]
    %v1477 = vld [vmem:[%s7 + $0x5f8] sm:$0xff]
    %v1478 = vld [vmem:[%s7 + $0x600] sm:$0xff]
    %v1479 = vld [vmem:[%s7 + $0x608] sm:$0xff]
    %v1480 = vld [vmem:[%s7 + $0x610] sm:$0xff]
    %v1481 = vld [vmem:[%s7 + $0x618] sm:$0xff]
    %v1482 = vld [vmem:[%s7 + $0x620] sm:$0xff]
    %v1483 = vld [vmem:[%s7 + $0x628] sm:$0xff]
    %v1484 = vld [vmem:[%s7 + $0x630] sm:$0xff]
    %v1485 = vld [vmem:[%s7 + $0x638] sm:$0xff]
    %v1486 = vld [vmem:[%s7 + $0x640] sm:$0xff]
    %v1487 = vld [vmem:[%s7 + $0x648] sm:$0xff]
    %v1488 = vld [vmem:[%s7 + $0x650] sm:$0xff]
    %v1489 = vld [vmem:[%s7 + $0x658] sm:$0xff]
    %v1490 = vld [vmem:[%s7 + $0x660] sm:$0xff]
    %v1491 = vld [vmem:[%s7 + $0x668] sm:$0xff]
    %v1492 = vld [vmem:[%s7 + $0x670] sm:$0xff]
    %v1493 = vld [vmem:[%s7 + $0x678] sm:$0xff]
    %v1494 = vld [vmem:[%s7 + $0x680] sm:$0xff]
    %v1495 = vld [vmem:[%s7 + $0x688] sm:$0xff]
    %v1496 = vld [vmem:[%s7 + $0x690] sm:$0xff]
    %v1497 = vld [vmem:[%s7 + $0x698] sm:$0xff]
    %v1498 = vld [vmem:[%s7 + $0x6a0] sm:$0xff]
    %v1499 = vld [vmem:[%s7 + $0x6a8] sm:$0xff]
    %v1500 = vld [vmem:[%s7 + $0x6b0] sm:$0xff]
    %v1501 = vld [vmem:[%s7 + $0x6b8] sm:$0xff]
    %v1502 = vld [vmem:[%s7 + $0x6c0] sm:$0xff]
    %v1503 = vld [vmem:[%s7 + $0x6c8] sm:$0xff]
    %v1504 = vld [vmem:[%s7 + $0x6d0] sm:$0xff]
    %v1505 = vld [vmem:[%s7 + $0x6d8] sm:$0xff]
    %v1506 = vld [vmem:[%s7 + $0x6e0] sm:$0xff]
    %v1507 = vld [vmem:[%s7 + $0x6e8] sm:$0xff]
    %v1508 = vld [vmem:[%s7 + $0x6f0] sm:$0xff]
    %v1509 = vld [vmem:[%s7 + $0x6f8] sm:$0xff]
    %v1510 = vld [vmem:[%s7 + $0x700] sm:$0xff]
    %v1511 = vld [vmem:[%s7 + $0x708] sm:$0xff]
    %v1512 = vld [vmem:[%s7 + $0x710] sm:$0xff]
    %v1513 = vld [vmem:[%s7 + $0x718] sm:$0xff]
    %v1514 = vld [vmem:[%s7 + $0x720] sm:$0xff]
    %v1515 = vld [vmem:[%s7 + $0x728] sm:$0xff]
    %v1516 = vld [vmem:[%s7 + $0x730] sm:$0xff]
    %v1517 = vld [vmem:[%s7 + $0x738] sm:$0xff]
    %v1518 = vld [vmem:[%s7 + $0x740] sm:$0xff]
    %v1519 = vld [vmem:[%s7 + $0x748] sm:$0xff]
    %v1520 = vld [vmem:[%s7 + $0x750] sm:$0xff]
    %v1521 = vld [vmem:[%s7 + $0x758] sm:$0xff]
    %v1522 = vld [vmem:[%s7 + $0x760] sm:$0xff]
    %v1523 = vld [vmem:[%s7 + $0x768] sm:$0xff]
    %v1524 = vld [vmem:[%s7 + $0x770] sm:$0xff]
    %v1525 = vld [vmem:[%s7 + $0x778] sm:$0xff]
    %v1526 = vld [vmem:[%s7 + $0x780] sm:$0xff]
    %v1527 = vld [vmem:[%s7 + $0x788] sm:$0xff]
    %v1528 = vld [vmem:[%s7 + $0x790] sm:$0xff]
    %v1529 = vld [vmem:[%s7 + $0x798] sm:$0xff]
    %v1530 = vld [vmem:[%s7 + $0x7a0] sm:$0xff]
    %v1531 = vld [vmem:[%s7 + $0x7a8] sm:$0xff]
    %v1532 = vld [vmem:[%s7 + $0x7b0] sm:$0xff]
    %v1533 = vld [vmem:[%s7 + $0x7b8] sm:$0xff]
    %v1534 = vld [vmem:[%s7 + $0x7c0] sm:$0xff]
    %v1535 = vld [vmem:[%s7 + $0x7c8] sm:$0xff]
    %v1536 = vld [vmem:[%s7 + $0x7d0] sm:$0xff]
    %v1537 = vld [vmem:[%s7 + $0x7d8] sm:$0xff]
    %v1538 = vld [vmem:[%s7 + $0x7e0] sm:$0xff]
    %v1539 = vld [vmem:[%s7 + $0x7e8] sm:$0xff]
    %v1540 = vld [vmem:[%s7 + $0x7f0] sm:$0xff]
    %v1541 = vld [vmem:[%s7 + $0x7f8] sm:$0xff]
    %v1542 = vld [vmem:[%s1205] sm:$0xf]
    %s1543 = scalar_lea.vmem %s7, 2048
    %v1544 = vld [vmem:[%s1543] sm:$0xff]
    %v1545 = vld [vmem:[%s1543 + $0x8] sm:$0xff]
    %v1546 = vld [vmem:[%s1543 + $0x10] sm:$0xff]
    %v1547 = vld [vmem:[%s1543 + $0x18] sm:$0xff]
    %v1548 = vld [vmem:[%s1543 + $0x20] sm:$0xff]
    %v1549 = vld [vmem:[%s1543 + $0x28] sm:$0xff]
    %v1550 = vld [vmem:[%s1543 + $0x30] sm:$0xff]
    %v1551 = vld [vmem:[%s1543 + $0x38] sm:$0xff]
    %v1552 = vld [vmem:[%s1543 + $0x40] sm:$0xff]
    %v1553 = vld [vmem:[%s1543 + $0x48] sm:$0xff]
    %v1554 = vld [vmem:[%s1543 + $0x50] sm:$0xff]
    %v1555 = vld [vmem:[%s1543 + $0x58] sm:$0xff]
    %v1556 = vld [vmem:[%s1543 + $0x60] sm:$0xff]
    %v1557 = vld [vmem:[%s1543 + $0x68] sm:$0xff]
    %v1558 = vld [vmem:[%s1543 + $0x70] sm:$0xff]
    %v1559 = vld [vmem:[%s1543 + $0x78] sm:$0xff]
    %v1560 = vld [vmem:[%s1543 + $0x80] sm:$0xff]
    %v1561 = vld [vmem:[%s1543 + $0x88] sm:$0xff]
    %v1562 = vld [vmem:[%s1543 + $0x90] sm:$0xff]
    %v1563 = vld [vmem:[%s1543 + $0x98] sm:$0xff]
    %v1564 = vld [vmem:[%s1543 + $0xa0] sm:$0xff]
    %v1565 = vld [vmem:[%s1543 + $0xa8] sm:$0xff]
    %v1566 = vld [vmem:[%s1543 + $0xb0] sm:$0xff]
    %v1567 = vld [vmem:[%s1543 + $0xb8] sm:$0xff]
    %v1568 = vld [vmem:[%s1543 + $0xc0] sm:$0xff]
    %v1569 = vld [vmem:[%s1543 + $0xc8] sm:$0xff]
    %v1570 = vld [vmem:[%s1543 + $0xd0] sm:$0xff]
    %v1571 = vld [vmem:[%s1543 + $0xd8] sm:$0xff]
    %v1572 = vld [vmem:[%s1543 + $0xe0] sm:$0xff]
    %v1573 = vld [vmem:[%s1543 + $0xe8] sm:$0xff]
    %v1574 = vld [vmem:[%s1543 + $0xf0] sm:$0xff]
    %v1575 = vld [vmem:[%s1543 + $0xf8] sm:$0xff]
    %v1576 = vld [vmem:[%s1543 + $0x100] sm:$0xff]
    %v1577 = vld [vmem:[%s1543 + $0x108] sm:$0xff]
    %v1578 = vld [vmem:[%s1543 + $0x110] sm:$0xff]
    %v1579 = vld [vmem:[%s1543 + $0x118] sm:$0xff]
    %v1580 = vld [vmem:[%s1543 + $0x120] sm:$0xff]
    %v1581 = vld [vmem:[%s1543 + $0x128] sm:$0xff]
    %v1582 = vld [vmem:[%s1543 + $0x130] sm:$0xff]
    %v1583 = vld [vmem:[%s1543 + $0x138] sm:$0xff]
    %v1584 = vld [vmem:[%s1543 + $0x140] sm:$0xff]
    %v1585 = vld [vmem:[%s1543 + $0x148] sm:$0xff]
    %v1586 = vld [vmem:[%s1543 + $0x150] sm:$0xff]
    %v1587 = vld [vmem:[%s1543 + $0x158] sm:$0xff]
    %v1588 = vld [vmem:[%s1543 + $0x160] sm:$0xff]
    %v1589 = vld [vmem:[%s1543 + $0x168] sm:$0xff]
    %v1590 = vld [vmem:[%s1543 + $0x170] sm:$0xff]
    %v1591 = vld [vmem:[%s1543 + $0x178] sm:$0xff]
    %v1592 = vld [vmem:[%s1543 + $0x180] sm:$0xff]
    %v1593 = vld [vmem:[%s1543 + $0x188] sm:$0xff]
    %v1594 = vld [vmem:[%s1543 + $0x190] sm:$0xff]
    %v1595 = vld [vmem:[%s1543 + $0x198] sm:$0xff]
    %v1596 = vld [vmem:[%s1543 + $0x1a0] sm:$0xff]
    %v1597 = vld [vmem:[%s1543 + $0x1a8] sm:$0xff]
    %v1598 = vld [vmem:[%s1543 + $0x1b0] sm:$0xff]
    %v1599 = vld [vmem:[%s1543 + $0x1b8] sm:$0xff]
    %v1600 = vld [vmem:[%s1543 + $0x1c0] sm:$0xff]
    %v1601 = vld [vmem:[%s1543 + $0x1c8] sm:$0xff]
    %v1602 = vld [vmem:[%s1543 + $0x1d0] sm:$0xff]
    %v1603 = vld [vmem:[%s1543 + $0x1d8] sm:$0xff]
    %v1604 = vld [vmem:[%s1543 + $0x1e0] sm:$0xff]
    %v1605 = vld [vmem:[%s1543 + $0x1e8] sm:$0xff]
    %v1606 = vld [vmem:[%s1543 + $0x1f0] sm:$0xff]
    %v1607 = vld [vmem:[%s1543 + $0x1f8] sm:$0xff]
    %v1608 = vld [vmem:[%s1543 + $0x200] sm:$0xff]
    %v1609 = vld [vmem:[%s1543 + $0x208] sm:$0xff]
    %v1610 = vld [vmem:[%s1543 + $0x210] sm:$0xff]
    %v1611 = vld [vmem:[%s1543 + $0x218] sm:$0xff]
    %v1612 = vld [vmem:[%s1543 + $0x220] sm:$0xff]
    %v1613 = vld [vmem:[%s1543 + $0x228] sm:$0xff]
    %v1614 = vld [vmem:[%s1543 + $0x230] sm:$0xff]
    %v1615 = vld [vmem:[%s1543 + $0x238] sm:$0xff]
    %v1616 = vld [vmem:[%s1543 + $0x240] sm:$0xff]
    %v1617 = vld [vmem:[%s1543 + $0x248] sm:$0xff]
    %v1618 = vld [vmem:[%s1543 + $0x250] sm:$0xff]
    %v1619 = vld [vmem:[%s1543 + $0x258] sm:$0xff]
    %v1620 = vld [vmem:[%s1543 + $0x260] sm:$0xff]
    %v1621 = vld [vmem:[%s1543 + $0x268] sm:$0xff]
    %v1622 = vld [vmem:[%s1543 + $0x270] sm:$0xff]
    %v1623 = vld [vmem:[%s1543 + $0x278] sm:$0xff]
    %v1624 = vld [vmem:[%s1543 + $0x280] sm:$0xff]
    %v1625 = vld [vmem:[%s1543 + $0x288] sm:$0xff]
    %v1626 = vld [vmem:[%s1543 + $0x290] sm:$0xff]
    %v1627 = vld [vmem:[%s1543 + $0x298] sm:$0xff]
    %v1628 = vld [vmem:[%s1543 + $0x2a0] sm:$0xff]
    %v1629 = vld [vmem:[%s1543 + $0x2a8] sm:$0xff]
    %v1630 = vld [vmem:[%s1543 + $0x2b0] sm:$0xff]
    %v1631 = vld [vmem:[%s1543 + $0x2b8] sm:$0xff]
    %v1632 = vld [vmem:[%s1543 + $0x2c0] sm:$0xff]
    %v1633 = vld [vmem:[%s1543 + $0x2c8] sm:$0xff]
    %v1634 = vld [vmem:[%s1543 + $0x2d0] sm:$0xff]
    %v1635 = vld [vmem:[%s1543 + $0x2d8] sm:$0xff]
    %v1636 = vld [vmem:[%s1543 + $0x2e0] sm:$0xff]
    %v1637 = vld [vmem:[%s1543 + $0x2e8] sm:$0xff]
    %v1638 = vld [vmem:[%s1543 + $0x2f0] sm:$0xff]
    %v1639 = vld [vmem:[%s1543 + $0x2f8] sm:$0xff]
    %v1640 = vld [vmem:[%s1543 + $0x300] sm:$0xff]
    %v1641 = vld [vmem:[%s1543 + $0x308] sm:$0xff]
    %v1642 = vld [vmem:[%s1543 + $0x310] sm:$0xff]
    %v1643 = vld [vmem:[%s1543 + $0x318] sm:$0xff]
    %v1644 = vld [vmem:[%s1543 + $0x320] sm:$0xff]
    %v1645 = vld [vmem:[%s1543 + $0x328] sm:$0xff]
    %v1646 = vld [vmem:[%s1543 + $0x330] sm:$0xff]
    %v1647 = vld [vmem:[%s1543 + $0x338] sm:$0xff]
    %v1648 = vld [vmem:[%s1543 + $0x340] sm:$0xff]
    %v1649 = vld [vmem:[%s1543 + $0x348] sm:$0xff]
    %v1650 = vld [vmem:[%s1543 + $0x350] sm:$0xff]
    %v1651 = vld [vmem:[%s1543 + $0x358] sm:$0xff]
    %v1652 = vld [vmem:[%s1543 + $0x360] sm:$0xff]
    %v1653 = vld [vmem:[%s1543 + $0x368] sm:$0xff]
    %v1654 = vld [vmem:[%s1543 + $0x370] sm:$0xff]
    %v1655 = vld [vmem:[%s1543 + $0x378] sm:$0xff]
    %v1656 = vld [vmem:[%s1543 + $0x380] sm:$0xff]
    %v1657 = vld [vmem:[%s1543 + $0x388] sm:$0xff]
    %v1658 = vld [vmem:[%s1543 + $0x390] sm:$0xff]
    %v1659 = vld [vmem:[%s1543 + $0x398] sm:$0xff]
    %v1660 = vld [vmem:[%s1543 + $0x3a0] sm:$0xff]
    %v1661 = vld [vmem:[%s1543 + $0x3a8] sm:$0xff]
    %v1662 = vld [vmem:[%s1543 + $0x3b0] sm:$0xff]
    %v1663 = vld [vmem:[%s1543 + $0x3b8] sm:$0xff]
    %v1664 = vld [vmem:[%s1543 + $0x3c0] sm:$0xff]
    %v1665 = vld [vmem:[%s1543 + $0x3c8] sm:$0xff]
    %v1666 = vld [vmem:[%s1543 + $0x3d0] sm:$0xff]
    %v1667 = vld [vmem:[%s1543 + $0x3d8] sm:$0xff]
    %v1668 = vld [vmem:[%s1543 + $0x3e0] sm:$0xff]
    %v1669 = vld [vmem:[%s1543 + $0x3e8] sm:$0xff]
    %v1670 = vld [vmem:[%s1543 + $0x3f0] sm:$0xff]
    %v1671 = vld [vmem:[%s1543 + $0x3f8] sm:$0xff]
    %v1672 = vld [vmem:[%s1543 + $0x400] sm:$0xff]
    %v1673 = vld [vmem:[%s1543 + $0x408] sm:$0xff]
    %v1674 = vld [vmem:[%s1543 + $0x410] sm:$0xff]
    %v1675 = vld [vmem:[%s1543 + $0x418] sm:$0xff]
    %v1676 = vld [vmem:[%s1543 + $0x420] sm:$0xff]
    %v1677 = vld [vmem:[%s1543 + $0x428] sm:$0xff]
    %v1678 = vld [vmem:[%s1543 + $0x430] sm:$0xff]
    %v1679 = vld [vmem:[%s1543 + $0x438] sm:$0xff]
    %v1680 = vld [vmem:[%s1543 + $0x440] sm:$0xff]
    %v1681 = vld [vmem:[%s1543 + $0x448] sm:$0xff]
    %v1682 = vld [vmem:[%s1543 + $0x450] sm:$0xff]
    %v1683 = vld [vmem:[%s1543 + $0x458] sm:$0xff]
    %v1684 = vld [vmem:[%s1543 + $0x460] sm:$0xff]
    %v1685 = vld [vmem:[%s1543 + $0x468] sm:$0xff]
    %v1686 = vld [vmem:[%s1543 + $0x470] sm:$0xff]
    %v1687 = vld [vmem:[%s1543 + $0x478] sm:$0xff]
    %v1688 = vld [vmem:[%s1543 + $0x480] sm:$0xff]
    %v1689 = vld [vmem:[%s1543 + $0x488] sm:$0xff]
    %v1690 = vld [vmem:[%s1543 + $0x490] sm:$0xff]
    %v1691 = vld [vmem:[%s1543 + $0x498] sm:$0xff]
    %v1692 = vld [vmem:[%s1543 + $0x4a0] sm:$0xff]
    %v1693 = vld [vmem:[%s1543 + $0x4a8] sm:$0xff]
    %v1694 = vld [vmem:[%s1543 + $0x4b0] sm:$0xff]
    %v1695 = vld [vmem:[%s1543 + $0x4b8] sm:$0xff]
    %v1696 = vld [vmem:[%s1543 + $0x4c0] sm:$0xff]
    %v1697 = vld [vmem:[%s1543 + $0x4c8] sm:$0xff]
    %v1698 = vld [vmem:[%s1543 + $0x4d0] sm:$0xff]
    %v1699 = vld [vmem:[%s1543 + $0x4d8] sm:$0xff]
    %v1700 = vld [vmem:[%s1543 + $0x4e0] sm:$0xff]
    %v1701 = vld [vmem:[%s1543 + $0x4e8] sm:$0xff]
    %v1702 = vld [vmem:[%s1543 + $0x4f0] sm:$0xff]
    %v1703 = vld [vmem:[%s1543 + $0x4f8] sm:$0xff]
    %v1704 = vld [vmem:[%s1543 + $0x500] sm:$0xff]
    %v1705 = vld [vmem:[%s1543 + $0x508] sm:$0xff]
    %v1706 = vld [vmem:[%s1543 + $0x510] sm:$0xff]
    %v1707 = vld [vmem:[%s1543 + $0x518] sm:$0xff]
    %v1708 = vld [vmem:[%s1543 + $0x520] sm:$0xff]
    %v1709 = vld [vmem:[%s1543 + $0x528] sm:$0xff]
    %v1710 = vld [vmem:[%s1543 + $0x530] sm:$0xff]
    %v1711 = vld [vmem:[%s1543 + $0x538] sm:$0xff]
    %v1712 = vld [vmem:[%s1543 + $0x540] sm:$0xff]
    %v1713 = vld [vmem:[%s1543 + $0x548] sm:$0xff]
    %v1714 = vld [vmem:[%s1543 + $0x550] sm:$0xff]
    %v1715 = vld [vmem:[%s1543 + $0x558] sm:$0xff]
    %v1716 = vld [vmem:[%s1543 + $0x560] sm:$0xff]
    %v1717 = vld [vmem:[%s1543 + $0x568] sm:$0xff]
    %v1718 = vld [vmem:[%s1543 + $0x570] sm:$0xff]
    %v1719 = vld [vmem:[%s1543 + $0x578] sm:$0xff]
    %v1720 = vld [vmem:[%s1543 + $0x580] sm:$0xff]
    %v1721 = vld [vmem:[%s1543 + $0x588] sm:$0xff]
    %v1722 = vld [vmem:[%s1543 + $0x590] sm:$0xff]
    %v1723 = vld [vmem:[%s1543 + $0x598] sm:$0xff]
    %v1724 = vld [vmem:[%s1543 + $0x5a0] sm:$0xff]
    %v1725 = vld [vmem:[%s1543 + $0x5a8] sm:$0xff]
    %v1726 = vld [vmem:[%s1543 + $0x5b0] sm:$0xff]
    %v1727 = vld [vmem:[%s1543 + $0x5b8] sm:$0xff]
    %v1728 = vld [vmem:[%s1543 + $0x5c0] sm:$0xff]
    %v1729 = vld [vmem:[%s1543 + $0x5c8] sm:$0xff]
    %v1730 = vld [vmem:[%s1543 + $0x5d0] sm:$0xff]
    %v1731 = vld [vmem:[%s1543 + $0x5d8] sm:$0xff]
    %v1732 = vld [vmem:[%s1543 + $0x5e0] sm:$0xff]
    %v1733 = vld [vmem:[%s1543 + $0x5e8] sm:$0xff]
    %v1734 = vld [vmem:[%s1543 + $0x5f0] sm:$0xff]
    %v1735 = vld [vmem:[%s1543 + $0x5f8] sm:$0xff]
    %v1736 = vld [vmem:[%s1543 + $0x600] sm:$0xff]
    %v1737 = vld [vmem:[%s1543 + $0x608] sm:$0xff]
    %v1738 = vld [vmem:[%s1543 + $0x610] sm:$0xff]
    %v1739 = vld [vmem:[%s1543 + $0x618] sm:$0xff]
    %v1740 = vld [vmem:[%s1543 + $0x620] sm:$0xff]
    %v1741 = vld [vmem:[%s1543 + $0x628] sm:$0xff]
    %v1742 = vld [vmem:[%s1543 + $0x630] sm:$0xff]
    %v1743 = vld [vmem:[%s1543 + $0x638] sm:$0xff]
    %v1744 = vld [vmem:[%s1543 + $0x640] sm:$0xff]
    %v1745 = vld [vmem:[%s1543 + $0x648] sm:$0xff]
    %v1746 = vld [vmem:[%s1543 + $0x650] sm:$0xff]
    %v1747 = vld [vmem:[%s1543 + $0x658] sm:$0xff]
    %v1748 = vld [vmem:[%s1543 + $0x660] sm:$0xff]
    %v1749 = vld [vmem:[%s1543 + $0x668] sm:$0xff]
    %v1750 = vld [vmem:[%s1543 + $0x670] sm:$0xff]
    %v1751 = vld [vmem:[%s1543 + $0x678] sm:$0xff]
    %v1752 = vld [vmem:[%s1543 + $0x680] sm:$0xff]
    %v1753 = vld [vmem:[%s1543 + $0x688] sm:$0xff]
    %v1754 = vld [vmem:[%s1543 + $0x690] sm:$0xff]
    %v1755 = vld [vmem:[%s1543 + $0x698] sm:$0xff]
    %v1756 = vld [vmem:[%s1543 + $0x6a0] sm:$0xff]
    %v1757 = vld [vmem:[%s1543 + $0x6a8] sm:$0xff]
    %v1758 = vld [vmem:[%s1543 + $0x6b0] sm:$0xff]
    %v1759 = vld [vmem:[%s1543 + $0x6b8] sm:$0xff]
    %v1760 = vld [vmem:[%s1543 + $0x6c0] sm:$0xff]
    %v1761 = vld [vmem:[%s1543 + $0x6c8] sm:$0xff]
    %v1762 = vld [vmem:[%s1543 + $0x6d0] sm:$0xff]
    %v1763 = vld [vmem:[%s1543 + $0x6d8] sm:$0xff]
    %v1764 = vld [vmem:[%s1543 + $0x6e0] sm:$0xff]
    %v1765 = vld [vmem:[%s1543 + $0x6e8] sm:$0xff]
    %v1766 = vld [vmem:[%s1543 + $0x6f0] sm:$0xff]
    %v1767 = vld [vmem:[%s1543 + $0x6f8] sm:$0xff]
    %v1768 = vld [vmem:[%s1543 + $0x700] sm:$0xff]
    %v1769 = vld [vmem:[%s1543 + $0x708] sm:$0xff]
    %v1770 = vld [vmem:[%s1543 + $0x710] sm:$0xff]
    %v1771 = vld [vmem:[%s1543 + $0x718] sm:$0xff]
    %v1772 = vld [vmem:[%s1543 + $0x720] sm:$0xff]
    %v1773 = vld [vmem:[%s1543 + $0x728] sm:$0xff]
    %v1774 = vld [vmem:[%s1543 + $0x730] sm:$0xff]
    %v1775 = vld [vmem:[%s1543 + $0x738] sm:$0xff]
    %v1776 = vld [vmem:[%s1543 + $0x740] sm:$0xff]
    %v1777 = vld [vmem:[%s1543 + $0x748] sm:$0xff]
    %v1778 = vld [vmem:[%s1543 + $0x750] sm:$0xff]
    %v1779 = vld [vmem:[%s1543 + $0x758] sm:$0xff]
    %v1780 = vld [vmem:[%s1543 + $0x760] sm:$0xff]
    %v1781 = vld [vmem:[%s1543 + $0x768] sm:$0xff]
    %v1782 = vld [vmem:[%s1543 + $0x770] sm:$0xff]
    %v1783 = vld [vmem:[%s1543 + $0x778] sm:$0xff]
    %v1784 = vld [vmem:[%s1543 + $0x780] sm:$0xff]
    %v1785 = vld [vmem:[%s1543 + $0x788] sm:$0xff]
    %v1786 = vld [vmem:[%s1543 + $0x790] sm:$0xff]
    %v1787 = vld [vmem:[%s1543 + $0x798] sm:$0xff]
    %v1788 = vld [vmem:[%s1543 + $0x7a0] sm:$0xff]
    %v1789 = vld [vmem:[%s1543 + $0x7a8] sm:$0xff]
    %v1790 = vld [vmem:[%s1543 + $0x7b0] sm:$0xff]
    %v1791 = vld [vmem:[%s1543 + $0x7b8] sm:$0xff]
    %v1792 = vld [vmem:[%s1543 + $0x7c0] sm:$0xff]
    %v1793 = vld [vmem:[%s1543 + $0x7c8] sm:$0xff]
    %v1794 = vld [vmem:[%s1543 + $0x7d0] sm:$0xff]
    %v1795 = vld [vmem:[%s1543 + $0x7d8] sm:$0xff]
    %v1796 = vld [vmem:[%s1543 + $0x7e0] sm:$0xff]
    %v1797 = vld [vmem:[%s1543 + $0x7e8] sm:$0xff]
    %v1798 = vld [vmem:[%s1543 + $0x7f0] sm:$0xff]
    %v1799 = vld [vmem:[%s1543 + $0x7f8] sm:$0xff]
    %v1802 = vunpack.c.l.s4 1983009808
    %v1803 = vunpack.c.0.s8 %v1802
    %v1804 = vlaneseq
    %v1805 = vshrl.u32 %v1804, 7
    %v1806 = vsub.s32 %v1803, %v1805
    %v1807 = vrot.slane %v1542, %v1806
    %v1808 = vcombine.high %v1807, %v1807
    %1811 = vmatprep.subr.mxu0 %v1545
    %1812 = vmatpush1.msra.mxu0 %v1544
    %1813 = vmatprep.subr.mxu0 %v1553
    %1814 = vmatpush1.msra.mxu0 %v1552
    %1815 = vmatprep.subr.mxu0 %v1561
    %1816 = vmatpush1.msra.mxu0 %v1560
    %1817 = vmatprep.subr.mxu0 %v1569
    %1818 = vmatpush1.msra.mxu0 %v1568
    %1819 = vmatprep.subr.mxu0 %v1577
    %1820 = vmatpush1.msra.mxu0 %v1576
    %1821 = vmatprep.subr.mxu0 %v1585
    %1822 = vmatpush1.msra.mxu0 %v1584
    %1823 = vmatprep.subr.mxu0 %v1593
    %1824 = vmatpush1.msra.mxu0 %v1592
    %1825 = vmatprep.subr.mxu0 %v1601
    %1826 = vmatpush1.msra.mxu0 %v1600
    %1827 = vmatprep.subr.mxu0 %v1609
    %1828 = vmatpush1.msra.mxu0 %v1608
    %1829 = vmatprep.subr.mxu0 %v1617
    %1830 = vmatpush1.msra.mxu0 %v1616
    %1831 = vmatprep.subr.mxu0 %v1625
    %1832 = vmatpush1.msra.mxu0 %v1624
    %1833 = vmatprep.subr.mxu0 %v1633
    %1834 = vmatpush1.msra.mxu0 %v1632
    %1835 = vmatprep.subr.mxu0 %v1641
    %1836 = vmatpush1.msra.mxu0 %v1640
    %1837 = vmatprep.subr.mxu0 %v1649
    %1838 = vmatpush1.msra.mxu0 %v1648
    %1839 = vmatprep.subr.mxu0 %v1657
    %1840 = vmatpush1.msra.mxu0 %v1656
    %1841 = vmatprep.subr.mxu0 %v1665
    %1842 = vmatpush1.msra.mxu0 %v1664
    %1843 = vmatprep.subr.mxu0 %v1673
    %1844 = vmatpush1.msra.mxu0 %v1672
    %1845 = vmatprep.subr.mxu0 %v1681
    %1846 = vmatpush1.msra.mxu0 %v1680
    %1847 = vmatprep.subr.mxu0 %v1689
    %1848 = vmatpush1.msra.mxu0 %v1688
    %1849 = vmatprep.subr.mxu0 %v1697
    %1850 = vmatpush1.msra.mxu0 %v1696
    %1851 = vmatprep.subr.mxu0 %v1705
    %1852 = vmatpush1.msra.mxu0 %v1704
    %1853 = vmatprep.subr.mxu0 %v1713
    %1854 = vmatpush1.msra.mxu0 %v1712
    %1855 = vmatprep.subr.mxu0 %v1721
    %1856 = vmatpush1.msra.mxu0 %v1720
    %1857 = vmatprep.subr.mxu0 %v1729
    %1858 = vmatpush1.msra.mxu0 %v1728
    %1859 = vmatprep.subr.mxu0 %v1737
    %1860 = vmatpush1.msra.mxu0 %v1736
    %1861 = vmatprep.subr.mxu0 %v1745
    %1862 = vmatpush1.msra.mxu0 %v1744
    %1863 = vmatprep.subr.mxu0 %v1753
    %1864 = vmatpush1.msra.mxu0 %v1752
    %1865 = vmatprep.subr.mxu0 %v1761
    %1866 = vmatpush1.msra.mxu0 %v1760
    %1867 = vmatprep.subr.mxu0 %v1769
    %1868 = vmatpush1.msra.mxu0 %v1768
    %1869 = vmatprep.subr.mxu0 %v1777
    %1870 = vmatpush1.msra.mxu0 %v1776
    %1871 = vmatprep.subr.mxu0 %v1785
    %1872 = vmatpush1.msra.mxu0 %v1784
    %1873 = vmatprep.subr.mxu0 %v1793
    %1874 = vmatpush1.msra.mxu0 %v1792
    %1875 = vmatprep.mubr.f32.mxu0 %v1808
    %1876 = vmatmul.mubr.f32.gmra.mrb[0].mxu0 %v1807
    %v1877 = vpop.f32.mrb[0].mxu0
    %v1878 = vadd.f32 0.0, %v1877
    %v1879 = vpop.f32.mrb[0].mxu0
    %v1880 = vadd.f32 0.0, %v1879
    %1881 = vdwg.mxu0
    %1882 = vmatprep.subr.mxu0 %v1547
    %1883 = vmatpush1.msra.mxu0 %v1546
    %1884 = vmatprep.subr.mxu0 %v1555
    %1885 = vmatpush1.msra.mxu0 %v1554
    %1886 = vmatprep.subr.mxu0 %v1563
    %1887 = vmatpush1.msra.mxu0 %v1562
    %1888 = vmatprep.subr.mxu0 %v1571
    %1889 = vmatpush1.msra.mxu0 %v1570
    %1890 = vmatprep.subr.mxu0 %v1579
    %1891 = vmatpush1.msra.mxu0 %v1578
    %1892 = vmatprep.subr.mxu0 %v1587
    %1893 = vmatpush1.msra.mxu0 %v1586
    %1894 = vmatprep.subr.mxu0 %v1595
    %1895 = vmatpush1.msra.mxu0 %v1594
    %1896 = vmatprep.subr.mxu0 %v1603
    %1897 = vmatpush1.msra.mxu0 %v1602
    %1898 = vmatprep.subr.mxu0 %v1611
    %1899 = vmatpush1.msra.mxu0 %v1610
    %1900 = vmatprep.subr.mxu0 %v1619
    %1901 = vmatpush1.msra.mxu0 %v1618
    %1902 = vmatprep.subr.mxu0 %v1627
    %1903 = vmatpush1.msra.mxu0 %v1626
    %1904 = vmatprep.subr.mxu0 %v1635
    %1905 = vmatpush1.msra.mxu0 %v1634
    %1906 = vmatprep.subr.mxu0 %v1643
    %1907 = vmatpush1.msra.mxu0 %v1642
    %1908 = vmatprep.subr.mxu0 %v1651
    %1909 = vmatpush1.msra.mxu0 %v1650
    %1910 = vmatprep.subr.mxu0 %v1659
    %1911 = vmatpush1.msra.mxu0 %v1658
    %1912 = vmatprep.subr.mxu0 %v1667
    %1913 = vmatpush1.msra.mxu0 %v1666
    %1914 = vmatprep.subr.mxu0 %v1675
    %1915 = vmatpush1.msra.mxu0 %v1674
    %1916 = vmatprep.subr.mxu0 %v1683
    %1917 = vmatpush1.msra.mxu0 %v1682
    %1918 = vmatprep.subr.mxu0 %v1691
    %1919 = vmatpush1.msra.mxu0 %v1690
    %1920 = vmatprep.subr.mxu0 %v1699
    %1921 = vmatpush1.msra.mxu0 %v1698
    %1922 = vmatprep.subr.mxu0 %v1707
    %1923 = vmatpush1.msra.mxu0 %v1706
    %1924 = vmatprep.subr.mxu0 %v1715
    %1925 = vmatpush1.msra.mxu0 %v1714
    %1926 = vmatprep.subr.mxu0 %v1723
    %1927 = vmatpush1.msra.mxu0 %v1722
    %1928 = vmatprep.subr.mxu0 %v1731
    %1929 = vmatpush1.msra.mxu0 %v1730
    %1930 = vmatprep.subr.mxu0 %v1739
    %1931 = vmatpush1.msra.mxu0 %v1738
    %1932 = vmatprep.subr.mxu0 %v1747
    %1933 = vmatpush1.msra.mxu0 %v1746
    %1934 = vmatprep.subr.mxu0 %v1755
    %1935 = vmatpush1.msra.mxu0 %v1754
    %1936 = vmatprep.subr.mxu0 %v1763
    %1937 = vmatpush1.msra.mxu0 %v1762
    %1938 = vmatprep.subr.mxu0 %v1771
    %1939 = vmatpush1.msra.mxu0 %v1770
    %1940 = vmatprep.subr.mxu0 %v1779
    %1941 = vmatpush1.msra.mxu0 %v1778
    %1942 = vmatprep.subr.mxu0 %v1787
    %1943 = vmatpush1.msra.mxu0 %v1786
    %1944 = vmatprep.subr.mxu0 %v1795
    %1945 = vmatpush1.msra.mxu0 %v1794
    %1946 = vmatprep.mubr.f32.mxu0 %v1808
    %1947 = vmatmul.mubr.f32.gmra.mrb[0].mxu0 %v1807
    %v1948 = vpop.f32.mrb[0].mxu0
    %v1949 = vadd.f32 0.0, %v1948
    %v1950 = vpop.f32.mrb[0].mxu0
    %v1951 = vadd.f32 0.0, %v1950
    %1952 = vdwg.mxu0
    %1953 = vmatprep.subr.mxu0 %v1549
    %1954 = vmatpush1.msra.mxu0 %v1548
    %1955 = vmatprep.subr.mxu0 %v1557
    %1956 = vmatpush1.msra.mxu0 %v1556
    %1957 = vmatprep.subr.mxu0 %v1565
    %1958 = vmatpush1.msra.mxu0 %v1564
    %1959 = vmatprep.subr.mxu0 %v1573
    %1960 = vmatpush1.msra.mxu0 %v1572
    %1961 = vmatprep.subr.mxu0 %v1581
    %1962 = vmatpush1.msra.mxu0 %v1580
    %1963 = vmatprep.subr.mxu0 %v1589
    %1964 = vmatpush1.msra.mxu0 %v1588
    %1965 = vmatprep.subr.mxu0 %v1597
    %1966 = vmatpush1.msra.mxu0 %v1596
    %1967 = vmatprep.subr.mxu0 %v1605
    %1968 = vmatpush1.msra.mxu0 %v1604
    %1969 = vmatprep.subr.mxu0 %v1613
    %1970 = vmatpush1.msra.mxu0 %v1612
    %1971 = vmatprep.subr.mxu0 %v1621
    %1972 = vmatpush1.msra.mxu0 %v1620
    %1973 = vmatprep.subr.mxu0 %v1629
    %1974 = vmatpush1.msra.mxu0 %v1628
    %1975 = vmatprep.subr.mxu0 %v1637
    %1976 = vmatpush1.msra.mxu0 %v1636
    %1977 = vmatprep.subr.mxu0 %v1645
    %1978 = vmatpush1.msra.mxu0 %v1644
    %1979 = vmatprep.subr.mxu0 %v1653
    %1980 = vmatpush1.msra.mxu0 %v1652
    %1981 = vmatprep.subr.mxu0 %v1661
    %1982 = vmatpush1.msra.mxu0 %v1660
    %1983 = vmatprep.subr.mxu0 %v1669
    %1984 = vmatpush1.msra.mxu0 %v1668
    %1985 = vmatprep.subr.mxu0 %v1677
    %1986 = vmatpush1.msra.mxu0 %v1676
    %1987 = vmatprep.subr.mxu0 %v1685
    %1988 = vmatpush1.msra.mxu0 %v1684
    %1989 = vmatprep.subr.mxu0 %v1693
    %1990 = vmatpush1.msra.mxu0 %v1692
    %1991 = vmatprep.subr.mxu0 %v1701
    %1992 = vmatpush1.msra.mxu0 %v1700
    %1993 = vmatprep.subr.mxu0 %v1709
    %1994 = vmatpush1.msra.mxu0 %v1708
    %1995 = vmatprep.subr.mxu0 %v1717
    %1996 = vmatpush1.msra.mxu0 %v1716
    %1997 = vmatprep.subr.mxu0 %v1725
    %1998 = vmatpush1.msra.mxu0 %v1724
    %1999 = vmatprep.subr.mxu0 %v1733
    %2000 = vmatpush1.msra.mxu0 %v1732
    %2001 = vmatprep.subr.mxu0 %v1741
    %2002 = vmatpush1.msra.mxu0 %v1740
    %2003 = vmatprep.subr.mxu0 %v1749
    %2004 = vmatpush1.msra.mxu0 %v1748
    %2005 = vmatprep.subr.mxu0 %v1757
    %2006 = vmatpush1.msra.mxu0 %v1756
    %2007 = vmatprep.subr.mxu0 %v1765
    %2008 = vmatpush1.msra.mxu0 %v1764
    %2009 = vmatprep.subr.mxu0 %v1773
    %2010 = vmatpush1.msra.mxu0 %v1772
    %2011 = vmatprep.subr.mxu0 %v1781
    %2012 = vmatpush1.msra.mxu0 %v1780
    %2013 = vmatprep.subr.mxu0 %v1789
    %2014 = vmatpush1.msra.mxu0 %v1788
    %2015 = vmatprep.subr.mxu0 %v1797
    %2016 = vmatpush1.msra.mxu0 %v1796
    %2017 = vmatprep.mubr.f32.mxu0 %v1808
    %2018 = vmatmul.mubr.f32.gmra.mrb[0].mxu0 %v1807
    %v2019 = vpop.f32.mrb[0].mxu0
    %v2020 = vadd.f32 0.0, %v2019
    %v2021 = vpop.f32.mrb[0].mxu0
    %v2022 = vadd.f32 0.0, %v2021
    %2023 = vdwg.mxu0
    %2024 = vmatprep.subr.mxu0 %v1551
    %2025 = vmatpush1.msra.mxu0 %v1550
    %2026 = vmatprep.subr.mxu0 %v1559
    %2027 = vmatpush1.msra.mxu0 %v1558
    %2028 = vmatprep.subr.mxu0 %v1567
    %2029 = vmatpush1.msra.mxu0 %v1566
    %2030 = vmatprep.subr.mxu0 %v1575
    %2031 = vmatpush1.msra.mxu0 %v1574
    %2032 = vmatprep.subr.mxu0 %v1583
    %2033 = vmatpush1.msra.mxu0 %v1582
    %2034 = vmatprep.subr.mxu0 %v1591
    %2035 = vmatpush1.msra.mxu0 %v1590
    %2036 = vmatprep.subr.mxu0 %v1599
    %2037 = vmatpush1.msra.mxu0 %v1598
    %2038 = vmatprep.subr.mxu0 %v1607
    %2039 = vmatpush1.msra.mxu0 %v1606
    %2040 = vmatprep.subr.mxu0 %v1615
    %2041 = vmatpush1.msra.mxu0 %v1614
    %2042 = vmatprep.subr.mxu0 %v1623
    %2043 = vmatpush1.msra.mxu0 %v1622
    %2044 = vmatprep.subr.mxu0 %v1631
    %2045 = vmatpush1.msra.mxu0 %v1630
    %2046 = vmatprep.subr.mxu0 %v1639
    %2047 = vmatpush1.msra.mxu0 %v1638
    %2048 = vmatprep.subr.mxu0 %v1647
    %2049 = vmatpush1.msra.mxu0 %v1646
    %2050 = vmatprep.subr.mxu0 %v1655
    %2051 = vmatpush1.msra.mxu0 %v1654
    %2052 = vmatprep.subr.mxu0 %v1663
    %2053 = vmatpush1.msra.mxu0 %v1662
    %2054 = vmatprep.subr.mxu0 %v1671
    %2055 = vmatpush1.msra.mxu0 %v1670
    %2056 = vmatprep.subr.mxu0 %v1679
    %2057 = vmatpush1.msra.mxu0 %v1678
    %2058 = vmatprep.subr.mxu0 %v1687
    %2059 = vmatpush1.msra.mxu0 %v1686
    %2060 = vmatprep.subr.mxu0 %v1695
    %2061 = vmatpush1.msra.mxu0 %v1694
    %2062 = vmatprep.subr.mxu0 %v1703
    %2063 = vmatpush1.msra.mxu0 %v1702
    %2064 = vmatprep.subr.mxu0 %v1711
    %2065 = vmatpush1.msra.mxu0 %v1710
    %2066 = vmatprep.subr.mxu0 %v1719
    %2067 = vmatpush1.msra.mxu0 %v1718
    %2068 = vmatprep.subr.mxu0 %v1727
    %2069 = vmatpush1.msra.mxu0 %v1726
    %2070 = vmatprep.subr.mxu0 %v1735
    %2071 = vmatpush1.msra.mxu0 %v1734
    %2072 = vmatprep.subr.mxu0 %v1743
    %2073 = vmatpush1.msra.mxu0 %v1742
    %2074 = vmatprep.subr.mxu0 %v1751
    %2075 = vmatpush1.msra.mxu0 %v1750
    %2076 = vmatprep.subr.mxu0 %v1759
    %2077 = vmatpush1.msra.mxu0 %v1758
    %2078 = vmatprep.subr.mxu0 %v1767
    %2079 = vmatpush1.msra.mxu0 %v1766
    %2080 = vmatprep.subr.mxu0 %v1775
    %2081 = vmatpush1.msra.mxu0 %v1774
    %2082 = vmatprep.subr.mxu0 %v1783
    %2083 = vmatpush1.msra.mxu0 %v1782
    %2084 = vmatprep.subr.mxu0 %v1791
    %2085 = vmatpush1.msra.mxu0 %v1790
    %2086 = vmatprep.subr.mxu0 %v1799
    %2087 = vmatpush1.msra.mxu0 %v1798
    %2088 = vmatprep.mubr.f32.mxu0 %v1808
    %2089 = vmatmul.mubr.f32.gmra.mrb[0].mxu0 %v1807
    %v2090 = vpop.f32.mrb[0].mxu0
    %v2091 = vadd.f32 0.0, %v2090
    %v2092 = vpop.f32.mrb[0].mxu0
    %v2093 = vadd.f32 0.0, %v2092
    %2094 = vdwg.mxu0
    %v2097 = vunpack.c.l.s4 1983009808
    %v2098 = vunpack.c.0.s8 %v2097
    %v2099 = vlaneseq
    %v2100 = vshrl.u32 %v2099, 7
    %v2101 = vsub.s32 %v2098, %v2100
    %v2102 = vrot.slane %v1285, %v2101
    %v2103 = vcombine.high %v2102, %v2102
    %2106 = vmatprep.subr.mxu0 %v1287
    %2107 = vmatpush1.msra.mxu0 %v1286
    %2108 = vmatprep.subr.mxu0 %v1295
    %2109 = vmatpush1.msra.mxu0 %v1294
    %2110 = vmatprep.subr.mxu0 %v1303
    %2111 = vmatpush1.msra.mxu0 %v1302
    %2112 = vmatprep.subr.mxu0 %v1311
    %2113 = vmatpush1.msra.mxu0 %v1310
    %2114 = vmatprep.subr.mxu0 %v1319
    %2115 = vmatpush1.msra.mxu0 %v1318
    %2116 = vmatprep.subr.mxu0 %v1327
    %2117 = vmatpush1.msra.mxu0 %v1326
    %2118 = vmatprep.subr.mxu0 %v1335
    %2119 = vmatpush1.msra.mxu0 %v1334
    %2120 = vmatprep.subr.mxu0 %v1343
    %2121 = vmatpush1.msra.mxu0 %v1342
    %2122 = vmatprep.subr.mxu0 %v1351
    %2123 = vmatpush1.msra.mxu0 %v1350
    %2124 = vmatprep.subr.mxu0 %v1359
    %2125 = vmatpush1.msra.mxu0 %v1358
    %2126 = vmatprep.subr.mxu0 %v1367
    %2127 = vmatpush1.msra.mxu0 %v1366
    %2128 = vmatprep.subr.mxu0 %v1375
    %2129 = vmatpush1.msra.mxu0 %v1374
    %2130 = vmatprep.subr.mxu0 %v1383
    %2131 = vmatpush1.msra.mxu0 %v1382
    %2132 = vmatprep.subr.mxu0 %v1391
    %2133 = vmatpush1.msra.mxu0 %v1390
    %2134 = vmatprep.subr.mxu0 %v1399
    %2135 = vmatpush1.msra.mxu0 %v1398
    %2136 = vmatprep.subr.mxu0 %v1407
    %2137 = vmatpush1.msra.mxu0 %v1406
    %2138 = vmatprep.subr.mxu0 %v1415
    %2139 = vmatpush1.msra.mxu0 %v1414
    %2140 = vmatprep.subr.mxu0 %v1423
    %2141 = vmatpush1.msra.mxu0 %v1422
    %2142 = vmatprep.subr.mxu0 %v1431
    %2143 = vmatpush1.msra.mxu0 %v1430
    %2144 = vmatprep.subr.mxu0 %v1439
    %2145 = vmatpush1.msra.mxu0 %v1438
    %2146 = vmatprep.subr.mxu0 %v1447
    %2147 = vmatpush1.msra.mxu0 %v1446
    %2148 = vmatprep.subr.mxu0 %v1455
    %2149 = vmatpush1.msra.mxu0 %v1454
    %2150 = vmatprep.subr.mxu0 %v1463
    %2151 = vmatpush1.msra.mxu0 %v1462
    %2152 = vmatprep.subr.mxu0 %v1471
    %2153 = vmatpush1.msra.mxu0 %v1470
    %2154 = vmatprep.subr.mxu0 %v1479
    %2155 = vmatpush1.msra.mxu0 %v1478
    %2156 = vmatprep.subr.mxu0 %v1487
    %2157 = vmatpush1.msra.mxu0 %v1486
    %2158 = vmatprep.subr.mxu0 %v1495
    %2159 = vmatpush1.msra.mxu0 %v1494
    %2160 = vmatprep.subr.mxu0 %v1503
    %2161 = vmatpush1.msra.mxu0 %v1502
    %2162 = vmatprep.subr.mxu0 %v1511
    %2163 = vmatpush1.msra.mxu0 %v1510
    %2164 = vmatprep.subr.mxu0 %v1519
    %2165 = vmatpush1.msra.mxu0 %v1518
    %2166 = vmatprep.subr.mxu0 %v1527
    %2167 = vmatpush1.msra.mxu0 %v1526
    %2168 = vmatprep.subr.mxu0 %v1535
    %2169 = vmatpush1.msra.mxu0 %v1534
    %2170 = vmatprep.mubr.f32.mxu0 %v2103
    %2171 = vmatmul.mubr.f32.gmra.mrb[0].mxu0 %v2102
    %v2172 = vpop.f32.mrb[0].mxu0
    %v2173 = vadd.f32 %v1878, %v2172
    %v2174 = vpop.f32.mrb[0].mxu0
    %v2175 = vadd.f32 %v1880, %v2174
    %2176 = vdwg.mxu0
    %2177 = vmatprep.subr.mxu0 %v1289
    %2178 = vmatpush1.msra.mxu0 %v1288
    %2179 = vmatprep.subr.mxu0 %v1297
    %2180 = vmatpush1.msra.mxu0 %v1296
    %2181 = vmatprep.subr.mxu0 %v1305
    %2182 = vmatpush1.msra.mxu0 %v1304
    %2183 = vmatprep.subr.mxu0 %v1313
    %2184 = vmatpush1.msra.mxu0 %v1312
    %2185 = vmatprep.subr.mxu0 %v1321
    %2186 = vmatpush1.msra.mxu0 %v1320
    %2187 = vmatprep.subr.mxu0 %v1329
    %2188 = vmatpush1.msra.mxu0 %v1328
    %2189 = vmatprep.subr.mxu0 %v1337
    %2190 = vmatpush1.msra.mxu0 %v1336
    %2191 = vmatprep.subr.mxu0 %v1345
    %2192 = vmatpush1.msra.mxu0 %v1344
    %2193 = vmatprep.subr.mxu0 %v1353
    %2194 = vmatpush1.msra.mxu0 %v1352
    %2195 = vmatprep.subr.mxu0 %v1361
    %2196 = vmatpush1.msra.mxu0 %v1360
    %2197 = vmatprep.subr.mxu0 %v1369
    %2198 = vmatpush1.msra.mxu0 %v1368
    %2199 = vmatprep.subr.mxu0 %v1377
    %2200 = vmatpush1.msra.mxu0 %v1376
    %2201 = vmatprep.subr.mxu0 %v1385
    %2202 = vmatpush1.msra.mxu0 %v1384
    %2203 = vmatprep.subr.mxu0 %v1393
    %2204 = vmatpush1.msra.mxu0 %v1392
    %2205 = vmatprep.subr.mxu0 %v1401
    %2206 = vmatpush1.msra.mxu0 %v1400
    %2207 = vmatprep.subr.mxu0 %v1409
    %2208 = vmatpush1.msra.mxu0 %v1408
    %2209 = vmatprep.subr.mxu0 %v1417
    %2210 = vmatpush1.msra.mxu0 %v1416
    %2211 = vmatprep.subr.mxu0 %v1425
    %2212 = vmatpush1.msra.mxu0 %v1424
    %2213 = vmatprep.subr.mxu0 %v1433
    %2214 = vmatpush1.msra.mxu0 %v1432
    %2215 = vmatprep.subr.mxu0 %v1441
    %2216 = vmatpush1.msra.mxu0 %v1440
    %2217 = vmatprep.subr.mxu0 %v1449
    %2218 = vmatpush1.msra.mxu0 %v1448
    %2219 = vmatprep.subr.mxu0 %v1457
    %2220 = vmatpush1.msra.mxu0 %v1456
    %2221 = vmatprep.subr.mxu0 %v1465
    %2222 = vmatpush1.msra.mxu0 %v1464
    %2223 = vmatprep.subr.mxu0 %v1473
    %2224 = vmatpush1.msra.mxu0 %v1472
    %2225 = vmatprep.subr.mxu0 %v1481
    %2226 = vmatpush1.msra.mxu0 %v1480
    %2227 = vmatprep.subr.mxu0 %v1489
    %2228 = vmatpush1.msra.mxu0 %v1488
    %2229 = vmatprep.subr.mxu0 %v1497
    %2230 = vmatpush1.msra.mxu0 %v1496
    %2231 = vmatprep.subr.mxu0 %v1505
    %2232 = vmatpush1.msra.mxu0 %v1504
    %2233 = vmatprep.subr.mxu0 %v1513
    %2234 = vmatpush1.msra.mxu0 %v1512
    %2235 = vmatprep.subr.mxu0 %v1521
    %2236 = vmatpush1.msra.mxu0 %v1520
    %2237 = vmatprep.subr.mxu0 %v1529
    %2238 = vmatpush1.msra.mxu0 %v1528
    %2239 = vmatprep.subr.mxu0 %v1537
    %2240 = vmatpush1.msra.mxu0 %v1536
    %2241 = vmatprep.mubr.f32.mxu0 %v2103
    %2242 = vmatmul.mubr.f32.gmra.mrb[0].mxu0 %v2102
    %v2243 = vpop.f32.mrb[0].mxu0
    %v2244 = vadd.f32 %v1949, %v2243
    %v2245 = vpop.f32.mrb[0].mxu0
    %v2246 = vadd.f32 %v1951, %v2245
    %2247 = vdwg.mxu0
    %2248 = vmatprep.subr.mxu0 %v1291
    %2249 = vmatpush1.msra.mxu0 %v1290
    %2250 = vmatprep.subr.mxu0 %v1299
    %2251 = vmatpush1.msra.mxu0 %v1298
    %2252 = vmatprep.subr.mxu0 %v1307
    %2253 = vmatpush1.msra.mxu0 %v1306
    %2254 = vmatprep.subr.mxu0 %v1315
    %2255 = vmatpush1.msra.mxu0 %v1314
    %2256 = vmatprep.subr.mxu0 %v1323
    %2257 = vmatpush1.msra.mxu0 %v1322
    %2258 = vmatprep.subr.mxu0 %v1331
    %2259 = vmatpush1.msra.mxu0 %v1330
    %2260 = vmatprep.subr.mxu0 %v1339
    %2261 = vmatpush1.msra.mxu0 %v1338
    %2262 = vmatprep.subr.mxu0 %v1347
    %2263 = vmatpush1.msra.mxu0 %v1346
    %2264 = vmatprep.subr.mxu0 %v1355
    %2265 = vmatpush1.msra.mxu0 %v1354
    %2266 = vmatprep.subr.mxu0 %v1363
    %2267 = vmatpush1.msra.mxu0 %v1362
    %2268 = vmatprep.subr.mxu0 %v1371
    %2269 = vmatpush1.msra.mxu0 %v1370
    %2270 = vmatprep.subr.mxu0 %v1379
    %2271 = vmatpush1.msra.mxu0 %v1378
    %2272 = vmatprep.subr.mxu0 %v1387
    %2273 = vmatpush1.msra.mxu0 %v1386
    %2274 = vmatprep.subr.mxu0 %v1395
    %2275 = vmatpush1.msra.mxu0 %v1394
    %2276 = vmatprep.subr.mxu0 %v1403
    %2277 = vmatpush1.msra.mxu0 %v1402
    %2278 = vmatprep.subr.mxu0 %v1411
    %2279 = vmatpush1.msra.mxu0 %v1410
    %2280 = vmatprep.subr.mxu0 %v1419
    %2281 = vmatpush1.msra.mxu0 %v1418
    %2282 = vmatprep.subr.mxu0 %v1427
    %2283 = vmatpush1.msra.mxu0 %v1426
    %2284 = vmatprep.subr.mxu0 %v1435
    %2285 = vmatpush1.msra.mxu0 %v1434
    %2286 = vmatprep.subr.mxu0 %v1443
    %2287 = vmatpush1.msra.mxu0 %v1442
    %2288 = vmatprep.subr.mxu0 %v1451
    %2289 = vmatpush1.msra.mxu0 %v1450
    %2290 = vmatprep.subr.mxu0 %v1459
    %2291 = vmatpush1.msra.mxu0 %v1458
    %2292 = vmatprep.subr.mxu0 %v1467
    %2293 = vmatpush1.msra.mxu0 %v1466
    %2294 = vmatprep.subr.mxu0 %v1475
    %2295 = vmatpush1.msra.mxu0 %v1474
    %2296 = vmatprep.subr.mxu0 %v1483
    %2297 = vmatpush1.msra.mxu0 %v1482
    %2298 = vmatprep.subr.mxu0 %v1491
    %2299 = vmatpush1.msra.mxu0 %v1490
    %2300 = vmatprep.subr.mxu0 %v1499
    %2301 = vmatpush1.msra.mxu0 %v1498
    %2302 = vmatprep.subr.mxu0 %v1507
    %2303 = vmatpush1.msra.mxu0 %v1506
    %2304 = vmatprep.subr.mxu0 %v1515
    %2305 = vmatpush1.msra.mxu0 %v1514
    %2306 = vmatprep.subr.mxu0 %v1523
    %2307 = vmatpush1.msra.mxu0 %v1522
    %2308 = vmatprep.subr.mxu0 %v1531
    %2309 = vmatpush1.msra.mxu0 %v1530
    %2310 = vmatprep.subr.mxu0 %v1539
    %2311 = vmatpush1.msra.mxu0 %v1538
    %2312 = vmatprep.mubr.f32.mxu0 %v2103
    %2313 = vmatmul.mubr.f32.gmra.mrb[0].mxu0 %v2102
    %v2314 = vpop.f32.mrb[0].mxu0
    %v2315 = vadd.f32 %v2020, %v2314
    %v2316 = vpop.f32.mrb[0].mxu0
    %v2317 = vadd.f32 %v2022, %v2316
    %2318 = vdwg.mxu0
    %2319 = vmatprep.subr.mxu0 %v1293
    %2320 = vmatpush1.msra.mxu0 %v1292
    %2321 = vmatprep.subr.mxu0 %v1301
    %2322 = vmatpush1.msra.mxu0 %v1300
    %2323 = vmatprep.subr.mxu0 %v1309
    %2324 = vmatpush1.msra.mxu0 %v1308
    %2325 = vmatprep.subr.mxu0 %v1317
    %2326 = vmatpush1.msra.mxu0 %v1316
    %2327 = vmatprep.subr.mxu0 %v1325
    %2328 = vmatpush1.msra.mxu0 %v1324
    %2329 = vmatprep.subr.mxu0 %v1333
    %2330 = vmatpush1.msra.mxu0 %v1332
    %2331 = vmatprep.subr.mxu0 %v1341
    %2332 = vmatpush1.msra.mxu0 %v1340
    %2333 = vmatprep.subr.mxu0 %v1349
    %2334 = vmatpush1.msra.mxu0 %v1348
    %2335 = vmatprep.subr.mxu0 %v1357
    %2336 = vmatpush1.msra.mxu0 %v1356
    %2337 = vmatprep.subr.mxu0 %v1365
    %2338 = vmatpush1.msra.mxu0 %v1364
    %2339 = vmatprep.subr.mxu0 %v1373
    %2340 = vmatpush1.msra.mxu0 %v1372
    %2341 = vmatprep.subr.mxu0 %v1381
    %2342 = vmatpush1.msra.mxu0 %v1380
    %2343 = vmatprep.subr.mxu0 %v1389
    %2344 = vmatpush1.msra.mxu0 %v1388
    %2345 = vmatprep.subr.mxu0 %v1397
    %2346 = vmatpush1.msra.mxu0 %v1396
    %2347 = vmatprep.subr.mxu0 %v1405
    %2348 = vmatpush1.msra.mxu0 %v1404
    %2349 = vmatprep.subr.mxu0 %v1413
    %2350 = vmatpush1.msra.mxu0 %v1412
    %2351 = vmatprep.subr.mxu0 %v1421
    %2352 = vmatpush1.msra.mxu0 %v1420
    %2353 = vmatprep.subr.mxu0 %v1429
    %2354 = vmatpush1.msra.mxu0 %v1428
    %2355 = vmatprep.subr.mxu0 %v1437
    %2356 = vmatpush1.msra.mxu0 %v1436
    %2357 = vmatprep.subr.mxu0 %v1445
    %2358 = vmatpush1.msra.mxu0 %v1444
    %2359 = vmatprep.subr.mxu0 %v1453
    %2360 = vmatpush1.msra.mxu0 %v1452
    %2361 = vmatprep.subr.mxu0 %v1461
    %2362 = vmatpush1.msra.mxu0 %v1460
    %2363 = vmatprep.subr.mxu0 %v1469
    %2364 = vmatpush1.msra.mxu0 %v1468
    %2365 = vmatprep.subr.mxu0 %v1477
    %2366 = vmatpush1.msra.mxu0 %v1476
    %2367 = vmatprep.subr.mxu0 %v1485
    %2368 = vmatpush1.msra.mxu0 %v1484
    %2369 = vmatprep.subr.mxu0 %v1493
    %2370 = vmatpush1.msra.mxu0 %v1492
    %2371 = vmatprep.subr.mxu0 %v1501
    %2372 = vmatpush1.msra.mxu0 %v1500
    %2373 = vmatprep.subr.mxu0 %v1509
    %2374 = vmatpush1.msra.mxu0 %v1508
    %2375 = vmatprep.subr.mxu0 %v1517
    %2376 = vmatpush1.msra.mxu0 %v1516
    %2377 = vmatprep.subr.mxu0 %v1525
    %2378 = vmatpush1.msra.mxu0 %v1524
    %2379 = vmatprep.subr.mxu0 %v1533
    %2380 = vmatpush1.msra.mxu0 %v1532
    %2381 = vmatprep.subr.mxu0 %v1541
    %2382 = vmatpush1.msra.mxu0 %v1540
    %2383 = vmatprep.mubr.f32.mxu0 %v2103
    %2384 = vmatmul.mubr.f32.gmra.mrb[0].mxu0 %v2102
    %v2385 = vpop.f32.mrb[0].mxu0
    %v2386 = vadd.f32 %v2091, %v2385
    %v2387 = vpop.f32.mrb[0].mxu0
    %v2388 = vadd.f32 %v2093, %v2387
    %2389 = vdwg.mxu0
    %v2390 = vld [vmem:[%s1223] sm:$0xf]
    %s2391 = scalar_lea.vmem %s7, 4096
    %v2392 = vld [vmem:[%s2391] sm:$0xff]
    %v2393 = vld [vmem:[%s2391 + $0x8] sm:$0xff]
    %v2394 = vld [vmem:[%s2391 + $0x10] sm:$0xff]
    %v2395 = vld [vmem:[%s2391 + $0x18] sm:$0xff]
    %v2396 = vld [vmem:[%s2391 + $0x20] sm:$0xff]
    %v2397 = vld [vmem:[%s2391 + $0x28] sm:$0xff]
    %v2398 = vld [vmem:[%s2391 + $0x30] sm:$0xff]
    %v2399 = vld [vmem:[%s2391 + $0x38] sm:$0xff]
    %v2400 = vld [vmem:[%s2391 + $0x40] sm:$0xff]
    %v2401 = vld [vmem:[%s2391 + $0x48] sm:$0xff]
    %v2402 = vld [vmem:[%s2391 + $0x50] sm:$0xff]
    %v2403 = vld [vmem:[%s2391 + $0x58] sm:$0xff]
    %v2404 = vld [vmem:[%s2391 + $0x60] sm:$0xff]
    %v2405 = vld [vmem:[%s2391 + $0x68] sm:$0xff]
    %v2406 = vld [vmem:[%s2391 + $0x70] sm:$0xff]
    %v2407 = vld [vmem:[%s2391 + $0x78] sm:$0xff]
    %v2408 = vld [vmem:[%s2391 + $0x80] sm:$0xff]
    %v2409 = vld [vmem:[%s2391 + $0x88] sm:$0xff]
    %v2410 = vld [vmem:[%s2391 + $0x90] sm:$0xff]
    %v2411 = vld [vmem:[%s2391 + $0x98] sm:$0xff]
    %v2412 = vld [vmem:[%s2391 + $0xa0] sm:$0xff]
    %v2413 = vld [vmem:[%s2391 + $0xa8] sm:$0xff]
    %v2414 = vld [vmem:[%s2391 + $0xb0] sm:$0xff]
    %v2415 = vld [vmem:[%s2391 + $0xb8] sm:$0xff]
    %v2416 = vld [vmem:[%s2391 + $0xc0] sm:$0xff]
    %v2417 = vld [vmem:[%s2391 + $0xc8] sm:$0xff]
    %v2418 = vld [vmem:[%s2391 + $0xd0] sm:$0xff]
    %v2419 = vld [vmem:[%s2391 + $0xd8] sm:$0xff]
    %v2420 = vld [vmem:[%s2391 + $0xe0] sm:$0xff]
    %v2421 = vld [vmem:[%s2391 + $0xe8] sm:$0xff]
    %v2422 = vld [vmem:[%s2391 + $0xf0] sm:$0xff]
    %v2423 = vld [vmem:[%s2391 + $0xf8] sm:$0xff]
    %v2424 = vld [vmem:[%s2391 + $0x100] sm:$0xff]
    %v2425 = vld [vmem:[%s2391 + $0x108] sm:$0xff]
    %v2426 = vld [vmem:[%s2391 + $0x110] sm:$0xff]
    %v2427 = vld [vmem:[%s2391 + $0x118] sm:$0xff]
    %v2428 = vld [vmem:[%s2391 + $0x120] sm:$0xff]
    %v2429 = vld [vmem:[%s2391 + $0x128] sm:$0xff]
    %v2430 = vld [vmem:[%s2391 + $0x130] sm:$0xff]
    %v2431 = vld [vmem:[%s2391 + $0x138] sm:$0xff]
    %v2432 = vld [vmem:[%s2391 + $0x140] sm:$0xff]
    %v2433 = vld [vmem:[%s2391 + $0x148] sm:$0xff]
    %v2434 = vld [vmem:[%s2391 + $0x150] sm:$0xff]
    %v2435 = vld [vmem:[%s2391 + $0x158] sm:$0xff]
    %v2436 = vld [vmem:[%s2391 + $0x160] sm:$0xff]
    %v2437 = vld [vmem:[%s2391 + $0x168] sm:$0xff]
    %v2438 = vld [vmem:[%s2391 + $0x170] sm:$0xff]
    %v2439 = vld [vmem:[%s2391 + $0x178] sm:$0xff]
    %v2440 = vld [vmem:[%s2391 + $0x180] sm:$0xff]
    %v2441 = vld [vmem:[%s2391 + $0x188] sm:$0xff]
    %v2442 = vld [vmem:[%s2391 + $0x190] sm:$0xff]
    %v2443 = vld [vmem:[%s2391 + $0x198] sm:$0xff]
    %v2444 = vld [vmem:[%s2391 + $0x1a0] sm:$0xff]
    %v2445 = vld [vmem:[%s2391 + $0x1a8] sm:$0xff]
    %v2446 = vld [vmem:[%s2391 + $0x1b0] sm:$0xff]
    %v2447 = vld [vmem:[%s2391 + $0x1b8] sm:$0xff]
    %v2448 = vld [vmem:[%s2391 + $0x1c0] sm:$0xff]
    %v2449 = vld [vmem:[%s2391 + $0x1c8] sm:$0xff]
    %v2450 = vld [vmem:[%s2391 + $0x1d0] sm:$0xff]
    %v2451 = vld [vmem:[%s2391 + $0x1d8] sm:$0xff]
    %v2452 = vld [vmem:[%s2391 + $0x1e0] sm:$0xff]
    %v2453 = vld [vmem:[%s2391 + $0x1e8] sm:$0xff]
    %v2454 = vld [vmem:[%s2391 + $0x1f0] sm:$0xff]
    %v2455 = vld [vmem:[%s2391 + $0x1f8] sm:$0xff]
    %v2456 = vld [vmem:[%s2391 + $0x200] sm:$0xff]
    %v2457 = vld [vmem:[%s2391 + $0x208] sm:$0xff]
    %v2458 = vld [vmem:[%s2391 + $0x210] sm:$0xff]
    %v2459 = vld [vmem:[%s2391 + $0x218] sm:$0xff]
    %v2460 = vld [vmem:[%s2391 + $0x220] sm:$0xff]
    %v2461 = vld [vmem:[%s2391 + $0x228] sm:$0xff]
    %v2462 = vld [vmem:[%s2391 + $0x230] sm:$0xff]
    %v2463 = vld [vmem:[%s2391 + $0x238] sm:$0xff]
    %v2464 = vld [vmem:[%s2391 + $0x240] sm:$0xff]
    %v2465 = vld [vmem:[%s2391 + $0x248] sm:$0xff]
    %v2466 = vld [vmem:[%s2391 + $0x250] sm:$0xff]
    %v2467 = vld [vmem:[%s2391 + $0x258] sm:$0xff]
    %v2468 = vld [vmem:[%s2391 + $0x260] sm:$0xff]
    %v2469 = vld [vmem:[%s2391 + $0x268] sm:$0xff]
    %v2470 = vld [vmem:[%s2391 + $0x270] sm:$0xff]
    %v2471 = vld [vmem:[%s2391 + $0x278] sm:$0xff]
    %v2472 = vld [vmem:[%s2391 + $0x280] sm:$0xff]
    %v2473 = vld [vmem:[%s2391 + $0x288] sm:$0xff]
    %v2474 = vld [vmem:[%s2391 + $0x290] sm:$0xff]
    %v2475 = vld [vmem:[%s2391 + $0x298] sm:$0xff]
    %v2476 = vld [vmem:[%s2391 + $0x2a0] sm:$0xff]
    %v2477 = vld [vmem:[%s2391 + $0x2a8] sm:$0xff]
    %v2478 = vld [vmem:[%s2391 + $0x2b0] sm:$0xff]
    %v2479 = vld [vmem:[%s2391 + $0x2b8] sm:$0xff]
    %v2480 = vld [vmem:[%s2391 + $0x2c0] sm:$0xff]
    %v2481 = vld [vmem:[%s2391 + $0x2c8] sm:$0xff]
    %v2482 = vld [vmem:[%s2391 + $0x2d0] sm:$0xff]
    %v2483 = vld [vmem:[%s2391 + $0x2d8] sm:$0xff]
    %v2484 = vld [vmem:[%s2391 + $0x2e0] sm:$0xff]
    %v2485 = vld [vmem:[%s2391 + $0x2e8] sm:$0xff]
    %v2486 = vld [vmem:[%s2391 + $0x2f0] sm:$0xff]
    %v2487 = vld [vmem:[%s2391 + $0x2f8] sm:$0xff]
    %v2488 = vld [vmem:[%s2391 + $0x300] sm:$0xff]
    %v2489 = vld [vmem:[%s2391 + $0x308] sm:$0xff]
    %v2490 = vld [vmem:[%s2391 + $0x310] sm:$0xff]
    %v2491 = vld [vmem:[%s2391 + $0x318] sm:$0xff]
    %v2492 = vld [vmem:[%s2391 + $0x320] sm:$0xff]
    %v2493 = vld [vmem:[%s2391 + $0x328] sm:$0xff]
    %v2494 = vld [vmem:[%s2391 + $0x330] sm:$0xff]
    %v2495 = vld [vmem:[%s2391 + $0x338] sm:$0xff]
    %v2496 = vld [vmem:[%s2391 + $0x340] sm:$0xff]
    %v2497 = vld [vmem:[%s2391 + $0x348] sm:$0xff]
    %v2498 = vld [vmem:[%s2391 + $0x350] sm:$0xff]
    %v2499 = vld [vmem:[%s2391 + $0x358] sm:$0xff]
    %v2500 = vld [vmem:[%s2391 + $0x360] sm:$0xff]
    %v2501 = vld [vmem:[%s2391 + $0x368] sm:$0xff]
    %v2502 = vld [vmem:[%s2391 + $0x370] sm:$0xff]
    %v2503 = vld [vmem:[%s2391 + $0x378] sm:$0xff]
    %v2504 = vld [vmem:[%s2391 + $0x380] sm:$0xff]
    %v2505 = vld [vmem:[%s2391 + $0x388] sm:$0xff]
    %v2506 = vld [vmem:[%s2391 + $0x390] sm:$0xff]
    %v2507 = vld [vmem:[%s2391 + $0x398] sm:$0xff]
    %v2508 = vld [vmem:[%s2391 + $0x3a0] sm:$0xff]
    %v2509 = vld [vmem:[%s2391 + $0x3a8] sm:$0xff]
    %v2510 = vld [vmem:[%s2391 + $0x3b0] sm:$0xff]
    %v2511 = vld [vmem:[%s2391 + $0x3b8] sm:$0xff]
    %v2512 = vld [vmem:[%s2391 + $0x3c0] sm:$0xff]
    %v2513 = vld [vmem:[%s2391 + $0x3c8] sm:$0xff]
    %v2514 = vld [vmem:[%s2391 + $0x3d0] sm:$0xff]
    %v2515 = vld [vmem:[%s2391 + $0x3d8] sm:$0xff]
    %v2516 = vld [vmem:[%s2391 + $0x3e0] sm:$0xff]
    %v2517 = vld [vmem:[%s2391 + $0x3e8] sm:$0xff]
    %v2518 = vld [vmem:[%s2391 + $0x3f0] sm:$0xff]
    %v2519 = vld [vmem:[%s2391 + $0x3f8] sm:$0xff]
    %v2520 = vld [vmem:[%s2391 + $0x400] sm:$0xff]
    %v2521 = vld [vmem:[%s2391 + $0x408] sm:$0xff]
    %v2522 = vld [vmem:[%s2391 + $0x410] sm:$0xff]
    %v2523 = vld [vmem:[%s2391 + $0x418] sm:$0xff]
    %v2524 = vld [vmem:[%s2391 + $0x420] sm:$0xff]
    %v2525 = vld [vmem:[%s2391 + $0x428] sm:$0xff]
    %v2526 = vld [vmem:[%s2391 + $0x430] sm:$0xff]
    %v2527 = vld [vmem:[%s2391 + $0x438] sm:$0xff]
    %v2528 = vld [vmem:[%s2391 + $0x440] sm:$0xff]
    %v2529 = vld [vmem:[%s2391 + $0x448] sm:$0xff]
    %v2530 = vld [vmem:[%s2391 + $0x450] sm:$0xff]
    %v2531 = vld [vmem:[%s2391 + $0x458] sm:$0xff]
    %v2532 = vld [vmem:[%s2391 + $0x460] sm:$0xff]
    %v2533 = vld [vmem:[%s2391 + $0x468] sm:$0xff]
    %v2534 = vld [vmem:[%s2391 + $0x470] sm:$0xff]
    %v2535 = vld [vmem:[%s2391 + $0x478] sm:$0xff]
    %v2536 = vld [vmem:[%s2391 + $0x480] sm:$0xff]
    %v2537 = vld [vmem:[%s2391 + $0x488] sm:$0xff]
    %v2538 = vld [vmem:[%s2391 + $0x490] sm:$0xff]
    %v2539 = vld [vmem:[%s2391 + $0x498] sm:$0xff]
    %v2540 = vld [vmem:[%s2391 + $0x4a0] sm:$0xff]
    %v2541 = vld [vmem:[%s2391 + $0x4a8] sm:$0xff]
    %v2542 = vld [vmem:[%s2391 + $0x4b0] sm:$0xff]
    %v2543 = vld [vmem:[%s2391 + $0x4b8] sm:$0xff]
    %v2544 = vld [vmem:[%s2391 + $0x4c0] sm:$0xff]
    %v2545 = vld [vmem:[%s2391 + $0x4c8] sm:$0xff]
    %v2546 = vld [vmem:[%s2391 + $0x4d0] sm:$0xff]
    %v2547 = vld [vmem:[%s2391 + $0x4d8] sm:$0xff]
    %v2548 = vld [vmem:[%s2391 + $0x4e0] sm:$0xff]
    %v2549 = vld [vmem:[%s2391 + $0x4e8] sm:$0xff]
    %v2550 = vld [vmem:[%s2391 + $0x4f0] sm:$0xff]
    %v2551 = vld [vmem:[%s2391 + $0x4f8] sm:$0xff]
    %v2552 = vld [vmem:[%s2391 + $0x500] sm:$0xff]
    %v2553 = vld [vmem:[%s2391 + $0x508] sm:$0xff]
    %v2554 = vld [vmem:[%s2391 + $0x510] sm:$0xff]
    %v2555 = vld [vmem:[%s2391 + $0x518] sm:$0xff]
    %v2556 = vld [vmem:[%s2391 + $0x520] sm:$0xff]
    %v2557 = vld [vmem:[%s2391 + $0x528] sm:$0xff]
    %v2558 = vld [vmem:[%s2391 + $0x530] sm:$0xff]
    %v2559 = vld [vmem:[%s2391 + $0x538] sm:$0xff]
    %v2560 = vld [vmem:[%s2391 + $0x540] sm:$0xff]
    %v2561 = vld [vmem:[%s2391 + $0x548] sm:$0xff]
    %v2562 = vld [vmem:[%s2391 + $0x550] sm:$0xff]
    %v2563 = vld [vmem:[%s2391 + $0x558] sm:$0xff]
    %v2564 = vld [vmem:[%s2391 + $0x560] sm:$0xff]
    %v2565 = vld [vmem:[%s2391 + $0x568] sm:$0xff]
    %v2566 = vld [vmem:[%s2391 + $0x570] sm:$0xff]
    %v2567 = vld [vmem:[%s2391 + $0x578] sm:$0xff]
    %v2568 = vld [vmem:[%s2391 + $0x580] sm:$0xff]
    %v2569 = vld [vmem:[%s2391 + $0x588] sm:$0xff]
    %v2570 = vld [vmem:[%s2391 + $0x590] sm:$0xff]
    %v2571 = vld [vmem:[%s2391 + $0x598] sm:$0xff]
    %v2572 = vld [vmem:[%s2391 + $0x5a0] sm:$0xff]
    %v2573 = vld [vmem:[%s2391 + $0x5a8] sm:$0xff]
    %v2574 = vld [vmem:[%s2391 + $0x5b0] sm:$0xff]
    %v2575 = vld [vmem:[%s2391 + $0x5b8] sm:$0xff]
    %v2576 = vld [vmem:[%s2391 + $0x5c0] sm:$0xff]
    %v2577 = vld [vmem:[%s2391 + $0x5c8] sm:$0xff]
    %v2578 = vld [vmem:[%s2391 + $0x5d0] sm:$0xff]
    %v2579 = vld [vmem:[%s2391 + $0x5d8] sm:$0xff]
    %v2580 = vld [vmem:[%s2391 + $0x5e0] sm:$0xff]
    %v2581 = vld [vmem:[%s2391 + $0x5e8] sm:$0xff]
    %v2582 = vld [vmem:[%s2391 + $0x5f0] sm:$0xff]
    %v2583 = vld [vmem:[%s2391 + $0x5f8] sm:$0xff]
    %v2584 = vld [vmem:[%s2391 + $0x600] sm:$0xff]
    %v2585 = vld [vmem:[%s2391 + $0x608] sm:$0xff]
    %v2586 = vld [vmem:[%s2391 + $0x610] sm:$0xff]
    %v2587 = vld [vmem:[%s2391 + $0x618] sm:$0xff]
    %v2588 = vld [vmem:[%s2391 + $0x620] sm:$0xff]
    %v2589 = vld [vmem:[%s2391 + $0x628] sm:$0xff]
    %v2590 = vld [vmem:[%s2391 + $0x630] sm:$0xff]
    %v2591 = vld [vmem:[%s2391 + $0x638] sm:$0xff]
    %v2592 = vld [vmem:[%s2391 + $0x640] sm:$0xff]
    %v2593 = vld [vmem:[%s2391 + $0x648] sm:$0xff]
    %v2594 = vld [vmem:[%s2391 + $0x650] sm:$0xff]
    %v2595 = vld [vmem:[%s2391 + $0x658] sm:$0xff]
    %v2596 = vld [vmem:[%s2391 + $0x660] sm:$0xff]
    %v2597 = vld [vmem:[%s2391 + $0x668] sm:$0xff]
    %v2598 = vld [vmem:[%s2391 + $0x670] sm:$0xff]
    %v2599 = vld [vmem:[%s2391 + $0x678] sm:$0xff]
    %v2600 = vld [vmem:[%s2391 + $0x680] sm:$0xff]
    %v2601 = vld [vmem:[%s2391 + $0x688] sm:$0xff]
    %v2602 = vld [vmem:[%s2391 + $0x690] sm:$0xff]
    %v2603 = vld [vmem:[%s2391 + $0x698] sm:$0xff]
    %v2604 = vld [vmem:[%s2391 + $0x6a0] sm:$0xff]
    %v2605 = vld [vmem:[%s2391 + $0x6a8] sm:$0xff]
    %v2606 = vld [vmem:[%s2391 + $0x6b0] sm:$0xff]
    %v2607 = vld [vmem:[%s2391 + $0x6b8] sm:$0xff]
    %v2608 = vld [vmem:[%s2391 + $0x6c0] sm:$0xff]
    %v2609 = vld [vmem:[%s2391 + $0x6c8] sm:$0xff]
    %v2610 = vld [vmem:[%s2391 + $0x6d0] sm:$0xff]
    %v2611 = vld [vmem:[%s2391 + $0x6d8] sm:$0xff]
    %v2612 = vld [vmem:[%s2391 + $0x6e0] sm:$0xff]
    %v2613 = vld [vmem:[%s2391 + $0x6e8] sm:$0xff]
    %v2614 = vld [vmem:[%s2391 + $0x6f0] sm:$0xff]
    %v2615 = vld [vmem:[%s2391 + $0x6f8] sm:$0xff]
    %v2616 = vld [vmem:[%s2391 + $0x700] sm:$0xff]
    %v2617 = vld [vmem:[%s2391 + $0x708] sm:$0xff]
    %v2618 = vld [vmem:[%s2391 + $0x710] sm:$0xff]
    %v2619 = vld [vmem:[%s2391 + $0x718] sm:$0xff]
    %v2620 = vld [vmem:[%s2391 + $0x720] sm:$0xff]
    %v2621 = vld [vmem:[%s2391 + $0x728] sm:$0xff]
    %v2622 = vld [vmem:[%s2391 + $0x730] sm:$0xff]
    %v2623 = vld [vmem:[%s2391 + $0x738] sm:$0xff]
    %v2624 = vld [vmem:[%s2391 + $0x740] sm:$0xff]
    %v2625 = vld [vmem:[%s2391 + $0x748] sm:$0xff]
    %v2626 = vld [vmem:[%s2391 + $0x750] sm:$0xff]
    %v2627 = vld [vmem:[%s2391 + $0x758] sm:$0xff]
    %v2628 = vld [vmem:[%s2391 + $0x760] sm:$0xff]
    %v2629 = vld [vmem:[%s2391 + $0x768] sm:$0xff]
    %v2630 = vld [vmem:[%s2391 + $0x770] sm:$0xff]
    %v2631 = vld [vmem:[%s2391 + $0x778] sm:$0xff]
    %v2632 = vld [vmem:[%s2391 + $0x780] sm:$0xff]
    %v2633 = vld [vmem:[%s2391 + $0x788] sm:$0xff]
    %v2634 = vld [vmem:[%s2391 + $0x790] sm:$0xff]
    %v2635 = vld [vmem:[%s2391 + $0x798] sm:$0xff]
    %v2636 = vld [vmem:[%s2391 + $0x7a0] sm:$0xff]
    %v2637 = vld [vmem:[%s2391 + $0x7a8] sm:$0xff]
    %v2638 = vld [vmem:[%s2391 + $0x7b0] sm:$0xff]
    %v2639 = vld [vmem:[%s2391 + $0x7b8] sm:$0xff]
    %v2640 = vld [vmem:[%s2391 + $0x7c0] sm:$0xff]
    %v2641 = vld [vmem:[%s2391 + $0x7c8] sm:$0xff]
    %v2642 = vld [vmem:[%s2391 + $0x7d0] sm:$0xff]
    %v2643 = vld [vmem:[%s2391 + $0x7d8] sm:$0xff]
    %v2644 = vld [vmem:[%s2391 + $0x7e0] sm:$0xff]
    %v2645 = vld [vmem:[%s2391 + $0x7e8] sm:$0xff]
    %v2646 = vld [vmem:[%s2391 + $0x7f0] sm:$0xff]
    %v2647 = vld [vmem:[%s2391 + $0x7f8] sm:$0xff]
    %v2650 = vunpack.c.l.s4 1983009808
    %v2651 = vunpack.c.0.s8 %v2650
    %v2652 = vlaneseq
    %v2653 = vshrl.u32 %v2652, 7
    %v2654 = vsub.s32 %v2651, %v2653
    %v2655 = vrot.slane %v2390, %v2654
    %v2656 = vcombine.high %v2655, %v2655
    %2659 = vmatprep.subr.mxu0 %v2393
    %2660 = vmatpush1.msra.mxu0 %v2392
    %2661 = vmatprep.subr.mxu0 %v2401
    %2662 = vmatpush1.msra.mxu0 %v2400
    %2663 = vmatprep.subr.mxu0 %v2409
    %2664 = vmatpush1.msra.mxu0 %v2408
    %2665 = vmatprep.subr.mxu0 %v2417
    %2666 = vmatpush1.msra.mxu0 %v2416
    %2667 = vmatprep.subr.mxu0 %v2425
    %2668 = vmatpush1.msra.mxu0 %v2424
    %2669 = vmatprep.subr.mxu0 %v2433
    %2670 = vmatpush1.msra.mxu0 %v2432
    %2671 = vmatprep.subr.mxu0 %v2441
    %2672 = vmatpush1.msra.mxu0 %v2440
    %2673 = vmatprep.subr.mxu0 %v2449
    %2674 = vmatpush1.msra.mxu0 %v2448
    %2675 = vmatprep.subr.mxu0 %v2457
    %2676 = vmatpush1.msra.mxu0 %v2456
    %2677 = vmatprep.subr.mxu0 %v2465
    %2678 = vmatpush1.msra.mxu0 %v2464
    %2679 = vmatprep.subr.mxu0 %v2473
    %2680 = vmatpush1.msra.mxu0 %v2472
    %2681 = vmatprep.subr.mxu0 %v2481
    %2682 = vmatpush1.msra.mxu0 %v2480
    %2683 = vmatprep.subr.mxu0 %v2489
    %2684 = vmatpush1.msra.mxu0 %v2488
    %2685 = vmatprep.subr.mxu0 %v2497
    %2686 = vmatpush1.msra.mxu0 %v2496
    %2687 = vmatprep.subr.mxu0 %v2505
    %2688 = vmatpush1.msra.mxu0 %v2504
    %2689 = vmatprep.subr.mxu0 %v2513
    %2690 = vmatpush1.msra.mxu0 %v2512
    %2691 = vmatprep.subr.mxu0 %v2521
    %2692 = vmatpush1.msra.mxu0 %v2520
    %2693 = vmatprep.subr.mxu0 %v2529
    %2694 = vmatpush1.msra.mxu0 %v2528
    %2695 = vmatprep.subr.mxu0 %v2537
    %2696 = vmatpush1.msra.mxu0 %v2536
    %2697 = vmatprep.subr.mxu0 %v2545
    %2698 = vmatpush1.msra.mxu0 %v2544
    %2699 = vmatprep.subr.mxu0 %v2553
    %2700 = vmatpush1.msra.mxu0 %v2552
    %2701 = vmatprep.subr.mxu0 %v2561
    %2702 = vmatpush1.msra.mxu0 %v2560
    %2703 = vmatprep.subr.mxu0 %v2569
    %2704 = vmatpush1.msra.mxu0 %v2568
    %2705 = vmatprep.subr.mxu0 %v2577
    %2706 = vmatpush1.msra.mxu0 %v2576
    %2707 = vmatprep.subr.mxu0 %v2585
    %2708 = vmatpush1.msra.mxu0 %v2584
    %2709 = vmatprep.subr.mxu0 %v2593
    %2710 = vmatpush1.msra.mxu0 %v2592
    %2711 = vmatprep.subr.mxu0 %v2601
    %2712 = vmatpush1.msra.mxu0 %v2600
    %2713 = vmatprep.subr.mxu0 %v2609
    %2714 = vmatpush1.msra.mxu0 %v2608
    %2715 = vmatprep.subr.mxu0 %v2617
    %2716 = vmatpush1.msra.mxu0 %v2616
    %2717 = vmatprep.subr.mxu0 %v2625
    %2718 = vmatpush1.msra.mxu0 %v2624
    %2719 = vmatprep.subr.mxu0 %v2633
    %2720 = vmatpush1.msra.mxu0 %v2632
    %2721 = vmatprep.subr.mxu0 %v2641
    %2722 = vmatpush1.msra.mxu0 %v2640
    %2723 = vmatprep.mubr.f32.mxu0 %v2656
    %2724 = vmatmul.mubr.f32.gmra.mrb[0].mxu0 %v2655
    %v2725 = vpop.f32.mrb[0].mxu0
    %v2726 = vadd.f32 0.0, %v2725
    %v2727 = vpop.f32.mrb[0].mxu0
    %v2728 = vadd.f32 0.0, %v2727
    %2729 = vdwg.mxu0
    %2730 = vmatprep.subr.mxu0 %v2395
    %2731 = vmatpush1.msra.mxu0 %v2394
    %2732 = vmatprep.subr.mxu0 %v2403
    %2733 = vmatpush1.msra.mxu0 %v2402
    %2734 = vmatprep.subr.mxu0 %v2411
    %2735 = vmatpush1.msra.mxu0 %v2410
    %2736 = vmatprep.subr.mxu0 %v2419
    %2737 = vmatpush1.msra.mxu0 %v2418
    %2738 = vmatprep.subr.mxu0 %v2427
    %2739 = vmatpush1.msra.mxu0 %v2426
    %2740 = vmatprep.subr.mxu0 %v2435
    %2741 = vmatpush1.msra.mxu0 %v2434
    %2742 = vmatprep.subr.mxu0 %v2443
    %2743 = vmatpush1.msra.mxu0 %v2442
    %2744 = vmatprep.subr.mxu0 %v2451
    %2745 = vmatpush1.msra.mxu0 %v2450
    %2746 = vmatprep.subr.mxu0 %v2459
    %2747 = vmatpush1.msra.mxu0 %v2458
    %2748 = vmatprep.subr.mxu0 %v2467
    %2749 = vmatpush1.msra.mxu0 %v2466
    %2750 = vmatprep.subr.mxu0 %v2475
    %2751 = vmatpush1.msra.mxu0 %v2474
    %2752 = vmatprep.subr.mxu0 %v2483
    %2753 = vmatpush1.msra.mxu0 %v2482
    %2754 = vmatprep.subr.mxu0 %v2491
    %2755 = vmatpush1.msra.mxu0 %v2490
    %2756 = vmatprep.subr.mxu0 %v2499
    %2757 = vmatpush1.msra.mxu0 %v2498
    %2758 = vmatprep.subr.mxu0 %v2507
    %2759 = vmatpush1.msra.mxu0 %v2506
    %2760 = vmatprep.subr.mxu0 %v2515
    %2761 = vmatpush1.msra.mxu0 %v2514
    %2762 = vmatprep.subr.mxu0 %v2523
    %2763 = vmatpush1.msra.mxu0 %v2522
    %2764 = vmatprep.subr.mxu0 %v2531
    %2765 = vmatpush1.msra.mxu0 %v2530
    %2766 = vmatprep.subr.mxu0 %v2539
    %2767 = vmatpush1.msra.mxu0 %v2538
    %2768 = vmatprep.subr.mxu0 %v2547
    %2769 = vmatpush1.msra.mxu0 %v2546
    %2770 = vmatprep.subr.mxu0 %v2555
    %2771 = vmatpush1.msra.mxu0 %v2554
    %2772 = vmatprep.subr.mxu0 %v2563
    %2773 = vmatpush1.msra.mxu0 %v2562
    %2774 = vmatprep.subr.mxu0 %v2571
    %2775 = vmatpush1.msra.mxu0 %v2570
    %2776 = vmatprep.subr.mxu0 %v2579
    %2777 = vmatpush1.msra.mxu0 %v2578
    %2778 = vmatprep.subr.mxu0 %v2587
    %2779 = vmatpush1.msra.mxu0 %v2586
    %2780 = vmatprep.subr.mxu0 %v2595
    %2781 = vmatpush1.msra.mxu0 %v2594
    %2782 = vmatprep.subr.mxu0 %v2603
    %2783 = vmatpush1.msra.mxu0 %v2602
    %2784 = vmatprep.subr.mxu0 %v2611
    %2785 = vmatpush1.msra.mxu0 %v2610
    %2786 = vmatprep.subr.mxu0 %v2619
    %2787 = vmatpush1.msra.mxu0 %v2618
    %2788 = vmatprep.subr.mxu0 %v2627
    %2789 = vmatpush1.msra.mxu0 %v2626
    %2790 = vmatprep.subr.mxu0 %v2635
    %2791 = vmatpush1.msra.mxu0 %v2634
    %2792 = vmatprep.subr.mxu0 %v2643
    %2793 = vmatpush1.msra.mxu0 %v2642
    %2794 = vmatprep.mubr.f32.mxu0 %v2656
    %2795 = vmatmul.mubr.f32.gmra.mrb[0].mxu0 %v2655
    %v2796 = vpop.f32.mrb[0].mxu0
    %v2797 = vadd.f32 0.0, %v2796
    %v2798 = vpop.f32.mrb[0].mxu0
    %v2799 = vadd.f32 0.0, %v2798
    %2800 = vdwg.mxu0
    %2801 = vmatprep.subr.mxu0 %v2397
    %2802 = vmatpush1.msra.mxu0 %v2396
    %2803 = vmatprep.subr.mxu0 %v2405
    %2804 = vmatpush1.msra.mxu0 %v2404
    %2805 = vmatprep.subr.mxu0 %v2413
    %2806 = vmatpush1.msra.mxu0 %v2412
    %2807 = vmatprep.subr.mxu0 %v2421
    %2808 = vmatpush1.msra.mxu0 %v2420
    %2809 = vmatprep.subr.mxu0 %v2429
    %2810 = vmatpush1.msra.mxu0 %v2428
    %2811 = vmatprep.subr.mxu0 %v2437
    %2812 = vmatpush1.msra.mxu0 %v2436
    %2813 = vmatprep.subr.mxu0 %v2445
    %2814 = vmatpush1.msra.mxu0 %v2444
    %2815 = vmatprep.subr.mxu0 %v2453
    %2816 = vmatpush1.msra.mxu0 %v2452
    %2817 = vmatprep.subr.mxu0 %v2461
    %2818 = vmatpush1.msra.mxu0 %v2460
    %2819 = vmatprep.subr.mxu0 %v2469
    %2820 = vmatpush1.msra.mxu0 %v2468
    %2821 = vmatprep.subr.mxu0 %v2477
    %2822 = vmatpush1.msra.mxu0 %v2476
    %2823 = vmatprep.subr.mxu0 %v2485
    %2824 = vmatpush1.msra.mxu0 %v2484
    %2825 = vmatprep.subr.mxu0 %v2493
    %2826 = vmatpush1.msra.mxu0 %v2492
    %2827 = vmatprep.subr.mxu0 %v2501
    %2828 = vmatpush1.msra.mxu0 %v2500
    %2829 = vmatprep.subr.mxu0 %v2509
    %2830 = vmatpush1.msra.mxu0 %v2508
    %2831 = vmatprep.subr.mxu0 %v2517
    %2832 = vmatpush1.msra.mxu0 %v2516
    %2833 = vmatprep.subr.mxu0 %v2525
    %2834 = vmatpush1.msra.mxu0 %v2524
    %2835 = vmatprep.subr.mxu0 %v2533
    %2836 = vmatpush1.msra.mxu0 %v2532
    %2837 = vmatprep.subr.mxu0 %v2541
    %2838 = vmatpush1.msra.mxu0 %v2540
    %2839 = vmatprep.subr.mxu0 %v2549
    %2840 = vmatpush1.msra.mxu0 %v2548
    %2841 = vmatprep.subr.mxu0 %v2557
    %2842 = vmatpush1.msra.mxu0 %v2556
    %2843 = vmatprep.subr.mxu0 %v2565
    %2844 = vmatpush1.msra.mxu0 %v2564
    %2845 = vmatprep.subr.mxu0 %v2573
    %2846 = vmatpush1.msra.mxu0 %v2572
    %2847 = vmatprep.subr.mxu0 %v2581
    %2848 = vmatpush1.msra.mxu0 %v2580
    %2849 = vmatprep.subr.mxu0 %v2589
    %2850 = vmatpush1.msra.mxu0 %v2588
    %2851 = vmatprep.subr.mxu0 %v2597
    %2852 = vmatpush1.msra.mxu0 %v2596
    %2853 = vmatprep.subr.mxu0 %v2605
    %2854 = vmatpush1.msra.mxu0 %v2604
    %2855 = vmatprep.subr.mxu0 %v2613
    %2856 = vmatpush1.msra.mxu0 %v2612
    %2857 = vmatprep.subr.mxu0 %v2621
    %2858 = vmatpush1.msra.mxu0 %v2620
    %2859 = vmatprep.subr.mxu0 %v2629
    %2860 = vmatpush1.msra.mxu0 %v2628
    %2861 = vmatprep.subr.mxu0 %v2637
    %2862 = vmatpush1.msra.mxu0 %v2636
    %2863 = vmatprep.subr.mxu0 %v2645
    %2864 = vmatpush1.msra.mxu0 %v2644
    %2865 = vmatprep.mubr.f32.mxu0 %v2656
    %2866 = vmatmul.mubr.f32.gmra.mrb[0].mxu0 %v2655
    %v2867 = vpop.f32.mrb[0].mxu0
    %v2868 = vadd.f32 0.0, %v2867
    %v2869 = vpop.f32.mrb[0].mxu0
    %v2870 = vadd.f32 0.0, %v2869
    %2871 = vdwg.mxu0
    %2872 = vmatprep.subr.mxu0 %v2399
    %2873 = vmatpush1.msra.mxu0 %v2398
    %2874 = vmatprep.subr.mxu0 %v2407
    %2875 = vmatpush1.msra.mxu0 %v2406
    %2876 = vmatprep.subr.mxu0 %v2415
    %2877 = vmatpush1.msra.mxu0 %v2414
    %2878 = vmatprep.subr.mxu0 %v2423
    %2879 = vmatpush1.msra.mxu0 %v2422
    %2880 = vmatprep.subr.mxu0 %v2431
    %2881 = vmatpush1.msra.mxu0 %v2430
    %2882 = vmatprep.subr.mxu0 %v2439
    %2883 = vmatpush1.msra.mxu0 %v2438
    %2884 = vmatprep.subr.mxu0 %v2447
    %2885 = vmatpush1.msra.mxu0 %v2446
    %2886 = vmatprep.subr.mxu0 %v2455
    %2887 = vmatpush1.msra.mxu0 %v2454
    %2888 = vmatprep.subr.mxu0 %v2463
    %2889 = vmatpush1.msra.mxu0 %v2462
    %2890 = vmatprep.subr.mxu0 %v2471
    %2891 = vmatpush1.msra.mxu0 %v2470
    %2892 = vmatprep.subr.mxu0 %v2479
    %2893 = vmatpush1.msra.mxu0 %v2478
    %2894 = vmatprep.subr.mxu0 %v2487
    %2895 = vmatpush1.msra.mxu0 %v2486
    %2896 = vmatprep.subr.mxu0 %v2495
    %2897 = vmatpush1.msra.mxu0 %v2494
    %2898 = vmatprep.subr.mxu0 %v2503
    %2899 = vmatpush1.msra.mxu0 %v2502
    %2900 = vmatprep.subr.mxu0 %v2511
    %2901 = vmatpush1.msra.mxu0 %v2510
    %2902 = vmatprep.subr.mxu0 %v2519
    %2903 = vmatpush1.msra.mxu0 %v2518
    %2904 = vmatprep.subr.mxu0 %v2527
    %2905 = vmatpush1.msra.mxu0 %v2526
    %2906 = vmatprep.subr.mxu0 %v2535
    %2907 = vmatpush1.msra.mxu0 %v2534
    %2908 = vmatprep.subr.mxu0 %v2543
    %2909 = vmatpush1.msra.mxu0 %v2542
    %2910 = vmatprep.subr.mxu0 %v2551
    %2911 = vmatpush1.msra.mxu0 %v2550
    %2912 = vmatprep.subr.mxu0 %v2559
    %2913 = vmatpush1.msra.mxu0 %v2558
    %2914 = vmatprep.subr.mxu0 %v2567
    %2915 = vmatpush1.msra.mxu0 %v2566
    %2916 = vmatprep.subr.mxu0 %v2575
    %2917 = vmatpush1.msra.mxu0 %v2574
    %2918 = vmatprep.subr.mxu0 %v2583
    %2919 = vmatpush1.msra.mxu0 %v2582
    %2920 = vmatprep.subr.mxu0 %v2591
    %2921 = vmatpush1.msra.mxu0 %v2590
    %2922 = vmatprep.subr.mxu0 %v2599
    %2923 = vmatpush1.msra.mxu0 %v2598
    %2924 = vmatprep.subr.mxu0 %v2607
    %2925 = vmatpush1.msra.mxu0 %v2606
    %2926 = vmatprep.subr.mxu0 %v2615
    %2927 = vmatpush1.msra.mxu0 %v2614
    %2928 = vmatprep.subr.mxu0 %v2623
    %2929 = vmatpush1.msra.mxu0 %v2622
    %2930 = vmatprep.subr.mxu0 %v2631
    %2931 = vmatpush1.msra.mxu0 %v2630
    %2932 = vmatprep.subr.mxu0 %v2639
    %2933 = vmatpush1.msra.mxu0 %v2638
    %2934 = vmatprep.subr.mxu0 %v2647
    %2935 = vmatpush1.msra.mxu0 %v2646
    %2936 = vmatprep.mubr.f32.mxu0 %v2656
    %2937 = vmatmul.mubr.f32.gmra.mrb[0].mxu0 %v2655
    %v2938 = vpop.f32.mrb[0].mxu0
    %v2939 = vadd.f32 0.0, %v2938
    %v2940 = vpop.f32.mrb[0].mxu0
    %v2941 = vadd.f32 0.0, %v2940
    %2942 = vdwg.mxu0
    %v2943 = vadd.f32 %v2173, %v2726
    %v2944 = vadd.f32 %v2175, %v2728
    %v2945 = vadd.f32 %v2244, %v2797
    %v2946 = vadd.f32 %v2246, %v2799
    %v2947 = vadd.f32 %v2315, %v2868
    %v2948 = vadd.f32 %v2317, %v2870
    %v2949 = vadd.f32 %v2386, %v2939
    %v2950 = vadd.f32 %v2388, %v2941
    %v2951 = vld [vmem:[%s1227] sm:$0xf]
    %s2952 = scalar_lea.vmem %s7, 6144
    %v2953 = vld [vmem:[%s2952] sm:$0xff]
    %v2954 = vld [vmem:[%s2952 + $0x8] sm:$0xff]
    %v2955 = vld [vmem:[%s2952 + $0x10] sm:$0xff]
    %v2956 = vld [vmem:[%s2952 + $0x18] sm:$0xff]
    %v2957 = vld [vmem:[%s2952 + $0x20] sm:$0xff]
    %v2958 = vld [vmem:[%s2952 + $0x28] sm:$0xff]
    %v2959 = vld [vmem:[%s2952 + $0x30] sm:$0xff]
    %v2960 = vld [vmem:[%s2952 + $0x38] sm:$0xff]
    %v2961 = vld [vmem:[%s2952 + $0x40] sm:$0xff]
    %v2962 = vld [vmem:[%s2952 + $0x48] sm:$0xff]
    %v2963 = vld [vmem:[%s2952 + $0x50] sm:$0xff]
    %v2964 = vld [vmem:[%s2952 + $0x58] sm:$0xff]
    %v2965 = vld [vmem:[%s2952 + $0x60] sm:$0xff]
    %v2966 = vld [vmem:[%s2952 + $0x68] sm:$0xff]
    %v2967 = vld [vmem:[%s2952 + $0x70] sm:$0xff]
    %v2968 = vld [vmem:[%s2952 + $0x78] sm:$0xff]
    %v2969 = vld [vmem:[%s2952 + $0x80] sm:$0xff]
    %v2970 = vld [vmem:[%s2952 + $0x88] sm:$0xff]
    %v2971 = vld [vmem:[%s2952 + $0x90] sm:$0xff]
    %v2972 = vld [vmem:[%s2952 + $0x98] sm:$0xff]
    %v2973 = vld [vmem:[%s2952 + $0xa0] sm:$0xff]
    %v2974 = vld [vmem:[%s2952 + $0xa8] sm:$0xff]
    %v2975 = vld [vmem:[%s2952 + $0xb0] sm:$0xff]
    %v2976 = vld [vmem:[%s2952 + $0xb8] sm:$0xff]
    %v2977 = vld [vmem:[%s2952 + $0xc0] sm:$0xff]
    %v2978 = vld [vmem:[%s2952 + $0xc8] sm:$0xff]
    %v2979 = vld [vmem:[%s2952 + $0xd0] sm:$0xff]
    %v2980 = vld [vmem:[%s2952 + $0xd8] sm:$0xff]
    %v2981 = vld [vmem:[%s2952 + $0xe0] sm:$0xff]
    %v2982 = vld [vmem:[%s2952 + $0xe8] sm:$0xff]
    %v2983 = vld [vmem:[%s2952 + $0xf0] sm:$0xff]
    %v2984 = vld [vmem:[%s2952 + $0xf8] sm:$0xff]
    %v2985 = vld [vmem:[%s2952 + $0x100] sm:$0xff]
    %v2986 = vld [vmem:[%s2952 + $0x108] sm:$0xff]
    %v2987 = vld [vmem:[%s2952 + $0x110] sm:$0xff]
    %v2988 = vld [vmem:[%s2952 + $0x118] sm:$0xff]
    %v2989 = vld [vmem:[%s2952 + $0x120] sm:$0xff]
    %v2990 = vld [vmem:[%s2952 + $0x128] sm:$0xff]
    %v2991 = vld [vmem:[%s2952 + $0x130] sm:$0xff]
    %v2992 = vld [vmem:[%s2952 + $0x138] sm:$0xff]
    %v2993 = vld [vmem:[%s2952 + $0x140] sm:$0xff]
    %v2994 = vld [vmem:[%s2952 + $0x148] sm:$0xff]
    %v2995 = vld [vmem:[%s2952 + $0x150] sm:$0xff]
    %v2996 = vld [vmem:[%s2952 + $0x158] sm:$0xff]
    %v2997 = vld [vmem:[%s2952 + $0x160] sm:$0xff]
    %v2998 = vld [vmem:[%s2952 + $0x168] sm:$0xff]
    %v2999 = vld [vmem:[%s2952 + $0x170] sm:$0xff]
    %v3000 = vld [vmem:[%s2952 + $0x178] sm:$0xff]
    %v3001 = vld [vmem:[%s2952 + $0x180] sm:$0xff]
    %v3002 = vld [vmem:[%s2952 + $0x188] sm:$0xff]
    %v3003 = vld [vmem:[%s2952 + $0x190] sm:$0xff]
    %v3004 = vld [vmem:[%s2952 + $0x198] sm:$0xff]
    %v3005 = vld [vmem:[%s2952 + $0x1a0] sm:$0xff]
    %v3006 = vld [vmem:[%s2952 + $0x1a8] sm:$0xff]
    %v3007 = vld [vmem:[%s2952 + $0x1b0] sm:$0xff]
    %v3008 = vld [vmem:[%s2952 + $0x1b8] sm:$0xff]
    %v3009 = vld [vmem:[%s2952 + $0x1c0] sm:$0xff]
    %v3010 = vld [vmem:[%s2952 + $0x1c8] sm:$0xff]
    %v3011 = vld [vmem:[%s2952 + $0x1d0] sm:$0xff]
    %v3012 = vld [vmem:[%s2952 + $0x1d8] sm:$0xff]
    %v3013 = vld [vmem:[%s2952 + $0x1e0] sm:$0xff]
    %v3014 = vld [vmem:[%s2952 + $0x1e8] sm:$0xff]
    %v3015 = vld [vmem:[%s2952 + $0x1f0] sm:$0xff]
    %v3016 = vld [vmem:[%s2952 + $0x1f8] sm:$0xff]
    %v3017 = vld [vmem:[%s2952 + $0x200] sm:$0xff]
    %v3018 = vld [vmem:[%s2952 + $0x208] sm:$0xff]
    %v3019 = vld [vmem:[%s2952 + $0x210] sm:$0xff]
    %v3020 = vld [vmem:[%s2952 + $0x218] sm:$0xff]
    %v3021 = vld [vmem:[%s2952 + $0x220] sm:$0xff]
    %v3022 = vld [vmem:[%s2952 + $0x228] sm:$0xff]
    %v3023 = vld [vmem:[%s2952 + $0x230] sm:$0xff]
    %v3024 = vld [vmem:[%s2952 + $0x238] sm:$0xff]
    %v3025 = vld [vmem:[%s2952 + $0x240] sm:$0xff]
    %v3026 = vld [vmem:[%s2952 + $0x248] sm:$0xff]
    %v3027 = vld [vmem:[%s2952 + $0x250] sm:$0xff]
    %v3028 = vld [vmem:[%s2952 + $0x258] sm:$0xff]
    %v3029 = vld [vmem:[%s2952 + $0x260] sm:$0xff]
    %v3030 = vld [vmem:[%s2952 + $0x268] sm:$0xff]
    %v3031 = vld [vmem:[%s2952 + $0x270] sm:$0xff]
    %v3032 = vld [vmem:[%s2952 + $0x278] sm:$0xff]
    %v3033 = vld [vmem:[%s2952 + $0x280] sm:$0xff]
    %v3034 = vld [vmem:[%s2952 + $0x288] sm:$0xff]
    %v3035 = vld [vmem:[%s2952 + $0x290] sm:$0xff]
    %v3036 = vld [vmem:[%s2952 + $0x298] sm:$0xff]
    %v3037 = vld [vmem:[%s2952 + $0x2a0] sm:$0xff]
    %v3038 = vld [vmem:[%s2952 + $0x2a8] sm:$0xff]
    %v3039 = vld [vmem:[%s2952 + $0x2b0] sm:$0xff]
    %v3040 = vld [vmem:[%s2952 + $0x2b8] sm:$0xff]
    %v3041 = vld [vmem:[%s2952 + $0x2c0] sm:$0xff]
    %v3042 = vld [vmem:[%s2952 + $0x2c8] sm:$0xff]
    %v3043 = vld [vmem:[%s2952 + $0x2d0] sm:$0xff]
    %v3044 = vld [vmem:[%s2952 + $0x2d8] sm:$0xff]
    %v3045 = vld [vmem:[%s2952 + $0x2e0] sm:$0xff]
    %v3046 = vld [vmem:[%s2952 + $0x2e8] sm:$0xff]
    %v3047 = vld [vmem:[%s2952 + $0x2f0] sm:$0xff]
    %v3048 = vld [vmem:[%s2952 + $0x2f8] sm:$0xff]
    %v3049 = vld [vmem:[%s2952 + $0x300] sm:$0xff]
    %v3050 = vld [vmem:[%s2952 + $0x308] sm:$0xff]
    %v3051 = vld [vmem:[%s2952 + $0x310] sm:$0xff]
    %v3052 = vld [vmem:[%s2952 + $0x318] sm:$0xff]
    %v3053 = vld [vmem:[%s2952 + $0x320] sm:$0xff]
    %v3054 = vld [vmem:[%s2952 + $0x328] sm:$0xff]
    %v3055 = vld [vmem:[%s2952 + $0x330] sm:$0xff]
    %v3056 = vld [vmem:[%s2952 + $0x338] sm:$0xff]
    %v3057 = vld [vmem:[%s2952 + $0x340] sm:$0xff]
    %v3058 = vld [vmem:[%s2952 + $0x348] sm:$0xff]
    %v3059 = vld [vmem:[%s2952 + $0x350] sm:$0xff]
    %v3060 = vld [vmem:[%s2952 + $0x358] sm:$0xff]
    %v3061 = vld [vmem:[%s2952 + $0x360] sm:$0xff]
    %v3062 = vld [vmem:[%s2952 + $0x368] sm:$0xff]
    %v3063 = vld [vmem:[%s2952 + $0x370] sm:$0xff]
    %v3064 = vld [vmem:[%s2952 + $0x378] sm:$0xff]
    %v3065 = vld [vmem:[%s2952 + $0x380] sm:$0xff]
    %v3066 = vld [vmem:[%s2952 + $0x388] sm:$0xff]
    %v3067 = vld [vmem:[%s2952 + $0x390] sm:$0xff]
    %v3068 = vld [vmem:[%s2952 + $0x398] sm:$0xff]
    %v3069 = vld [vmem:[%s2952 + $0x3a0] sm:$0xff]
    %v3070 = vld [vmem:[%s2952 + $0x3a8] sm:$0xff]
    %v3071 = vld [vmem:[%s2952 + $0x3b0] sm:$0xff]
    %v3072 = vld [vmem:[%s2952 + $0x3b8] sm:$0xff]
    %v3073 = vld [vmem:[%s2952 + $0x3c0] sm:$0xff]
    %v3074 = vld [vmem:[%s2952 + $0x3c8] sm:$0xff]
    %v3075 = vld [vmem:[%s2952 + $0x3d0] sm:$0xff]
    %v3076 = vld [vmem:[%s2952 + $0x3d8] sm:$0xff]
    %v3077 = vld [vmem:[%s2952 + $0x3e0] sm:$0xff]
    %v3078 = vld [vmem:[%s2952 + $0x3e8] sm:$0xff]
    %v3079 = vld [vmem:[%s2952 + $0x3f0] sm:$0xff]
    %v3080 = vld [vmem:[%s2952 + $0x3f8] sm:$0xff]
    %v3081 = vld [vmem:[%s2952 + $0x400] sm:$0xff]
    %v3082 = vld [vmem:[%s2952 + $0x408] sm:$0xff]
    %v3083 = vld [vmem:[%s2952 + $0x410] sm:$0xff]
    %v3084 = vld [vmem:[%s2952 + $0x418] sm:$0xff]
    %v3085 = vld [vmem:[%s2952 + $0x420] sm:$0xff]
    %v3086 = vld [vmem:[%s2952 + $0x428] sm:$0xff]
    %v3087 = vld [vmem:[%s2952 + $0x430] sm:$0xff]
    %v3088 = vld [vmem:[%s2952 + $0x438] sm:$0xff]
    %v3089 = vld [vmem:[%s2952 + $0x440] sm:$0xff]
    %v3090 = vld [vmem:[%s2952 + $0x448] sm:$0xff]
    %v3091 = vld [vmem:[%s2952 + $0x450] sm:$0xff]
    %v3092 = vld [vmem:[%s2952 + $0x458] sm:$0xff]
    %v3093 = vld [vmem:[%s2952 + $0x460] sm:$0xff]
    %v3094 = vld [vmem:[%s2952 + $0x468] sm:$0xff]
    %v3095 = vld [vmem:[%s2952 + $0x470] sm:$0xff]
    %v3096 = vld [vmem:[%s2952 + $0x478] sm:$0xff]
    %v3097 = vld [vmem:[%s2952 + $0x480] sm:$0xff]
    %v3098 = vld [vmem:[%s2952 + $0x488] sm:$0xff]
    %v3099 = vld [vmem:[%s2952 + $0x490] sm:$0xff]
    %v3100 = vld [vmem:[%s2952 + $0x498] sm:$0xff]
    %v3101 = vld [vmem:[%s2952 + $0x4a0] sm:$0xff]
    %v3102 = vld [vmem:[%s2952 + $0x4a8] sm:$0xff]
    %v3103 = vld [vmem:[%s2952 + $0x4b0] sm:$0xff]
    %v3104 = vld [vmem:[%s2952 + $0x4b8] sm:$0xff]
    %v3105 = vld [vmem:[%s2952 + $0x4c0] sm:$0xff]
    %v3106 = vld [vmem:[%s2952 + $0x4c8] sm:$0xff]
    %v3107 = vld [vmem:[%s2952 + $0x4d0] sm:$0xff]
    %v3108 = vld [vmem:[%s2952 + $0x4d8] sm:$0xff]
    %v3109 = vld [vmem:[%s2952 + $0x4e0] sm:$0xff]
    %v3110 = vld [vmem:[%s2952 + $0x4e8] sm:$0xff]
    %v3111 = vld [vmem:[%s2952 + $0x4f0] sm:$0xff]
    %v3112 = vld [vmem:[%s2952 + $0x4f8] sm:$0xff]
    %v3113 = vld [vmem:[%s2952 + $0x500] sm:$0xff]
    %v3114 = vld [vmem:[%s2952 + $0x508] sm:$0xff]
    %v3115 = vld [vmem:[%s2952 + $0x510] sm:$0xff]
    %v3116 = vld [vmem:[%s2952 + $0x518] sm:$0xff]
    %v3117 = vld [vmem:[%s2952 + $0x520] sm:$0xff]
    %v3118 = vld [vmem:[%s2952 + $0x528] sm:$0xff]
    %v3119 = vld [vmem:[%s2952 + $0x530] sm:$0xff]
    %v3120 = vld [vmem:[%s2952 + $0x538] sm:$0xff]
    %v3121 = vld [vmem:[%s2952 + $0x540] sm:$0xff]
    %v3122 = vld [vmem:[%s2952 + $0x548] sm:$0xff]
    %v3123 = vld [vmem:[%s2952 + $0x550] sm:$0xff]
    %v3124 = vld [vmem:[%s2952 + $0x558] sm:$0xff]
    %v3125 = vld [vmem:[%s2952 + $0x560] sm:$0xff]
    %v3126 = vld [vmem:[%s2952 + $0x568] sm:$0xff]
    %v3127 = vld [vmem:[%s2952 + $0x570] sm:$0xff]
    %v3128 = vld [vmem:[%s2952 + $0x578] sm:$0xff]
    %v3129 = vld [vmem:[%s2952 + $0x580] sm:$0xff]
    %v3130 = vld [vmem:[%s2952 + $0x588] sm:$0xff]
    %v3131 = vld [vmem:[%s2952 + $0x590] sm:$0xff]
    %v3132 = vld [vmem:[%s2952 + $0x598] sm:$0xff]
    %v3133 = vld [vmem:[%s2952 + $0x5a0] sm:$0xff]
    %v3134 = vld [vmem:[%s2952 + $0x5a8] sm:$0xff]
    %v3135 = vld [vmem:[%s2952 + $0x5b0] sm:$0xff]
    %v3136 = vld [vmem:[%s2952 + $0x5b8] sm:$0xff]
    %v3137 = vld [vmem:[%s2952 + $0x5c0] sm:$0xff]
    %v3138 = vld [vmem:[%s2952 + $0x5c8] sm:$0xff]
    %v3139 = vld [vmem:[%s2952 + $0x5d0] sm:$0xff]
    %v3140 = vld [vmem:[%s2952 + $0x5d8] sm:$0xff]
    %v3141 = vld [vmem:[%s2952 + $0x5e0] sm:$0xff]
    %v3142 = vld [vmem:[%s2952 + $0x5e8] sm:$0xff]
    %v3143 = vld [vmem:[%s2952 + $0x5f0] sm:$0xff]
    %v3144 = vld [vmem:[%s2952 + $0x5f8] sm:$0xff]
    %v3145 = vld [vmem:[%s2952 + $0x600] sm:$0xff]
    %v3146 = vld [vmem:[%s2952 + $0x608] sm:$0xff]
    %v3147 = vld [vmem:[%s2952 + $0x610] sm:$0xff]
    %v3148 = vld [vmem:[%s2952 + $0x618] sm:$0xff]
    %v3149 = vld [vmem:[%s2952 + $0x620] sm:$0xff]
    %v3150 = vld [vmem:[%s2952 + $0x628] sm:$0xff]
    %v3151 = vld [vmem:[%s2952 + $0x630] sm:$0xff]
    %v3152 = vld [vmem:[%s2952 + $0x638] sm:$0xff]
    %v3153 = vld [vmem:[%s2952 + $0x640] sm:$0xff]
    %v3154 = vld [vmem:[%s2952 + $0x648] sm:$0xff]
    %v3155 = vld [vmem:[%s2952 + $0x650] sm:$0xff]
    %v3156 = vld [vmem:[%s2952 + $0x658] sm:$0xff]
    %v3157 = vld [vmem:[%s2952 + $0x660] sm:$0xff]
    %v3158 = vld [vmem:[%s2952 + $0x668] sm:$0xff]
    %v3159 = vld [vmem:[%s2952 + $0x670] sm:$0xff]
    %v3160 = vld [vmem:[%s2952 + $0x678] sm:$0xff]
    %v3161 = vld [vmem:[%s2952 + $0x680] sm:$0xff]
    %v3162 = vld [vmem:[%s2952 + $0x688] sm:$0xff]
    %v3163 = vld [vmem:[%s2952 + $0x690] sm:$0xff]
    %v3164 = vld [vmem:[%s2952 + $0x698] sm:$0xff]
    %v3165 = vld [vmem:[%s2952 + $0x6a0] sm:$0xff]
    %v3166 = vld [vmem:[%s2952 + $0x6a8] sm:$0xff]
    %v3167 = vld [vmem:[%s2952 + $0x6b0] sm:$0xff]
    %v3168 = vld [vmem:[%s2952 + $0x6b8] sm:$0xff]
    %v3169 = vld [vmem:[%s2952 + $0x6c0] sm:$0xff]
    %v3170 = vld [vmem:[%s2952 + $0x6c8] sm:$0xff]
    %v3171 = vld [vmem:[%s2952 + $0x6d0] sm:$0xff]
    %v3172 = vld [vmem:[%s2952 + $0x6d8] sm:$0xff]
    %v3173 = vld [vmem:[%s2952 + $0x6e0] sm:$0xff]
    %v3174 = vld [vmem:[%s2952 + $0x6e8] sm:$0xff]
    %v3175 = vld [vmem:[%s2952 + $0x6f0] sm:$0xff]
    %v3176 = vld [vmem:[%s2952 + $0x6f8] sm:$0xff]
    %v3177 = vld [vmem:[%s2952 + $0x700] sm:$0xff]
    %v3178 = vld [vmem:[%s2952 + $0x708] sm:$0xff]
    %v3179 = vld [vmem:[%s2952 + $0x710] sm:$0xff]
    %v3180 = vld [vmem:[%s2952 + $0x718] sm:$0xff]
    %v3181 = vld [vmem:[%s2952 + $0x720] sm:$0xff]
    %v3182 = vld [vmem:[%s2952 + $0x728] sm:$0xff]
    %v3183 = vld [vmem:[%s2952 + $0x730] sm:$0xff]
    %v3184 = vld [vmem:[%s2952 + $0x738] sm:$0xff]
    %v3185 = vld [vmem:[%s2952 + $0x740] sm:$0xff]
    %v3186 = vld [vmem:[%s2952 + $0x748] sm:$0xff]
    %v3187 = vld [vmem:[%s2952 + $0x750] sm:$0xff]
    %v3188 = vld [vmem:[%s2952 + $0x758] sm:$0xff]
    %v3189 = vld [vmem:[%s2952 + $0x760] sm:$0xff]
    %v3190 = vld [vmem:[%s2952 + $0x768] sm:$0xff]
    %v3191 = vld [vmem:[%s2952 + $0x770] sm:$0xff]
    %v3192 = vld [vmem:[%s2952 + $0x778] sm:$0xff]
    %v3193 = vld [vmem:[%s2952 + $0x780] sm:$0xff]
    %v3194 = vld [vmem:[%s2952 + $0x788] sm:$0xff]
    %v3195 = vld [vmem:[%s2952 + $0x790] sm:$0xff]
    %v3196 = vld [vmem:[%s2952 + $0x798] sm:$0xff]
    %v3197 = vld [vmem:[%s2952 + $0x7a0] sm:$0xff]
    %v3198 = vld [vmem:[%s2952 + $0x7a8] sm:$0xff]
    %v3199 = vld [vmem:[%s2952 + $0x7b0] sm:$0xff]
    %v3200 = vld [vmem:[%s2952 + $0x7b8] sm:$0xff]
    %v3201 = vld [vmem:[%s2952 + $0x7c0] sm:$0xff]
    %v3202 = vld [vmem:[%s2952 + $0x7c8] sm:$0xff]
    %v3203 = vld [vmem:[%s2952 + $0x7d0] sm:$0xff]
    %v3204 = vld [vmem:[%s2952 + $0x7d8] sm:$0xff]
    %v3205 = vld [vmem:[%s2952 + $0x7e0] sm:$0xff]
    %v3206 = vld [vmem:[%s2952 + $0x7e8] sm:$0xff]
    %v3207 = vld [vmem:[%s2952 + $0x7f0] sm:$0xff]
    %v3208 = vld [vmem:[%s2952 + $0x7f8] sm:$0xff]
    %v3211 = vunpack.c.l.s4 1983009808
    %v3212 = vunpack.c.0.s8 %v3211
    %v3213 = vlaneseq
    %v3214 = vshrl.u32 %v3213, 7
    %v3215 = vsub.s32 %v3212, %v3214
    %v3216 = vrot.slane %v2951, %v3215
    %v3217 = vcombine.high %v3216, %v3216
    %3220 = vmatprep.subr.mxu0 %v2954
    %3221 = vmatpush1.msra.mxu0 %v2953
    %3222 = vmatprep.subr.mxu0 %v2962
    %3223 = vmatpush1.msra.mxu0 %v2961
    %3224 = vmatprep.subr.mxu0 %v2970
    %3225 = vmatpush1.msra.mxu0 %v2969
    %3226 = vmatprep.subr.mxu0 %v2978
    %3227 = vmatpush1.msra.mxu0 %v2977
    %3228 = vmatprep.subr.mxu0 %v2986
    %3229 = vmatpush1.msra.mxu0 %v2985
    %3230 = vmatprep.subr.mxu0 %v2994
    %3231 = vmatpush1.msra.mxu0 %v2993
    %3232 = vmatprep.subr.mxu0 %v3002
    %3233 = vmatpush1.msra.mxu0 %v3001
    %3234 = vmatprep.subr.mxu0 %v3010
    %3235 = vmatpush1.msra.mxu0 %v3009
    %3236 = vmatprep.subr.mxu0 %v3018
    %3237 = vmatpush1.msra.mxu0 %v3017
    %3238 = vmatprep.subr.mxu0 %v3026
    %3239 = vmatpush1.msra.mxu0 %v3025
    %3240 = vmatprep.subr.mxu0 %v3034
    %3241 = vmatpush1.msra.mxu0 %v3033
    %3242 = vmatprep.subr.mxu0 %v3042
    %3243 = vmatpush1.msra.mxu0 %v3041
    %3244 = vmatprep.subr.mxu0 %v3050
    %3245 = vmatpush1.msra.mxu0 %v3049
    %3246 = vmatprep.subr.mxu0 %v3058
    %3247 = vmatpush1.msra.mxu0 %v3057
    %3248 = vmatprep.subr.mxu0 %v3066
    %3249 = vmatpush1.msra.mxu0 %v3065
    %3250 = vmatprep.subr.mxu0 %v3074
    %3251 = vmatpush1.msra.mxu0 %v3073
    %3252 = vmatprep.subr.mxu0 %v3082
    %3253 = vmatpush1.msra.mxu0 %v3081
    %3254 = vmatprep.subr.mxu0 %v3090
    %3255 = vmatpush1.msra.mxu0 %v3089
    %3256 = vmatprep.subr.mxu0 %v3098
    %3257 = vmatpush1.msra.mxu0 %v3097
    %3258 = vmatprep.subr.mxu0 %v3106
    %3259 = vmatpush1.msra.mxu0 %v3105
    %3260 = vmatprep.subr.mxu0 %v3114
    %3261 = vmatpush1.msra.mxu0 %v3113
    %3262 = vmatprep.subr.mxu0 %v3122
    %3263 = vmatpush1.msra.mxu0 %v3121
    %3264 = vmatprep.subr.mxu0 %v3130
    %3265 = vmatpush1.msra.mxu0 %v3129
    %3266 = vmatprep.subr.mxu0 %v3138
    %3267 = vmatpush1.msra.mxu0 %v3137
    %3268 = vmatprep.subr.mxu0 %v3146
    %3269 = vmatpush1.msra.mxu0 %v3145
    %3270 = vmatprep.subr.mxu0 %v3154
    %3271 = vmatpush1.msra.mxu0 %v3153
    %3272 = vmatprep.subr.mxu0 %v3162
    %3273 = vmatpush1.msra.mxu0 %v3161
    %3274 = vmatprep.subr.mxu0 %v3170
    %3275 = vmatpush1.msra.mxu0 %v3169
    %3276 = vmatprep.subr.mxu0 %v3178
    %3277 = vmatpush1.msra.mxu0 %v3177
    %3278 = vmatprep.subr.mxu0 %v3186
    %3279 = vmatpush1.msra.mxu0 %v3185
    %3280 = vmatprep.subr.mxu0 %v3194
    %3281 = vmatpush1.msra.mxu0 %v3193
    %3282 = vmatprep.subr.mxu0 %v3202
    %3283 = vmatpush1.msra.mxu0 %v3201
    %3284 = vmatprep.mubr.f32.mxu0 %v3217
    %3285 = vmatmul.mubr.f32.gmra.mrb[0].mxu0 %v3216
    %v3286 = vpop.f32.mrb[0].mxu0
    %v3287 = vadd.f32 0.0, %v3286
    %v3288 = vpop.f32.mrb[0].mxu0
    %v3289 = vadd.f32 0.0, %v3288
    %3290 = vdwg.mxu0
    %3291 = vmatprep.subr.mxu0 %v2956
    %3292 = vmatpush1.msra.mxu0 %v2955
    %3293 = vmatprep.subr.mxu0 %v2964
    %3294 = vmatpush1.msra.mxu0 %v2963
    %3295 = vmatprep.subr.mxu0 %v2972
    %3296 = vmatpush1.msra.mxu0 %v2971
    %3297 = vmatprep.subr.mxu0 %v2980
    %3298 = vmatpush1.msra.mxu0 %v2979
    %3299 = vmatprep.subr.mxu0 %v2988
    %3300 = vmatpush1.msra.mxu0 %v2987
    %3301 = vmatprep.subr.mxu0 %v2996
    %3302 = vmatpush1.msra.mxu0 %v2995
    %3303 = vmatprep.subr.mxu0 %v3004
    %3304 = vmatpush1.msra.mxu0 %v3003
    %3305 = vmatprep.subr.mxu0 %v3012
    %3306 = vmatpush1.msra.mxu0 %v3011
    %3307 = vmatprep.subr.mxu0 %v3020
    %3308 = vmatpush1.msra.mxu0 %v3019
    %3309 = vmatprep.subr.mxu0 %v3028
    %3310 = vmatpush1.msra.mxu0 %v3027
    %3311 = vmatprep.subr.mxu0 %v3036
    %3312 = vmatpush1.msra.mxu0 %v3035
    %3313 = vmatprep.subr.mxu0 %v3044
    %3314 = vmatpush1.msra.mxu0 %v3043
    %3315 = vmatprep.subr.mxu0 %v3052
    %3316 = vmatpush1.msra.mxu0 %v3051
    %3317 = vmatprep.subr.mxu0 %v3060
    %3318 = vmatpush1.msra.mxu0 %v3059
    %3319 = vmatprep.subr.mxu0 %v3068
    %3320 = vmatpush1.msra.mxu0 %v3067
    %3321 = vmatprep.subr.mxu0 %v3076
    %3322 = vmatpush1.msra.mxu0 %v3075
    %3323 = vmatprep.subr.mxu0 %v3084
    %3324 = vmatpush1.msra.mxu0 %v3083
    %3325 = vmatprep.subr.mxu0 %v3092
    %3326 = vmatpush1.msra.mxu0 %v3091
    %3327 = vmatprep.subr.mxu0 %v3100
    %3328 = vmatpush1.msra.mxu0 %v3099
    %3329 = vmatprep.subr.mxu0 %v3108
    %3330 = vmatpush1.msra.mxu0 %v3107
    %3331 = vmatprep.subr.mxu0 %v3116
    %3332 = vmatpush1.msra.mxu0 %v3115
    %3333 = vmatprep.subr.mxu0 %v3124
    %3334 = vmatpush1.msra.mxu0 %v3123
    %3335 = vmatprep.subr.mxu0 %v3132
    %3336 = vmatpush1.msra.mxu0 %v3131
    %3337 = vmatprep.subr.mxu0 %v3140
    %3338 = vmatpush1.msra.mxu0 %v3139
    %3339 = vmatprep.subr.mxu0 %v3148
    %3340 = vmatpush1.msra.mxu0 %v3147
    %3341 = vmatprep.subr.mxu0 %v3156
    %3342 = vmatpush1.msra.mxu0 %v3155
    %3343 = vmatprep.subr.mxu0 %v3164
    %3344 = vmatpush1.msra.mxu0 %v3163
    %3345 = vmatprep.subr.mxu0 %v3172
    %3346 = vmatpush1.msra.mxu0 %v3171
    %3347 = vmatprep.subr.mxu0 %v3180
    %3348 = vmatpush1.msra.mxu0 %v3179
    %3349 = vmatprep.subr.mxu0 %v3188
    %3350 = vmatpush1.msra.mxu0 %v3187
    %3351 = vmatprep.subr.mxu0 %v3196
    %3352 = vmatpush1.msra.mxu0 %v3195
    %3353 = vmatprep.subr.mxu0 %v3204
    %3354 = vmatpush1.msra.mxu0 %v3203
    %3355 = vmatprep.mubr.f32.mxu0 %v3217
    %3356 = vmatmul.mubr.f32.gmra.mrb[0].mxu0 %v3216
    %v3357 = vpop.f32.mrb[0].mxu0
    %v3358 = vadd.f32 0.0, %v3357
    %v3359 = vpop.f32.mrb[0].mxu0
    %v3360 = vadd.f32 0.0, %v3359
    %3361 = vdwg.mxu0
    %3362 = vmatprep.subr.mxu0 %v2958
    %3363 = vmatpush1.msra.mxu0 %v2957
    %3364 = vmatprep.subr.mxu0 %v2966
    %3365 = vmatpush1.msra.mxu0 %v2965
    %3366 = vmatprep.subr.mxu0 %v2974
    %3367 = vmatpush1.msra.mxu0 %v2973
    %3368 = vmatprep.subr.mxu0 %v2982
    %3369 = vmatpush1.msra.mxu0 %v2981
    %3370 = vmatprep.subr.mxu0 %v2990
    %3371 = vmatpush1.msra.mxu0 %v2989
    %3372 = vmatprep.subr.mxu0 %v2998
    %3373 = vmatpush1.msra.mxu0 %v2997
    %3374 = vmatprep.subr.mxu0 %v3006
    %3375 = vmatpush1.msra.mxu0 %v3005
    %3376 = vmatprep.subr.mxu0 %v3014
    %3377 = vmatpush1.msra.mxu0 %v3013
    %3378 = vmatprep.subr.mxu0 %v3022
    %3379 = vmatpush1.msra.mxu0 %v3021
    %3380 = vmatprep.subr.mxu0 %v3030
    %3381 = vmatpush1.msra.mxu0 %v3029
    %3382 = vmatprep.subr.mxu0 %v3038
    %3383 = vmatpush1.msra.mxu0 %v3037
    %3384 = vmatprep.subr.mxu0 %v3046
    %3385 = vmatpush1.msra.mxu0 %v3045
    %3386 = vmatprep.subr.mxu0 %v3054
    %3387 = vmatpush1.msra.mxu0 %v3053
    %3388 = vmatprep.subr.mxu0 %v3062
    %3389 = vmatpush1.msra.mxu0 %v3061
    %3390 = vmatprep.subr.mxu0 %v3070
    %3391 = vmatpush1.msra.mxu0 %v3069
    %3392 = vmatprep.subr.mxu0 %v3078
    %3393 = vmatpush1.msra.mxu0 %v3077
    %3394 = vmatprep.subr.mxu0 %v3086
    %3395 = vmatpush1.msra.mxu0 %v3085
    %3396 = vmatprep.subr.mxu0 %v3094
    %3397 = vmatpush1.msra.mxu0 %v3093
    %3398 = vmatprep.subr.mxu0 %v3102
    %3399 = vmatpush1.msra.mxu0 %v3101
    %3400 = vmatprep.subr.mxu0 %v3110
    %3401 = vmatpush1.msra.mxu0 %v3109
    %3402 = vmatprep.subr.mxu0 %v3118
    %3403 = vmatpush1.msra.mxu0 %v3117
    %3404 = vmatprep.subr.mxu0 %v3126
    %3405 = vmatpush1.msra.mxu0 %v3125
    %3406 = vmatprep.subr.mxu0 %v3134
    %3407 = vmatpush1.msra.mxu0 %v3133
    %3408 = vmatprep.subr.mxu0 %v3142
    %3409 = vmatpush1.msra.mxu0 %v3141
    %3410 = vmatprep.subr.mxu0 %v3150
    %3411 = vmatpush1.msra.mxu0 %v3149
    %3412 = vmatprep.subr.mxu0 %v3158
    %3413 = vmatpush1.msra.mxu0 %v3157
    %3414 = vmatprep.subr.mxu0 %v3166
    %3415 = vmatpush1.msra.mxu0 %v3165
    %3416 = vmatprep.subr.mxu0 %v3174
    %3417 = vmatpush1.msra.mxu0 %v3173
    %3418 = vmatprep.subr.mxu0 %v3182
    %3419 = vmatpush1.msra.mxu0 %v3181
    %3420 = vmatprep.subr.mxu0 %v3190
    %3421 = vmatpush1.msra.mxu0 %v3189
    %3422 = vmatprep.subr.mxu0 %v3198
    %3423 = vmatpush1.msra.mxu0 %v3197
    %3424 = vmatprep.subr.mxu0 %v3206
    %3425 = vmatpush1.msra.mxu0 %v3205
    %3426 = vmatprep.mubr.f32.mxu0 %v3217
    %3427 = vmatmul.mubr.f32.gmra.mrb[0].mxu0 %v3216
    %v3428 = vpop.f32.mrb[0].mxu0
    %v3429 = vadd.f32 0.0, %v3428
    %v3430 = vpop.f32.mrb[0].mxu0
    %v3431 = vadd.f32 0.0, %v3430
    %3432 = vdwg.mxu0
    %3433 = vmatprep.subr.mxu0 %v2960
    %3434 = vmatpush1.msra.mxu0 %v2959
    %3435 = vmatprep.subr.mxu0 %v2968
    %3436 = vmatpush1.msra.mxu0 %v2967
    %3437 = vmatprep.subr.mxu0 %v2976
    %3438 = vmatpush1.msra.mxu0 %v2975
    %3439 = vmatprep.subr.mxu0 %v2984
    %3440 = vmatpush1.msra.mxu0 %v2983
    %3441 = vmatprep.subr.mxu0 %v2992
    %3442 = vmatpush1.msra.mxu0 %v2991
    %3443 = vmatprep.subr.mxu0 %v3000
    %3444 = vmatpush1.msra.mxu0 %v2999
    %3445 = vmatprep.subr.mxu0 %v3008
    %3446 = vmatpush1.msra.mxu0 %v3007
    %3447 = vmatprep.subr.mxu0 %v3016
    %3448 = vmatpush1.msra.mxu0 %v3015
    %3449 = vmatprep.subr.mxu0 %v3024
    %3450 = vmatpush1.msra.mxu0 %v3023
    %3451 = vmatprep.subr.mxu0 %v3032
    %3452 = vmatpush1.msra.mxu0 %v3031
    %3453 = vmatprep.subr.mxu0 %v3040
    %3454 = vmatpush1.msra.mxu0 %v3039
    %3455 = vmatprep.subr.mxu0 %v3048
    %3456 = vmatpush1.msra.mxu0 %v3047
    %3457 = vmatprep.subr.mxu0 %v3056
    %3458 = vmatpush1.msra.mxu0 %v3055
    %3459 = vmatprep.subr.mxu0 %v3064
    %3460 = vmatpush1.msra.mxu0 %v3063
    %3461 = vmatprep.subr.mxu0 %v3072
    %3462 = vmatpush1.msra.mxu0 %v3071
    %3463 = vmatprep.subr.mxu0 %v3080
    %3464 = vmatpush1.msra.mxu0 %v3079
    %3465 = vmatprep.subr.mxu0 %v3088
    %3466 = vmatpush1.msra.mxu0 %v3087
    %3467 = vmatprep.subr.mxu0 %v3096
    %3468 = vmatpush1.msra.mxu0 %v3095
    %3469 = vmatprep.subr.mxu0 %v3104
    %3470 = vmatpush1.msra.mxu0 %v3103
    %3471 = vmatprep.subr.mxu0 %v3112
    %3472 = vmatpush1.msra.mxu0 %v3111
    %3473 = vmatprep.subr.mxu0 %v3120
    %3474 = vmatpush1.msra.mxu0 %v3119
    %3475 = vmatprep.subr.mxu0 %v3128
    %3476 = vmatpush1.msra.mxu0 %v3127
    %3477 = vmatprep.subr.mxu0 %v3136
    %3478 = vmatpush1.msra.mxu0 %v3135
    %3479 = vmatprep.subr.mxu0 %v3144
    %3480 = vmatpush1.msra.mxu0 %v3143
    %3481 = vmatprep.subr.mxu0 %v3152
    %3482 = vmatpush1.msra.mxu0 %v3151
    %3483 = vmatprep.subr.mxu0 %v3160
    %3484 = vmatpush1.msra.mxu0 %v3159
    %3485 = vmatprep.subr.mxu0 %v3168
    %3486 = vmatpush1.msra.mxu0 %v3167
    %3487 = vmatprep.subr.mxu0 %v3176
    %3488 = vmatpush1.msra.mxu0 %v3175
    %3489 = vmatprep.subr.mxu0 %v3184
    %3490 = vmatpush1.msra.mxu0 %v3183
    %3491 = vmatprep.subr.mxu0 %v3192
    %3492 = vmatpush1.msra.mxu0 %v3191
    %3493 = vmatprep.subr.mxu0 %v3200
    %3494 = vmatpush1.msra.mxu0 %v3199
    %3495 = vmatprep.subr.mxu0 %v3208
    %3496 = vmatpush1.msra.mxu0 %v3207
    %3497 = vmatprep.mubr.f32.mxu0 %v3217
    %3498 = vmatmul.mubr.f32.gmra.mrb[0].mxu0 %v3216
    %v3499 = vpop.f32.mrb[0].mxu0
    %v3500 = vadd.f32 0.0, %v3499
    %v3501 = vpop.f32.mrb[0].mxu0
    %v3502 = vadd.f32 0.0, %v3501
    %3503 = vdwg.mxu0
    %v3504 = vadd.f32 %v2943, %v3287
    %v3505 = vadd.f32 %v2944, %v3289
    %v3506 = vadd.f32 %v2945, %v3358
    %v3507 = vadd.f32 %v2946, %v3360
    %v3508 = vadd.f32 %v2947, %v3429
    %v3509 = vadd.f32 %v2948, %v3431
    %v3510 = vadd.f32 %v2949, %v3500
    %v3511 = vadd.f32 %v2950, %v3502
    %v3512 = vld [vmem:[%s8] sm:$0xff]
    %v3514 = vlaneseq
    %v3515 = vshrl.u32 %v3514, 7
    %v3516 = vsub.s32 0, %v3515
    %v3517 = vrot.slane %v3512, %v3516
    %v3518 = vlaneseq
    %v3519 = vshrl.u32 %v3518, 7
    %v3520 = vsub.s32 1, %v3519
    %v3521 = vrot.slane %v3512, %v3520
    %v3522 = vlaneseq
    %v3523 = vshrl.u32 %v3522, 7
    %v3524 = vsub.s32 2, %v3523
    %v3525 = vrot.slane %v3512, %v3524
    %v3526 = vlaneseq
    %v3527 = vshrl.u32 %v3526, 7
    %v3528 = vsub.s32 3, %v3527
    %v3529 = vrot.slane %v3512, %v3528
    %v3530 = vlaneseq
    %v3531 = vshrl.u32 %v3530, 7
    %v3532 = vsub.s32 4, %v3531
    %v3533 = vrot.slane %v3512, %v3532
    %v3534 = vlaneseq
    %v3535 = vshrl.u32 %v3534, 7
    %v3536 = vsub.s32 5, %v3535
    %v3537 = vrot.slane %v3512, %v3536
    %v3538 = vlaneseq
    %v3539 = vshrl.u32 %v3538, 7
    %v3540 = vsub.s32 6, %v3539
    %v3541 = vrot.slane %v3512, %v3540
    %v3542 = vlaneseq
    %v3543 = vshrl.u32 %v3542, 7
    %v3544 = vsub.s32 7, %v3543
    %v3545 = vrot.slane %v3512, %v3544
    %v3554 = vadd.f32 %v3504, %v3517
    %v3555 = vadd.f32 %v3505, %v3521
    %v3556 = vadd.f32 %v3506, %v3525
    %v3557 = vadd.f32 %v3507, %v3529
    %v3558 = vadd.f32 %v3508, %v3533
    %v3559 = vadd.f32 %v3509, %v3537
    %v3560 = vadd.f32 %v3510, %v3541
    %v3561 = vadd.f32 %v3511, %v3545
    %v3562 = vmax.f32 %v3554, 0.0
    %v3563 = vmax.f32 %v3555, 0.0
    %v3564 = vmax.f32 %v3556, 0.0
    %v3565 = vmax.f32 %v3557, 0.0
    %v3566 = vmax.f32 %v3558, 0.0
    %v3567 = vmax.f32 %v3559, 0.0
    %v3568 = vmax.f32 %v3560, 0.0
    %v3569 = vmax.f32 %v3561, 0.0
    %v3570 = vld [vmem:[%s9] sm:$0xff]
    %v3571 = vld [vmem:[%s9 + $0x8] sm:$0xff]
    %v3572 = vld [vmem:[%s9 + $0x10] sm:$0xff]
    %v3573 = vld [vmem:[%s9 + $0x18] sm:$0xff]
    %v3574 = vld [vmem:[%s9 + $0x20] sm:$0xff]
    %v3575 = vld [vmem:[%s9 + $0x28] sm:$0xff]
    %v3576 = vld [vmem:[%s9 + $0x30] sm:$0xff]
    %v3577 = vld [vmem:[%s9 + $0x38] sm:$0xff]
    %v3578 = vld [vmem:[%s9 + $0x40] sm:$0xff]
    %v3579 = vld [vmem:[%s9 + $0x48] sm:$0xff]
    %v3580 = vld [vmem:[%s9 + $0x50] sm:$0xff]
    %v3581 = vld [vmem:[%s9 + $0x58] sm:$0xff]
    %v3582 = vld [vmem:[%s9 + $0x60] sm:$0xff]
    %v3583 = vld [vmem:[%s9 + $0x68] sm:$0xff]
    %v3584 = vld [vmem:[%s9 + $0x70] sm:$0xff]
    %v3585 = vld [vmem:[%s9 + $0x78] sm:$0xff]
    %v3586 = vld [vmem:[%s9 + $0x80] sm:$0xff]
    %v3587 = vld [vmem:[%s9 + $0x88] sm:$0xff]
    %v3588 = vld [vmem:[%s9 + $0x90] sm:$0xff]
    %v3589 = vld [vmem:[%s9 + $0x98] sm:$0xff]
    %v3590 = vld [vmem:[%s9 + $0xa0] sm:$0xff]
    %v3591 = vld [vmem:[%s9 + $0xa8] sm:$0xff]
    %v3592 = vld [vmem:[%s9 + $0xb0] sm:$0xff]
    %v3593 = vld [vmem:[%s9 + $0xb8] sm:$0xff]
    %v3594 = vld [vmem:[%s9 + $0xc0] sm:$0xff]
    %v3595 = vld [vmem:[%s9 + $0xc8] sm:$0xff]
    %v3596 = vld [vmem:[%s9 + $0xd0] sm:$0xff]
    %v3597 = vld [vmem:[%s9 + $0xd8] sm:$0xff]
    %v3598 = vld [vmem:[%s9 + $0xe0] sm:$0xff]
    %v3599 = vld [vmem:[%s9 + $0xe8] sm:$0xff]
    %v3600 = vld [vmem:[%s9 + $0xf0] sm:$0xff]
    %v3601 = vld [vmem:[%s9 + $0xf8] sm:$0xff]
    %v3602 = vld [vmem:[%s9 + $0x100] sm:$0xff]
    %v3603 = vld [vmem:[%s9 + $0x108] sm:$0xff]
    %v3604 = vld [vmem:[%s9 + $0x110] sm:$0xff]
    %v3605 = vld [vmem:[%s9 + $0x118] sm:$0xff]
    %v3606 = vld [vmem:[%s9 + $0x120] sm:$0xff]
    %v3607 = vld [vmem:[%s9 + $0x128] sm:$0xff]
    %v3608 = vld [vmem:[%s9 + $0x130] sm:$0xff]
    %v3609 = vld [vmem:[%s9 + $0x138] sm:$0xff]
    %v3610 = vld [vmem:[%s9 + $0x140] sm:$0xff]
    %v3611 = vld [vmem:[%s9 + $0x148] sm:$0xff]
    %v3612 = vld [vmem:[%s9 + $0x150] sm:$0xff]
    %v3613 = vld [vmem:[%s9 + $0x158] sm:$0xff]
    %v3614 = vld [vmem:[%s9 + $0x160] sm:$0xff]
    %v3615 = vld [vmem:[%s9 + $0x168] sm:$0xff]
    %v3616 = vld [vmem:[%s9 + $0x170] sm:$0xff]
    %v3617 = vld [vmem:[%s9 + $0x178] sm:$0xff]
    %v3618 = vld [vmem:[%s9 + $0x180] sm:$0xff]
    %v3619 = vld [vmem:[%s9 + $0x188] sm:$0xff]
    %v3620 = vld [vmem:[%s9 + $0x190] sm:$0xff]
    %v3621 = vld [vmem:[%s9 + $0x198] sm:$0xff]
    %v3622 = vld [vmem:[%s9 + $0x1a0] sm:$0xff]
    %v3623 = vld [vmem:[%s9 + $0x1a8] sm:$0xff]
    %v3624 = vld [vmem:[%s9 + $0x1b0] sm:$0xff]
    %v3625 = vld [vmem:[%s9 + $0x1b8] sm:$0xff]
    %v3626 = vld [vmem:[%s9 + $0x1c0] sm:$0xff]
    %v3627 = vld [vmem:[%s9 + $0x1c8] sm:$0xff]
    %v3628 = vld [vmem:[%s9 + $0x1d0] sm:$0xff]
    %v3629 = vld [vmem:[%s9 + $0x1d8] sm:$0xff]
    %v3630 = vld [vmem:[%s9 + $0x1e0] sm:$0xff]
    %v3631 = vld [vmem:[%s9 + $0x1e8] sm:$0xff]
    %v3632 = vld [vmem:[%s9 + $0x1f0] sm:$0xff]
    %v3633 = vld [vmem:[%s9 + $0x1f8] sm:$0xff]
    %v3634 = vld [vmem:[%s9 + $0x200] sm:$0xff]
    %v3635 = vld [vmem:[%s9 + $0x208] sm:$0xff]
    %v3636 = vld [vmem:[%s9 + $0x210] sm:$0xff]
    %v3637 = vld [vmem:[%s9 + $0x218] sm:$0xff]
    %v3638 = vld [vmem:[%s9 + $0x220] sm:$0xff]
    %v3639 = vld [vmem:[%s9 + $0x228] sm:$0xff]
    %v3640 = vld [vmem:[%s9 + $0x230] sm:$0xff]
    %v3641 = vld [vmem:[%s9 + $0x238] sm:$0xff]
    %v3642 = vld [vmem:[%s9 + $0x240] sm:$0xff]
    %v3643 = vld [vmem:[%s9 + $0x248] sm:$0xff]
    %v3644 = vld [vmem:[%s9 + $0x250] sm:$0xff]
    %v3645 = vld [vmem:[%s9 + $0x258] sm:$0xff]
    %v3646 = vld [vmem:[%s9 + $0x260] sm:$0xff]
    %v3647 = vld [vmem:[%s9 + $0x268] sm:$0xff]
    %v3648 = vld [vmem:[%s9 + $0x270] sm:$0xff]
    %v3649 = vld [vmem:[%s9 + $0x278] sm:$0xff]
    %v3650 = vld [vmem:[%s9 + $0x280] sm:$0xff]
    %v3651 = vld [vmem:[%s9 + $0x288] sm:$0xff]
    %v3652 = vld [vmem:[%s9 + $0x290] sm:$0xff]
    %v3653 = vld [vmem:[%s9 + $0x298] sm:$0xff]
    %v3654 = vld [vmem:[%s9 + $0x2a0] sm:$0xff]
    %v3655 = vld [vmem:[%s9 + $0x2a8] sm:$0xff]
    %v3656 = vld [vmem:[%s9 + $0x2b0] sm:$0xff]
    %v3657 = vld [vmem:[%s9 + $0x2b8] sm:$0xff]
    %v3658 = vld [vmem:[%s9 + $0x2c0] sm:$0xff]
    %v3659 = vld [vmem:[%s9 + $0x2c8] sm:$0xff]
    %v3660 = vld [vmem:[%s9 + $0x2d0] sm:$0xff]
    %v3661 = vld [vmem:[%s9 + $0x2d8] sm:$0xff]
    %v3662 = vld [vmem:[%s9 + $0x2e0] sm:$0xff]
    %v3663 = vld [vmem:[%s9 + $0x2e8] sm:$0xff]
    %v3664 = vld [vmem:[%s9 + $0x2f0] sm:$0xff]
    %v3665 = vld [vmem:[%s9 + $0x2f8] sm:$0xff]
    %v3666 = vld [vmem:[%s9 + $0x300] sm:$0xff]
    %v3667 = vld [vmem:[%s9 + $0x308] sm:$0xff]
    %v3668 = vld [vmem:[%s9 + $0x310] sm:$0xff]
    %v3669 = vld [vmem:[%s9 + $0x318] sm:$0xff]
    %v3670 = vld [vmem:[%s9 + $0x320] sm:$0xff]
    %v3671 = vld [vmem:[%s9 + $0x328] sm:$0xff]
    %v3672 = vld [vmem:[%s9 + $0x330] sm:$0xff]
    %v3673 = vld [vmem:[%s9 + $0x338] sm:$0xff]
    %v3674 = vld [vmem:[%s9 + $0x340] sm:$0xff]
    %v3675 = vld [vmem:[%s9 + $0x348] sm:$0xff]
    %v3676 = vld [vmem:[%s9 + $0x350] sm:$0xff]
    %v3677 = vld [vmem:[%s9 + $0x358] sm:$0xff]
    %v3678 = vld [vmem:[%s9 + $0x360] sm:$0xff]
    %v3679 = vld [vmem:[%s9 + $0x368] sm:$0xff]
    %v3680 = vld [vmem:[%s9 + $0x370] sm:$0xff]
    %v3681 = vld [vmem:[%s9 + $0x378] sm:$0xff]
    %v3682 = vld [vmem:[%s9 + $0x380] sm:$0xff]
    %v3683 = vld [vmem:[%s9 + $0x388] sm:$0xff]
    %v3684 = vld [vmem:[%s9 + $0x390] sm:$0xff]
    %v3685 = vld [vmem:[%s9 + $0x398] sm:$0xff]
    %v3686 = vld [vmem:[%s9 + $0x3a0] sm:$0xff]
    %v3687 = vld [vmem:[%s9 + $0x3a8] sm:$0xff]
    %v3688 = vld [vmem:[%s9 + $0x3b0] sm:$0xff]
    %v3689 = vld [vmem:[%s9 + $0x3b8] sm:$0xff]
    %v3690 = vld [vmem:[%s9 + $0x3c0] sm:$0xff]
    %v3691 = vld [vmem:[%s9 + $0x3c8] sm:$0xff]
    %v3692 = vld [vmem:[%s9 + $0x3d0] sm:$0xff]
    %v3693 = vld [vmem:[%s9 + $0x3d8] sm:$0xff]
    %v3694 = vld [vmem:[%s9 + $0x3e0] sm:$0xff]
    %v3695 = vld [vmem:[%s10] sm:$0x1]
    %v3697 = vlaneseq
    %v3698 = vshrl.u32 %v3697, 7
    %v3699 = vsub.s32 0, %v3698
    %v3700 = vrot.slane %v3695, %v3699
    %vm3702 = vcmask 850944
    %v3704 = vsel %vm3702, %v3569, 0
    %3706 = vmatprep.subr.mxu0 0.0
    %3707 = vmatpush1.msra.mxu0 %v3570
    %3708 = vmatprep.subr.mxu0 0.0
    %3709 = vmatpush1.msra.mxu0 %v3571
    %3710 = vmatprep.subr.mxu0 0.0
    %3711 = vmatpush1.msra.mxu0 %v3572
    %3712 = vmatprep.subr.mxu0 0.0
    %3713 = vmatpush1.msra.mxu0 %v3573
    %3714 = vmatprep.subr.mxu0 0.0
    %3715 = vmatpush1.msra.mxu0 %v3574
    %3716 = vmatprep.subr.mxu0 0.0
    %3717 = vmatpush1.msra.mxu0 %v3575
    %3718 = vmatprep.subr.mxu0 0.0
    %3719 = vmatpush1.msra.mxu0 %v3576
    %3720 = vmatprep.subr.mxu0 0.0
    %3721 = vmatpush1.msra.mxu0 %v3577
    %3722 = vmatprep.subr.mxu0 0.0
    %3723 = vmatpush1.msra.mxu0 %v3578
    %3724 = vmatprep.subr.mxu0 0.0
    %3725 = vmatpush1.msra.mxu0 %v3579
    %3726 = vmatprep.subr.mxu0 0.0
    %3727 = vmatpush1.msra.mxu0 %v3580
    %3728 = vmatprep.subr.mxu0 0.0
    %3729 = vmatpush1.msra.mxu0 %v3581
    %3730 = vmatprep.subr.mxu0 0.0
    %3731 = vmatpush1.msra.mxu0 %v3582
    %3732 = vmatprep.subr.mxu0 0.0
    %3733 = vmatpush1.msra.mxu0 %v3583
    %3734 = vmatprep.subr.mxu0 0.0
    %3735 = vmatpush1.msra.mxu0 %v3584
    %3736 = vmatprep.subr.mxu0 0.0
    %3737 = vmatpush1.msra.mxu0 %v3585
    %3738 = vmatprep.subr.mxu0 0.0
    %3739 = vmatpush1.msra.mxu0 %v3586
    %3740 = vmatprep.subr.mxu0 0.0
    %3741 = vmatpush1.msra.mxu0 %v3587
    %3742 = vmatprep.subr.mxu0 0.0
    %3743 = vmatpush1.msra.mxu0 %v3588
    %3744 = vmatprep.subr.mxu0 0.0
    %3745 = vmatpush1.msra.mxu0 %v3589
    %3746 = vmatprep.subr.mxu0 0.0
    %3747 = vmatpush1.msra.mxu0 %v3590
    %3748 = vmatprep.subr.mxu0 0.0
    %3749 = vmatpush1.msra.mxu0 %v3591
    %3750 = vmatprep.subr.mxu0 0.0
    %3751 = vmatpush1.msra.mxu0 %v3592
    %3752 = vmatprep.subr.mxu0 0.0
    %3753 = vmatpush1.msra.mxu0 %v3593
    %3754 = vmatprep.subr.mxu0 0.0
    %3755 = vmatpush1.msra.mxu0 %v3594
    %3756 = vmatprep.subr.mxu0 0.0
    %3757 = vmatpush1.msra.mxu0 %v3595
    %3758 = vmatprep.subr.mxu0 0.0
    %3759 = vmatpush1.msra.mxu0 %v3596
    %3760 = vmatprep.subr.mxu0 0.0
    %3761 = vmatpush1.msra.mxu0 %v3597
    %3762 = vmatprep.subr.mxu0 0.0
    %3763 = vmatpush1.msra.mxu0 %v3598
    %3764 = vmatprep.subr.mxu0 0.0
    %3765 = vmatpush1.msra.mxu0 %v3599
    %3766 = vmatprep.subr.mxu0 0.0
    %3767 = vmatpush1.msra.mxu0 %v3600
    %3768 = vmatprep.subr.mxu0 0.0
    %3769 = vmatpush1.msra.mxu0 %v3601
    %3770 = vmatprep.mubr.f32.mxu0 %v3563
    %3771 = vmatmul.mubr.f32.gmra.mrb[0].mxu0 %v3562
    %v3772 = vpop.f32.mrb[0].mxu0
    %v3773 = vadd.f32 %v3700, %v3772
    %v3774 = vpop.f32.mrb[0].mxu0
    %3775 = vdwg.mxu0
    %3776 = vmatprep.subr.mxu0 0.0
    %3777 = vmatpush1.msra.mxu0 %v3602
    %3778 = vmatprep.subr.mxu0 0.0
    %3779 = vmatpush1.msra.mxu0 %v3603
    %3780 = vmatprep.subr.mxu0 0.0
    %3781 = vmatpush1.msra.mxu0 %v3604
    %3782 = vmatprep.subr.mxu0 0.0
    %3783 = vmatpush1.msra.mxu0 %v3605
    %3784 = vmatprep.subr.mxu0 0.0
    %3785 = vmatpush1.msra.mxu0 %v3606
    %3786 = vmatprep.subr.mxu0 0.0
    %3787 = vmatpush1.msra.mxu0 %v3607
    %3788 = vmatprep.subr.mxu0 0.0
    %3789 = vmatpush1.msra.mxu0 %v3608
    %3790 = vmatprep.subr.mxu0 0.0
    %3791 = vmatpush1.msra.mxu0 %v3609
    %3792 = vmatprep.subr.mxu0 0.0
    %3793 = vmatpush1.msra.mxu0 %v3610
    %3794 = vmatprep.subr.mxu0 0.0
    %3795 = vmatpush1.msra.mxu0 %v3611
    %3796 = vmatprep.subr.mxu0 0.0
    %3797 = vmatpush1.msra.mxu0 %v3612
    %3798 = vmatprep.subr.mxu0 0.0
    %3799 = vmatpush1.msra.mxu0 %v3613
    %3800 = vmatprep.subr.mxu0 0.0
    %3801 = vmatpush1.msra.mxu0 %v3614
    %3802 = vmatprep.subr.mxu0 0.0
    %3803 = vmatpush1.msra.mxu0 %v3615
    %3804 = vmatprep.subr.mxu0 0.0
    %3805 = vmatpush1.msra.mxu0 %v3616
    %3806 = vmatprep.subr.mxu0 0.0
    %3807 = vmatpush1.msra.mxu0 %v3617
    %3808 = vmatprep.subr.mxu0 0.0
    %3809 = vmatpush1.msra.mxu0 %v3618
    %3810 = vmatprep.subr.mxu0 0.0
    %3811 = vmatpush1.msra.mxu0 %v3619
    %3812 = vmatprep.subr.mxu0 0.0
    %3813 = vmatpush1.msra.mxu0 %v3620
    %3814 = vmatprep.subr.mxu0 0.0
    %3815 = vmatpush1.msra.mxu0 %v3621
    %3816 = vmatprep.subr.mxu0 0.0
    %3817 = vmatpush1.msra.mxu0 %v3622
    %3818 = vmatprep.subr.mxu0 0.0
    %3819 = vmatpush1.msra.mxu0 %v3623
    %3820 = vmatprep.subr.mxu0 0.0
    %3821 = vmatpush1.msra.mxu0 %v3624
    %3822 = vmatprep.subr.mxu0 0.0
    %3823 = vmatpush1.msra.mxu0 %v3625
    %3824 = vmatprep.subr.mxu0 0.0
    %3825 = vmatpush1.msra.mxu0 %v3626
    %3826 = vmatprep.subr.mxu0 0.0
    %3827 = vmatpush1.msra.mxu0 %v3627
    %3828 = vmatprep.subr.mxu0 0.0
    %3829 = vmatpush1.msra.mxu0 %v3628
    %3830 = vmatprep.subr.mxu0 0.0
    %3831 = vmatpush1.msra.mxu0 %v3629
    %3832 = vmatprep.subr.mxu0 0.0
    %3833 = vmatpush1.msra.mxu0 %v3630
    %3834 = vmatprep.subr.mxu0 0.0
    %3835 = vmatpush1.msra.mxu0 %v3631
    %3836 = vmatprep.subr.mxu0 0.0
    %3837 = vmatpush1.msra.mxu0 %v3632
    %3838 = vmatprep.subr.mxu0 0.0
    %3839 = vmatpush1.msra.mxu0 %v3633
    %3840 = vmatprep.mubr.f32.mxu0 %v3565
    %3841 = vmatmul.mubr.f32.gmra.mrb[0].mxu0 %v3564
    %v3842 = vpop.f32.mrb[0].mxu0
    %v3843 = vadd.f32 %v3773, %v3842
    %v3844 = vpop.f32.mrb[0].mxu0
    %3845 = vdwg.mxu0
    %3846 = vmatprep.subr.mxu0 0.0
    %3847 = vmatpush1.msra.mxu0 %v3634
    %3848 = vmatprep.subr.mxu0 0.0
    %3849 = vmatpush1.msra.mxu0 %v3635
    %3850 = vmatprep.subr.mxu0 0.0
    %3851 = vmatpush1.msra.mxu0 %v3636
    %3852 = vmatprep.subr.mxu0 0.0
    %3853 = vmatpush1.msra.mxu0 %v3637
    %3854 = vmatprep.subr.mxu0 0.0
    %3855 = vmatpush1.msra.mxu0 %v3638
    %3856 = vmatprep.subr.mxu0 0.0
    %3857 = vmatpush1.msra.mxu0 %v3639
    %3858 = vmatprep.subr.mxu0 0.0
    %3859 = vmatpush1.msra.mxu0 %v3640
    %3860 = vmatprep.subr.mxu0 0.0
    %3861 = vmatpush1.msra.mxu0 %v3641
    %3862 = vmatprep.subr.mxu0 0.0
    %3863 = vmatpush1.msra.mxu0 %v3642
    %3864 = vmatprep.subr.mxu0 0.0
    %3865 = vmatpush1.msra.mxu0 %v3643
    %3866 = vmatprep.subr.mxu0 0.0
    %3867 = vmatpush1.msra.mxu0 %v3644
    %3868 = vmatprep.subr.mxu0 0.0
    %3869 = vmatpush1.msra.mxu0 %v3645
    %3870 = vmatprep.subr.mxu0 0.0
    %3871 = vmatpush1.msra.mxu0 %v3646
    %3872 = vmatprep.subr.mxu0 0.0
    %3873 = vmatpush1.msra.mxu0 %v3647
    %3874 = vmatprep.subr.mxu0 0.0
    %3875 = vmatpush1.msra.mxu0 %v3648
    %3876 = vmatprep.subr.mxu0 0.0
    %3877 = vmatpush1.msra.mxu0 %v3649
    %3878 = vmatprep.subr.mxu0 0.0
    %3879 = vmatpush1.msra.mxu0 %v3650
    %3880 = vmatprep.subr.mxu0 0.0
    %3881 = vmatpush1.msra.mxu0 %v3651
    %3882 = vmatprep.subr.mxu0 0.0
    %3883 = vmatpush1.msra.mxu0 %v3652
    %3884 = vmatprep.subr.mxu0 0.0
    %3885 = vmatpush1.msra.mxu0 %v3653
    %3886 = vmatprep.subr.mxu0 0.0
    %3887 = vmatpush1.msra.mxu0 %v3654
    %3888 = vmatprep.subr.mxu0 0.0
    %3889 = vmatpush1.msra.mxu0 %v3655
    %3890 = vmatprep.subr.mxu0 0.0
    %3891 = vmatpush1.msra.mxu0 %v3656
    %3892 = vmatprep.subr.mxu0 0.0
    %3893 = vmatpush1.msra.mxu0 %v3657
    %3894 = vmatprep.subr.mxu0 0.0
    %3895 = vmatpush1.msra.mxu0 %v3658
    %3896 = vmatprep.subr.mxu0 0.0
    %3897 = vmatpush1.msra.mxu0 %v3659
    %3898 = vmatprep.subr.mxu0 0.0
    %3899 = vmatpush1.msra.mxu0 %v3660
    %3900 = vmatprep.subr.mxu0 0.0
    %3901 = vmatpush1.msra.mxu0 %v3661
    %3902 = vmatprep.subr.mxu0 0.0
    %3903 = vmatpush1.msra.mxu0 %v3662
    %3904 = vmatprep.subr.mxu0 0.0
    %3905 = vmatpush1.msra.mxu0 %v3663
    %3906 = vmatprep.subr.mxu0 0.0
    %3907 = vmatpush1.msra.mxu0 %v3664
    %3908 = vmatprep.subr.mxu0 0.0
    %3909 = vmatpush1.msra.mxu0 %v3665
    %3910 = vmatprep.mubr.f32.mxu0 %v3567
    %3911 = vmatmul.mubr.f32.gmra.mrb[0].mxu0 %v3566
    %v3912 = vpop.f32.mrb[0].mxu0
    %v3913 = vadd.f32 %v3843, %v3912
    %v3914 = vpop.f32.mrb[0].mxu0
    %3915 = vdwg.mxu0
    %3916 = vmatprep.subr.mxu0 0.0
    %3917 = vmatpush1.msra.mxu0 %v3666
    %3918 = vmatprep.subr.mxu0 0.0
    %3919 = vmatpush1.msra.mxu0 %v3667
    %3920 = vmatprep.subr.mxu0 0.0
    %3921 = vmatpush1.msra.mxu0 %v3668
    %3922 = vmatprep.subr.mxu0 0.0
    %3923 = vmatpush1.msra.mxu0 %v3669
    %3924 = vmatprep.subr.mxu0 0.0
    %3925 = vmatpush1.msra.mxu0 %v3670
    %3926 = vmatprep.subr.mxu0 0.0
    %3927 = vmatpush1.msra.mxu0 %v3671
    %3928 = vmatprep.subr.mxu0 0.0
    %3929 = vmatpush1.msra.mxu0 %v3672
    %3930 = vmatprep.subr.mxu0 0.0
    %3931 = vmatpush1.msra.mxu0 %v3673
    %3932 = vmatprep.subr.mxu0 0.0
    %3933 = vmatpush1.msra.mxu0 %v3674
    %3934 = vmatprep.subr.mxu0 0.0
    %3935 = vmatpush1.msra.mxu0 %v3675
    %3936 = vmatprep.subr.mxu0 0.0
    %3937 = vmatpush1.msra.mxu0 %v3676
    %3938 = vmatprep.subr.mxu0 0.0
    %3939 = vmatpush1.msra.mxu0 %v3677
    %3940 = vmatprep.subr.mxu0 0.0
    %3941 = vmatpush1.msra.mxu0 %v3678
    %3942 = vmatprep.subr.mxu0 0.0
    %3943 = vmatpush1.msra.mxu0 %v3679
    %3944 = vmatprep.subr.mxu0 0.0
    %3945 = vmatpush1.msra.mxu0 %v3680
    %3946 = vmatprep.subr.mxu0 0.0
    %3947 = vmatpush1.msra.mxu0 %v3681
    %3948 = vmatprep.subr.mxu0 0.0
    %3949 = vmatpush1.msra.mxu0 %v3682
    %3950 = vmatprep.subr.mxu0 0.0
    %3951 = vmatpush1.msra.mxu0 %v3683
    %3952 = vmatprep.subr.mxu0 0.0
    %3953 = vmatpush1.msra.mxu0 %v3684
    %3954 = vmatprep.subr.mxu0 0.0
    %3955 = vmatpush1.msra.mxu0 %v3685
    %3956 = vmatprep.subr.mxu0 0.0
    %3957 = vmatpush1.msra.mxu0 %v3686
    %3958 = vmatprep.subr.mxu0 0.0
    %3959 = vmatpush1.msra.mxu0 %v3687
    %3960 = vmatprep.subr.mxu0 0.0
    %3961 = vmatpush1.msra.mxu0 %v3688
    %3962 = vmatprep.subr.mxu0 0.0
    %3963 = vmatpush1.msra.mxu0 %v3689
    %3964 = vmatprep.subr.mxu0 0.0
    %3965 = vmatpush1.msra.mxu0 %v3690
    %3966 = vmatprep.subr.mxu0 0.0
    %3967 = vmatpush1.msra.mxu0 %v3691
    %3968 = vmatprep.subr.mxu0 0.0
    %3969 = vmatpush1.msra.mxu0 %v3692
    %3970 = vmatprep.subr.mxu0 0.0
    %3971 = vmatpush1.msra.mxu0 %v3693
    %3972 = vmatprep.subr.mxu0 0.0
    %3973 = vmatpush1.msra.mxu0 %v3694
    %3974 = vmatprep.subr.mxu0 0.0
    %3975 = vmatpush1.msra.mxu0 0.0
    %3976 = vmatprep.subr.mxu0 0.0
    %3977 = vmatpush1.msra.mxu0 0.0
    %3978 = vmatprep.subr.mxu0 0.0
    %3979 = vmatpush1.msra.mxu0 0.0
    %3980 = vmatprep.mubr.f32.mxu0 %v3704
    %3981 = vmatmul.mubr.f32.gmra.mrb[0].mxu0 %v3568
    %v3982 = vpop.f32.mrb[0].mxu0
    %v3983 = vadd.f32 %v3913, %v3982
    %v3984 = vpop.f32.mrb[0].mxu0
    %3985 = vdwg.mxu0
    %vm3986 = vcmask 74752
    %3987 = vst.msk [vmem:[#allocation7] sm:$0x3] %vm3986, %v3983
    // Predicated region
    $region46: #{tpu_custom_call.1} parent=1 // pred_check
      _
    $region47: #{tpu_custom_call.1} parent=1 // pred_check_branch
      %3989 = sbr.rel (0) target = $region49
    $region48: #{tpu_custom_call.1} parent=1 // pred_region
      %s3991 = ssub.s32 32, 32
      %3992 = vsyncadd [#allocation8], %s3991
      %s3994 = sshll.u32 [#allocation7], 4
      %s3995 = int_to_ptr.vmem [resolvable:$true] %s3994
      %3997 = dma.vmem_to_hbm [thread:$0]  %s3995, 32, %s11, [#allocation8]
    $region49: #{tpu_custom_call.1} parent=1 // pred_fallthru
      _
    // Predicated region
    $region50: #{tpu_custom_call.1} parent=1 // pred_check
      _
    $region51: #{tpu_custom_call.1} parent=1 // pred_check_branch
      %3999 = sbr.rel (0) target = $region53
    $region52: #{tpu_custom_call.1} parent=1 // pred_region
      %4000 = dma.done [#allocation8], 32
    $region53: #{tpu_custom_call.1} parent=1 // pred_fallthru
      _
    %4001 = vsyncpa [#allocation8], 1

</llo_original>
